<compile_context>
chip_gen: v5e
topology: v5e:2x2
jax: 0.10.0
libtpu: 0.0.40
codegen_flags: <defaults>
</compile_context>

<pallas_src>
import jax
import jax.numpy as jnp
from jax.experimental import pallas as pl
from jax.experimental.pallas import tpu as pltpu


# ----------------------------------------------------------------------------
# Fused Pallas kernel
#   grid = (batch_tiles [parallel], K_tiles [arbitrary])
#   - every K step: accumulate one 640-wide slab of the tfidf1 matmul
#   - last K step: finish tfidf branch, run emb/feat branches + classifier
# ----------------------------------------------------------------------------
def _fused_forward_kernel(
    emb_ref, tfidf_ref, feat_ref,
    w_e1, b_e1, w_e2, b_e2,
    w_t1, b_t1, w_t2, b_t2,
    w_f1, b_f1, w_f2, b_f2,
    w_c1_e, w_c1_t, w_c1_f, b_c1,
    w_c2_row, b_c2,
    o_ref,
    acc_ref,
):
    k = pl.program_id(1)
    k_last = pl.num_programs(1) - 1

    @pl.when(k == 0)
    def _():
        acc_ref[...] = jnp.zeros_like(acc_ref)

    # Streaming K-tiled tfidf1 matmul: bf16 on the MXU, f32 accumulation.
    acc_ref[...] += jnp.dot(tfidf_ref[...], w_t1[...],
                            preferred_element_type=jnp.float32)

    @pl.when(k == k_last)
    def _():
        def lin(x, w_ref, b_ref):
            y = jnp.dot(x.astype(jnp.bfloat16), w_ref[...],
                        preferred_element_type=jnp.float32) + b_ref[...]
            return jnp.maximum(y, 0.0)

        # tfidf branch: finish 5120 -> 512, then 512 -> 128
        t_hidden = jnp.maximum(acc_ref[...] + b_t1[...], 0.0)
        t_out = lin(t_hidden, w_t2, b_t2)

        # embedding branch: 384 -> 256 -> 128
        e_out = lin(lin(emb_ref[...], w_e1, b_e1), w_e2, b_e2)

        # feature branch: 16 -> 64 -> 32
        f_out = lin(lin(feat_ref[...], w_f1, b_f1), w_f2, b_f2)

        # classifier layer 1: concat replaced by split partial matmuls
        #   [e | t | f] @ W  ==  e @ W[0:128] + t @ W[128:256] + f @ W[256:288]
        c = (jnp.dot(e_out.astype(jnp.bfloat16), w_c1_e[...],
                     preferred_element_type=jnp.float32)
             + jnp.dot(t_out.astype(jnp.bfloat16), w_c1_t[...],
                       preferred_element_type=jnp.float32)
             + jnp.dot(f_out.astype(jnp.bfloat16), w_c1_f[...],
                       preferred_element_type=jnp.float32)
             + b_c1[...])
        c = jnp.maximum(c, 0.0)

        # classifier layer 2 (64 -> 1): VPU multiply + lane reduce (avoids a
        # heavily masked N=1 MXU push/pop on the critical path).
        logits = jnp.sum(c * w_c2_row[...], axis=-1, keepdims=True) + b_c2[...]
        o_ref[...] = logits.astype(o_ref.dtype)


def fake_news_detector_forward(params, embeddings, tfidf, features,
                               *, batch_tile=256, k_tile=640):
    """Fused forward pass. Returns (B, 1) f32 logits."""
    B = embeddings.shape[0]
    K_pad = params["tfidf1_w"].shape[0]              # 5120 (padded tfidf K)
    assert K_pad % k_tile == 0
    KT = K_pad // k_tile

    # Cast activations to bf16 (MXU-native, halves HBM bytes).  The tfidf
    # K-padding to 5120 is folded into this same (already required) cast op,
    # so no extra f32 (B, 5120) tensor is materialized in HBM.
    emb_bf = embeddings.astype(jnp.bfloat16)
    feat_bf = features.astype(jnp.bfloat16)
    pad_k = K_pad - tfidf.shape[1]
    tfidf_bf = jnp.pad(tfidf.astype(jnp.bfloat16), ((0, 0), (0, pad_k)))

    # Batch tiling: small batches use a single full-array batch block;
    # large batches are tiled (and padded) so weights stay VMEM-resident and
    # the leading "parallel" axis shards tiles across v7x's two TensorCores.
    if B <= batch_tile:
        TB, GB, B_pad = B, 1, B
    else:
        TB = batch_tile                               # multiple of 8
        B_pad = ((B + TB - 1) // TB) * TB
        GB = B_pad // TB
        if B_pad != B:
            pad_b = B_pad - B
            emb_bf = jnp.pad(emb_bf, ((0, pad_b), (0, 0)))
            tfidf_bf = jnp.pad(tfidf_bf, ((0, pad_b), (0, 0)))
            feat_bf = jnp.pad(feat_bf, ((0, pad_b), (0, 0)))

    # -- index maps ----------------------------------------------------------
    def act_map(b, k):          # batch-tiled activation, constant over k
        return (b, 0)

    def tfidf_map(b, k):        # batch- and K-tiled tfidf activation
        return (b, k)

    def wt1_map(b, k):          # K-tiled tfidf1 weight slab
        return (k, 0)

    def const_map(b, k):        # weight / bias resident across whole grid
        return (0, 0)

    w = params
    operands = (
        emb_bf, tfidf_bf, feat_bf,
        w["emb1_w"], w["emb1_b"], w["emb2_w"], w["emb2_b"],
        w["tfidf1_w"], w["tfidf1_b"], w["tfidf2_w"], w["tfidf2_b"],
        w["feat1_w"], w["feat1_b"], w["feat2_w"], w["feat2_b"],
        w["cls1_w_emb"], w["cls1_w_tfidf"], w["cls1_w_feat"], w["cls1_b"],
        w["cls2_w_row"], w["cls2_b"],
    )

    in_specs = [
        pl.BlockSpec((TB, emb_bf.shape[1]), act_map),          # embeddings
        pl.BlockSpec((TB, k_tile), tfidf_map),                 # tfidf (K-tiled)
        pl.BlockSpec((TB, feat_bf.shape[1]), act_map),         # features
        pl.BlockSpec(w["emb1_w"].shape, const_map),
        pl.BlockSpec(w["emb1_b"].shape, const_map),
        pl.BlockSpec(w["emb2_w"].shape, const_map),
        pl.BlockSpec(w["emb2_b"].shape, const_map),
        pl.BlockSpec((k_tile, w["tfidf1_w"].shape[1]), wt1_map),  # K-tiled slab
        pl.BlockSpec(w["tfidf1_b"].shape, const_map),
        pl.BlockSpec(w["tfidf2_w"].shape, const_map),
        pl.BlockSpec(w["tfidf2_b"].shape, const_map),
        pl.BlockSpec(w["feat1_w"].shape, const_map),
        pl.BlockSpec(w["feat1_b"].shape, const_map),
        pl.BlockSpec(w["feat2_w"].shape, const_map),
        pl.BlockSpec(w["feat2_b"].shape, const_map),
        pl.BlockSpec(w["cls1_w_emb"].shape, const_map),
        pl.BlockSpec(w["cls1_w_tfidf"].shape, const_map),
        pl.BlockSpec(w["cls1_w_feat"].shape, const_map),
        pl.BlockSpec(w["cls1_b"].shape, const_map),
        pl.BlockSpec(w["cls2_w_row"].shape, const_map),
        pl.BlockSpec(w["cls2_b"].shape, const_map),
    ]
    out_spec = pl.BlockSpec((TB, 1), act_map)

    out = pl.pallas_call(
        _fused_forward_kernel,
        out_shape=jax.ShapeDtypeStruct((B_pad, 1), jnp.float32),
        grid_spec=pltpu.PrefetchScalarGridSpec(
            num_scalar_prefetch=0,
            grid=(GB, KT),
            in_specs=in_specs,
            out_specs=out_spec,
            scratch_shapes=[pltpu.VMEM((TB, w["tfidf1_w"].shape[1]),
                                       jnp.float32)],
        ),
        compiler_params=pltpu.CompilerParams(
            # Peak VMEM ~3 MB (double-buffered K slabs + activation tiles +
            # resident small weights) -- safe on v5e/v6e (128 MiB) and
            # v7x (64 MiB physical).
            vmem_limit_bytes=32 * 1024 * 1024,
            dimension_semantics=("parallel", "arbitrary"),
        ),
    )(*operands)

    return out[:B] if B_pad != B else out


# ----------------------------------------------------------------------------
# Parameter construction (deterministic, synthetic)
# ----------------------------------------------------------------------------
def _init_linear_f32(key, in_dim, out_dim):
    kw, kb = jax.random.split(key)
    bound = 1.0 / jnp.sqrt(jnp.float32(in_dim))
    w = jax.random.uniform(kw, (in_dim, out_dim), jnp.float32, -bound, bound)
    b = jax.random.uniform(kb, (out_dim,), jnp.float32, -bound, bound)
    return w, b


def init_params(key, embedding_dim=384, tfidf_dim=5000, feature_dim=16):
    keys = jax.random.split(key, 8)
    e1w, e1b = _init_linear_f32(keys[0], embedding_dim, 256)
    e2w, e2b = _init_linear_f32(keys[1], 256, 128)
    t1w, t1b = _init_linear_f32(keys[2], tfidf_dim, 512)
    t2w, t2b = _init_linear_f32(keys[3], 512, 128)
    f1w, f1b = _init_linear_f32(keys[4], feature_dim, 64)
    f2w, f2b = _init_linear_f32(keys[5], 64, 32)
    c1w, c1b = _init_linear_f32(keys[6], 128 + 128 + 32, 64)
    c2w, c2b = _init_linear_f32(keys[7], 64, 1)

    # Zero-pad tfidf1's K dim to a multiple of 640 (5000 -> 5120): exact.
    tfidf_k_pad = ((tfidf_dim + 639) // 640) * 640
    t1w = jnp.pad(t1w, ((0, tfidf_k_pad - tfidf_dim), (0, 0)))

    def wb(wm, bv):
        return wm.astype(jnp.bfloat16), bv.reshape(1, -1).astype(jnp.float32)

    params = {}
    params["emb1_w"], params["emb1_b"] = wb(e1w, e1b)
    params["emb2_w"], params["emb2_b"] = wb(e2w, e2b)
    params["tfidf1_w"], params["tfidf1_b"] = wb(t1w, t1b)
    params["tfidf2_w"], params["tfidf2_b"] = wb(t2w, t2b)
    params["feat1_w"], params["feat1_b"] = wb(f1w, f1b)
    params["feat2_w"], params["feat2_b"] = wb(f2w, f2b)
    # Split classifier L1 weight rows to replace torch.cat with partial matmuls.
    params["cls1_w_emb"] = c1w[0:128].astype(jnp.bfloat16)
    params["cls1_w_tfidf"] = c1w[128:256].astype(jnp.bfloat16)
    params["cls1_w_feat"] = c1w[256:288].astype(jnp.bfloat16)
    params["cls1_b"] = c1b.reshape(1, -1).astype(jnp.float32)
    # Classifier L2 (64 -> 1): keep as an f32 row for VPU multiply+reduce.
    params["cls2_w_row"] = c2w.reshape(1, -1).astype(jnp.float32)
    params["cls2_b"] = c2b.reshape(1, -1).astype(jnp.float32)
    return params


# ----------------------------------------------------------------------------
# Pure-JAX reference mirroring the kernel's numerics (bf16 MXU, f32 acc)
# ----------------------------------------------------------------------------
def _ref_forward(params, embeddings, tfidf, features):
    def lin(x, wm, bv):
        y = jnp.dot(x.astype(jnp.bfloat16), wm,
                    preferred_element_type=jnp.float32) + bv
        return jnp.maximum(y, 0.0)

    pad = params["tfidf1_w"].shape[0] - tfidf.shape[1]
    tfidf_p = jnp.pad(tfidf.astype(jnp.bfloat16), ((0, 0), (0, pad)))
    emb_bf = embeddings.astype(jnp.bfloat16)
    feat_bf = features.astype(jnp.bfloat16)

    e = lin(lin(emb_bf, params["emb1_w"], params["emb1_b"]),
            params["emb2_w"], params["emb2_b"])
    t = lin(lin(tfidf_p, params["tfidf1_w"], params["tfidf1_b"]),
            params["tfidf2_w"], params["tfidf2_b"])
    f = lin(lin(feat_bf, params["feat1_w"], params["feat1_b"]),
            params["feat2_w"], params["feat2_b"])
    c = (jnp.dot(e.astype(jnp.bfloat16), params["cls1_w_emb"],
                 preferred_element_type=jnp.float32)
         + jnp.dot(t.astype(jnp.bfloat16), params["cls1_w_tfidf"],
                   preferred_element_type=jnp.float32)
         + jnp.dot(f.astype(jnp.bfloat16), params["cls1_w_feat"],
                   preferred_element_type=jnp.float32)
         + params["cls1_b"])
    c = jnp.maximum(c, 0.0)
    return (jnp.sum(c * params["cls2_w_row"], axis=-1, keepdims=True)
            + params["cls2_b"])


if __name__ == "__main__":
    key = jax.random.PRNGKey(0)
    kp, ke, kt, kf = jax.random.split(key, 4)

    batch = 4
    embedding_dim, tfidf_dim, feature_dim = 384, 5000, 16

    params = init_params(kp, embedding_dim, tfidf_dim, feature_dim)

    embeddings = jax.random.normal(ke, (batch, embedding_dim), jnp.float32)
    tfidf = jax.random.uniform(kt, (batch, tfidf_dim), jnp.float32)
    features = jax.random.normal(kf, (batch, feature_dim), jnp.float32)

    out = fake_news_detector_forward(params, embeddings, tfidf, features)
    out = jax.block_until_ready(out)

    ref = _ref_forward(params, embeddings, tfidf, features)
    assert out.shape == (batch, 1), out.shape
    assert jnp.allclose(out, ref, atol=1e-2, rtol=1e-2), (out, ref)

    # TODO(synk): Dropout layers are identity at inference and are omitted;
    # this kernel is forward/eval only.

    print("KERNEL_OK")
</pallas_src>

<mosaic_0001>
module attributes {stable_mosaic.version = 11 : i64} {
  func.func @_fused_forward_kernel(%arg0: i32, %arg1: i32, %arg2: memref<4x384xbf16, #tpu.memory_space<vmem>>, %arg3: memref<4x640xbf16, #tpu.memory_space<vmem>>, %arg4: memref<4x16xbf16, #tpu.memory_space<vmem>>, %arg5: memref<384x256xbf16, #tpu.memory_space<vmem>>, %arg6: memref<1x256xf32, #tpu.memory_space<vmem>>, %arg7: memref<256x128xbf16, #tpu.memory_space<vmem>>, %arg8: memref<1x128xf32, #tpu.memory_space<vmem>>, %arg9: memref<640x512xbf16, #tpu.memory_space<vmem>>, %arg10: memref<1x512xf32, #tpu.memory_space<vmem>>, %arg11: memref<512x128xbf16, #tpu.memory_space<vmem>>, %arg12: memref<1x128xf32, #tpu.memory_space<vmem>>, %arg13: memref<16x64xbf16, #tpu.memory_space<vmem>>, %arg14: memref<1x64xf32, #tpu.memory_space<vmem>>, %arg15: memref<64x32xbf16, #tpu.memory_space<vmem>>, %arg16: memref<1x32xf32, #tpu.memory_space<vmem>>, %arg17: memref<128x64xbf16, #tpu.memory_space<vmem>>, %arg18: memref<128x64xbf16, #tpu.memory_space<vmem>>, %arg19: memref<32x64xbf16, #tpu.memory_space<vmem>>, %arg20: memref<1x64xf32, #tpu.memory_space<vmem>>, %arg21: memref<1x64xf32, #tpu.memory_space<vmem>>, %arg22: memref<1x1xf32, #tpu.memory_space<vmem>>, %arg23: memref<4x1xf32, #tpu.memory_space<vmem>>, %arg24: memref<4x512xf32, #tpu.memory_space<vmem>>) attributes {dimension_semantics = [#tpu.dimension_semantics<parallel>, #tpu.dimension_semantics<arbitrary>], iteration_bounds = array<i64: 1, 8>, scalar_prefetch = 0 : i64, scratch_operands = 1 : i64, tpu.core_type = #tpu.core_type<tc>, window_params = [{transform_indices = @transform_0, window_bounds = array<i64: 4, 384>}, {transform_indices = @transform_1, window_bounds = array<i64: 4, 640>}, {transform_indices = @transform_2, window_bounds = array<i64: 4, 16>}, {pipeline_mode = #tpu.pipeline_mode<synchronous>, transform_indices = @transform_3, window_bounds = array<i64: 384, 256>}, {pipeline_mode = #tpu.pipeline_mode<synchronous>, transform_indices = @transform_4, window_bounds = array<i64: 1, 256>}, {pipeline_mode = #tpu.pipeline_mode<synchronous>, transform_indices = @transform_5, window_bounds = array<i64: 256, 128>}, {pipeline_mode = #tpu.pipeline_mode<synchronous>, transform_indices = @transform_6, window_bounds = array<i64: 1, 128>}, {transform_indices = @transform_7, window_bounds = array<i64: 640, 512>}, {pipeline_mode = #tpu.pipeline_mode<synchronous>, transform_indices = @transform_8, window_bounds = array<i64: 1, 512>}, {pipeline_mode = #tpu.pipeline_mode<synchronous>, transform_indices = @transform_9, window_bounds = array<i64: 512, 128>}, {pipeline_mode = #tpu.pipeline_mode<synchronous>, transform_indices = @transform_10, window_bounds = array<i64: 1, 128>}, {pipeline_mode = #tpu.pipeline_mode<synchronous>, transform_indices = @transform_11, window_bounds = array<i64: 16, 64>}, {pipeline_mode = #tpu.pipeline_mode<synchronous>, transform_indices = @transform_12, window_bounds = array<i64: 1, 64>}, {pipeline_mode = #tpu.pipeline_mode<synchronous>, transform_indices = @transform_13, window_bounds = array<i64: 64, 32>}, {pipeline_mode = #tpu.pipeline_mode<synchronous>, transform_indices = @transform_14, window_bounds = array<i64: 1, 32>}, {pipeline_mode = #tpu.pipeline_mode<synchronous>, transform_indices = @transform_15, window_bounds = array<i64: 128, 64>}, {pipeline_mode = #tpu.pipeline_mode<synchronous>, transform_indices = @transform_16, window_bounds = array<i64: 128, 64>}, {pipeline_mode = #tpu.pipeline_mode<synchronous>, transform_indices = @transform_17, window_bounds = array<i64: 32, 64>}, {pipeline_mode = #tpu.pipeline_mode<synchronous>, transform_indices = @transform_18, window_bounds = array<i64: 1, 64>}, {pipeline_mode = #tpu.pipeline_mode<synchronous>, transform_indices = @transform_19, window_bounds = array<i64: 1, 64>}, {pipeline_mode = #tpu.pipeline_mode<synchronous>, transform_indices = @transform_20, window_bounds = array<i64: 1, 1>}, {transform_indices = @transform_21, window_bounds = array<i64: 4, 1>}]} {
    %c0_i32 = arith.constant 0 : i32
    %0 = arith.cmpi eq, %arg1, %c0_i32 : i32
    %1 = arith.extui %0 : i1 to i32
    %c0_i32_0 = arith.constant 0 : i32
    %2 = arith.cmpi ne, %1, %c0_i32_0 : i32
    scf.if %2 {
      %cst_9 = arith.constant 0.000000e+00 : f32
      %12 = vector.broadcast %cst_9 : f32 to vector<4x512xf32>
      %c0_10 = arith.constant 0 : index
      %c0_11 = arith.constant 0 : index
      %13 = vector.load %arg24[%c0_10, %c0_11] : memref<4x512xf32, #tpu.memory_space<vmem>>, vector<4x512xf32>
      tpu.vector_store %arg24[%c0_10, %c0_11], %12 {strides = array<i32>} : memref<4x512xf32, #tpu.memory_space<vmem>>, vector<4x512xf32>,
    } else {
    }
    %c0 = arith.constant 0 : index
    %c0_1 = arith.constant 0 : index
    %3 = vector.load %arg24[%c0, %c0_1] : memref<4x512xf32, #tpu.memory_space<vmem>>, vector<4x512xf32>
    %c0_2 = arith.constant 0 : index
    %c0_3 = arith.constant 0 : index
    %4 = vector.load %arg3[%c0_2, %c0_3] : memref<4x640xbf16, #tpu.memory_space<vmem>>, vector<4x640xbf16>
    %c0_4 = arith.constant 0 : index
    %c0_5 = arith.constant 0 : index
    %5 = vector.load %arg9[%c0_4, %c0_5] : memref<640x512xbf16, #tpu.memory_space<vmem>>, vector<640x512xbf16>
    %cst = arith.constant dense<0.000000e+00> : vector<4x512xf32>
    %6 = tpu.matmul %4, %5, %cst {dimension_numbers = #tpu.dot_dimension_numbers<[1], [0], [0], [1], [0, 0, 1, 1], [], []>} : vector<4x640xbf16>, vector<640x512xbf16>, vector<4x512xf32> -> vector<4x512xf32>
    %7 = arith.addf %3, %6 : vector<4x512xf32>
    %c0_6 = arith.constant 0 : index
    %c0_7 = arith.constant 0 : index
    %8 = vector.load %arg24[%c0_6, %c0_7] : memref<4x512xf32, #tpu.memory_space<vmem>>, vector<4x512xf32>
    tpu.vector_store %arg24[%c0_6, %c0_7], %7 {strides = array<i32>} : memref<4x512xf32, #tpu.memory_space<vmem>>, vector<4x512xf32>,
    %c7_i32 = arith.constant 7 : i32
    %9 = arith.cmpi eq, %arg1, %c7_i32 : i32
    %10 = arith.extui %9 : i1 to i32
    %c0_i32_8 = arith.constant 0 : i32
    %11 = arith.cmpi ne, %10, %c0_i32_8 : i32
    scf.if %11 {
      %c0_9 = arith.constant 0 : index
      %c0_10 = arith.constant 0 : index
      %12 = vector.load %arg24[%c0_9, %c0_10] : memref<4x512xf32, #tpu.memory_space<vmem>>, vector<4x512xf32>
      %c0_11 = arith.constant 0 : index
      %c0_12 = arith.constant 0 : index
      %13 = vector.load %arg10[%c0_11, %c0_12] : memref<1x512xf32, #tpu.memory_space<vmem>>, vector<1x512xf32>
      %14 = vector.broadcast %13 : vector<1x512xf32> to vector<4x512xf32>
      %15 = arith.addf %12, %14 : vector<4x512xf32>
      %cst_13 = arith.constant 0.000000e+00 : f32
      %16 = vector.broadcast %cst_13 : f32 to vector<4x512xf32>
      %17 = arith.maximumf %15, %16 : vector<4x512xf32>
      %18 = arith.truncf %17 : vector<4x512xf32> to vector<4x512xbf16>
      %c0_14 = arith.constant 0 : index
      %c0_15 = arith.constant 0 : index
      %19 = vector.load %arg11[%c0_14, %c0_15] : memref<512x128xbf16, #tpu.memory_space<vmem>>, vector<512x128xbf16>
      %cst_16 = arith.constant dense<0.000000e+00> : vector<4x128xf32>
      %20 = tpu.matmul %18, %19, %cst_16 {dimension_numbers = #tpu.dot_dimension_numbers<[1], [0], [0], [1], [0, 0, 1, 1], [], []>} : vector<4x512xbf16>, vector<512x128xbf16>, vector<4x128xf32> -> vector<4x128xf32>
      %c0_17 = arith.constant 0 : index
      %c0_18 = arith.constant 0 : index
      %21 = vector.load %arg12[%c0_17, %c0_18] : memref<1x128xf32, #tpu.memory_space<vmem>>, vector<1x128xf32>
      %22 = vector.broadcast %21 : vector<1x128xf32> to vector<4x128xf32>
      %23 = arith.addf %20, %22 : vector<4x128xf32>
      %cst_19 = arith.constant 0.000000e+00 : f32
      %24 = vector.broadcast %cst_19 : f32 to vector<4x128xf32>
      %25 = arith.maximumf %23, %24 : vector<4x128xf32>
      %c0_20 = arith.constant 0 : index
      %c0_21 = arith.constant 0 : index
      %26 = vector.load %arg2[%c0_20, %c0_21] : memref<4x384xbf16, #tpu.memory_space<vmem>>, vector<4x384xbf16>
      %c0_22 = arith.constant 0 : index
      %c0_23 = arith.constant 0 : index
      %27 = vector.load %arg5[%c0_22, %c0_23] : memref<384x256xbf16, #tpu.memory_space<vmem>>, vector<384x256xbf16>
      %cst_24 = arith.constant dense<0.000000e+00> : vector<4x256xf32>
      %28 = tpu.matmul %26, %27, %cst_24 {dimension_numbers = #tpu.dot_dimension_numbers<[1], [0], [0], [1], [0, 0, 1, 1], [], []>} : vector<4x384xbf16>, vector<384x256xbf16>, vector<4x256xf32> -> vector<4x256xf32>
      %c0_25 = arith.constant 0 : index
      %c0_26 = arith.constant 0 : index
      %29 = vector.load %arg6[%c0_25, %c0_26] : memref<1x256xf32, #tpu.memory_space<vmem>>, vector<1x256xf32>
      %30 = vector.broadcast %29 : vector<1x256xf32> to vector<4x256xf32>
      %31 = arith.addf %28, %30 : vector<4x256xf32>
      %cst_27 = arith.constant 0.000000e+00 : f32
      %32 = vector.broadcast %cst_27 : f32 to vector<4x256xf32>
      %33 = arith.maximumf %31, %32 : vector<4x256xf32>
      %34 = arith.truncf %33 : vector<4x256xf32> to vector<4x256xbf16>
      %c0_28 = arith.constant 0 : index
      %c0_29 = arith.constant 0 : index
      %35 = vector.load %arg7[%c0_28, %c0_29] : memref<256x128xbf16, #tpu.memory_space<vmem>>, vector<256x128xbf16>
      %cst_30 = arith.constant dense<0.000000e+00> : vector<4x128xf32>
      %36 = tpu.matmul %34, %35, %cst_30 {dimension_numbers = #tpu.dot_dimension_numbers<[1], [0], [0], [1], [0, 0, 1, 1], [], []>} : vector<4x256xbf16>, vector<256x128xbf16>, vector<4x128xf32> -> vector<4x128xf32>
      %c0_31 = arith.constant 0 : index
      %c0_32 = arith.constant 0 : index
      %37 = vector.load %arg8[%c0_31, %c0_32] : memref<1x128xf32, #tpu.memory_space<vmem>>, vector<1x128xf32>
      %38 = vector.broadcast %37 : vector<1x128xf32> to vector<4x128xf32>
      %39 = arith.addf %36, %38 : vector<4x128xf32>
      %cst_33 = arith.constant 0.000000e+00 : f32
      %40 = vector.broadcast %cst_33 : f32 to vector<4x128xf32>
      %41 = arith.maximumf %39, %40 : vector<4x128xf32>
      %c0_34 = arith.constant 0 : index
      %c0_35 = arith.constant 0 : index
      %42 = vector.load %arg4[%c0_34, %c0_35] : memref<4x16xbf16, #tpu.memory_space<vmem>>, vector<4x16xbf16>
      %c0_36 = arith.constant 0 : index
      %c0_37 = arith.constant 0 : index
      %43 = vector.load %arg13[%c0_36, %c0_37] : memref<16x64xbf16, #tpu.memory_space<vmem>>, vector<16x64xbf16>
      %cst_38 = arith.constant dense<0.000000e+00> : vector<4x64xf32>
      %44 = tpu.matmul %42, %43, %cst_38 {dimension_numbers = #tpu.dot_dimension_numbers<[1], [0], [0], [1], [0, 0, 1, 1], [], []>} : vector<4x16xbf16>, vector<16x64xbf16>, vector<4x64xf32> -> vector<4x64xf32>
      %c0_39 = arith.constant 0 : index
      %c0_40 = arith.constant 0 : index
      %45 = vector.load %arg14[%c0_39, %c0_40] : memref<1x64xf32, #tpu.memory_space<vmem>>, vector<1x64xf32>
      %46 = vector.broadcast %45 : vector<1x64xf32> to vector<4x64xf32>
      %47 = arith.addf %44, %46 : vector<4x64xf32>
      %cst_41 = arith.constant 0.000000e+00 : f32
      %48 = vector.broadcast %cst_41 : f32 to vector<4x64xf32>
      %49 = arith.maximumf %47, %48 : vector<4x64xf32>
      %50 = arith.truncf %49 : vector<4x64xf32> to vector<4x64xbf16>
      %c0_42 = arith.constant 0 : index
      %c0_43 = arith.constant 0 : index
      %51 = vector.load %arg15[%c0_42, %c0_43] : memref<64x32xbf16, #tpu.memory_space<vmem>>, vector<64x32xbf16>
      %cst_44 = arith.constant dense<0.000000e+00> : vector<4x32xf32>
      %52 = tpu.matmul %50, %51, %cst_44 {dimension_numbers = #tpu.dot_dimension_numbers<[1], [0], [0], [1], [0, 0, 1, 1], [], []>} : vector<4x64xbf16>, vector<64x32xbf16>, vector<4x32xf32> -> vector<4x32xf32>
      %c0_45 = arith.constant 0 : index
      %c0_46 = arith.constant 0 : index
      %53 = vector.load %arg16[%c0_45, %c0_46] : memref<1x32xf32, #tpu.memory_space<vmem>>, vector<1x32xf32>
      %54 = vector.broadcast %53 : vector<1x32xf32> to vector<4x32xf32>
      %55 = arith.addf %52, %54 : vector<4x32xf32>
      %cst_47 = arith.constant 0.000000e+00 : f32
      %56 = vector.broadcast %cst_47 : f32 to vector<4x32xf32>
      %57 = arith.maximumf %55, %56 : vector<4x32xf32>
      %58 = arith.truncf %41 : vector<4x128xf32> to vector<4x128xbf16>
      %c0_48 = arith.constant 0 : index
      %c0_49 = arith.constant 0 : index
      %59 = vector.load %arg17[%c0_48, %c0_49] : memref<128x64xbf16, #tpu.memory_space<vmem>>, vector<128x64xbf16>
      %cst_50 = arith.constant dense<0.000000e+00> : vector<4x64xf32>
      %60 = tpu.matmul %58, %59, %cst_50 {dimension_numbers = #tpu.dot_dimension_numbers<[1], [0], [0], [1], [0, 0, 1, 1], [], []>} : vector<4x128xbf16>, vector<128x64xbf16>, vector<4x64xf32> -> vector<4x64xf32>
      %61 = arith.truncf %25 : vector<4x128xf32> to vector<4x128xbf16>
      %c0_51 = arith.constant 0 : index
      %c0_52 = arith.constant 0 : index
      %62 = vector.load %arg18[%c0_51, %c0_52] : memref<128x64xbf16, #tpu.memory_space<vmem>>, vector<128x64xbf16>
      %cst_53 = arith.constant dense<0.000000e+00> : vector<4x64xf32>
      %63 = tpu.matmul %61, %62, %cst_53 {dimension_numbers = #tpu.dot_dimension_numbers<[1], [0], [0], [1], [0, 0, 1, 1], [], []>} : vector<4x128xbf16>, vector<128x64xbf16>, vector<4x64xf32> -> vector<4x64xf32>
      %64 = arith.addf %60, %63 : vector<4x64xf32>
      %65 = arith.truncf %57 : vector<4x32xf32> to vector<4x32xbf16>
      %c0_54 = arith.constant 0 : index
      %c0_55 = arith.constant 0 : index
      %66 = vector.load %arg19[%c0_54, %c0_55] : memref<32x64xbf16, #tpu.memory_space<vmem>>, vector<32x64xbf16>
      %cst_56 = arith.constant dense<0.000000e+00> : vector<4x64xf32>
      %67 = tpu.matmul %65, %66, %cst_56 {dimension_numbers = #tpu.dot_dimension_numbers<[1], [0], [0], [1], [0, 0, 1, 1], [], []>} : vector<4x32xbf16>, vector<32x64xbf16>, vector<4x64xf32> -> vector<4x64xf32>
      %68 = arith.addf %64, %67 : vector<4x64xf32>
      %c0_57 = arith.constant 0 : index
      %c0_58 = arith.constant 0 : index
      %69 = vector.load %arg20[%c0_57, %c0_58] : memref<1x64xf32, #tpu.memory_space<vmem>>, vector<1x64xf32>
      %70 = vector.broadcast %69 : vector<1x64xf32> to vector<4x64xf32>
      %71 = arith.addf %68, %70 : vector<4x64xf32>
      %cst_59 = arith.constant 0.000000e+00 : f32
      %72 = vector.broadcast %cst_59 : f32 to vector<4x64xf32>
      %73 = arith.maximumf %71, %72 : vector<4x64xf32>
      %c0_60 = arith.constant 0 : index
      %c0_61 = arith.constant 0 : index
      %74 = vector.load %arg21[%c0_60, %c0_61] : memref<1x64xf32, #tpu.memory_space<vmem>>, vector<1x64xf32>
      %75 = vector.broadcast %74 : vector<1x64xf32> to vector<4x64xf32>
      %76 = arith.mulf %73, %75 : vector<4x64xf32>
      %cst_62 = arith.constant dense<0.000000e+00> : vector<4xf32>
      %77 = vector.multi_reduction <add>, %76, %cst_62 [1] : vector<4x64xf32> to vector<4xf32>
      %78 = vector.shape_cast %77 : vector<4xf32> to vector<4x1xf32>
      %c0_63 = arith.constant 0 : index
      %c0_64 = arith.constant 0 : index
      %79 = vector.load %arg22[%c0_63, %c0_64] : memref<1x1xf32, #tpu.memory_space<vmem>>, vector<1x1xf32>
      %80 = vector.broadcast %79 : vector<1x1xf32> to vector<4x1xf32>
      %81 = arith.addf %78, %80 : vector<4x1xf32>
      %c0_65 = arith.constant 0 : index
      %c0_66 = arith.constant 0 : index
      %82 = vector.load %arg23[%c0_65, %c0_66] : memref<4x1xf32, #tpu.memory_space<vmem>>, vector<4x1xf32>
      tpu.vector_store %arg23[%c0_65, %c0_66], %81 {strides = array<i32>} : memref<4x1xf32, #tpu.memory_space<vmem>>, vector<4x1xf32>,
    } else {
    }
    return
  }
  func.func @transform_0(%arg0: i32, %arg1: i32) -> (i32, i32) {
    %c0_i32 = arith.constant 0 : i32
    %c0_i32_0 = arith.constant 0 : i32
    return %arg0, %c0_i32 : i32, i32
  }
  func.func @transform_1(%arg0: i32, %arg1: i32) -> (i32, i32) {
    %c0_i32 = arith.constant 0 : i32
    return %arg0, %arg1 : i32, i32
  }
  func.func @transform_2(%arg0: i32, %arg1: i32) -> (i32, i32) {
    %c0_i32 = arith.constant 0 : i32
    %c0_i32_0 = arith.constant 0 : i32
    return %arg0, %c0_i32 : i32, i32
  }
  func.func @transform_3(%arg0: i32, %arg1: i32) -> (i32, i32) {
    %c0_i32 = arith.constant 0 : i32
    %c0_i32_0 = arith.constant 0 : i32
    %c0_i32_1 = arith.constant 0 : i32
    return %c0_i32, %c0_i32_0 : i32, i32
  }
  func.func @transform_4(%arg0: i32, %arg1: i32) -> (i32, i32) {
    %c0_i32 = arith.constant 0 : i32
    %c0_i32_0 = arith.constant 0 : i32
    %c0_i32_1 = arith.constant 0 : i32
    return %c0_i32, %c0_i32_0 : i32, i32
  }
  func.func @transform_5(%arg0: i32, %arg1: i32) -> (i32, i32) {
    %c0_i32 = arith.constant 0 : i32
    %c0_i32_0 = arith.constant 0 : i32
    %c0_i32_1 = arith.constant 0 : i32
    return %c0_i32, %c0_i32_0 : i32, i32
  }
  func.func @transform_6(%arg0: i32, %arg1: i32) -> (i32, i32) {
    %c0_i32 = arith.constant 0 : i32
    %c0_i32_0 = arith.constant 0 : i32
    %c0_i32_1 = arith.constant 0 : i32
    return %c0_i32, %c0_i32_0 : i32, i32
  }
  func.func @transform_7(%arg0: i32, %arg1: i32) -> (i32, i32) {
    %c0_i32 = arith.constant 0 : i32
    %c0_i32_0 = arith.constant 0 : i32
    return %arg1, %c0_i32 : i32, i32
  }
  func.func @transform_8(%arg0: i32, %arg1: i32) -> (i32, i32) {
    %c0_i32 = arith.constant 0 : i32
    %c0_i32_0 = arith.constant 0 : i32
    %c0_i32_1 = arith.constant 0 : i32
    return %c0_i32, %c0_i32_0 : i32, i32
  }
  func.func @transform_9(%arg0: i32, %arg1: i32) -> (i32, i32) {
    %c0_i32 = arith.constant 0 : i32
    %c0_i32_0 = arith.constant 0 : i32
    %c0_i32_1 = arith.constant 0 : i32
    return %c0_i32, %c0_i32_0 : i32, i32
  }
  func.func @transform_10(%arg0: i32, %arg1: i32) -> (i32, i32) {
    %c0_i32 = arith.constant 0 : i32
    %c0_i32_0 = arith.constant 0 : i32
    %c0_i32_1 = arith.constant 0 : i32
    return %c0_i32, %c0_i32_0 : i32, i32
  }
  func.func @transform_11(%arg0: i32, %arg1: i32) -> (i32, i32) {
    %c0_i32 = arith.constant 0 : i32
    %c0_i32_0 = arith.constant 0 : i32
    %c0_i32_1 = arith.constant 0 : i32
    return %c0_i32, %c0_i32_0 : i32, i32
  }
  func.func @transform_12(%arg0: i32, %arg1: i32) -> (i32, i32) {
    %c0_i32 = arith.constant 0 : i32
    %c0_i32_0 = arith.constant 0 : i32
    %c0_i32_1 = arith.constant 0 : i32
    return %c0_i32, %c0_i32_0 : i32, i32
  }
  func.func @transform_13(%arg0: i32, %arg1: i32) -> (i32, i32) {
    %c0_i32 = arith.constant 0 : i32
    %c0_i32_0 = arith.constant 0 : i32
    %c0_i32_1 = arith.constant 0 : i32
    return %c0_i32, %c0_i32_0 : i32, i32
  }
  func.func @transform_14(%arg0: i32, %arg1: i32) -> (i32, i32) {
    %c0_i32 = arith.constant 0 : i32
    %c0_i32_0 = arith.constant 0 : i32
    %c0_i32_1 = arith.constant 0 : i32
    return %c0_i32, %c0_i32_0 : i32, i32
  }
  func.func @transform_15(%arg0: i32, %arg1: i32) -> (i32, i32) {
    %c0_i32 = arith.constant 0 : i32
    %c0_i32_0 = arith.constant 0 : i32
    %c0_i32_1 = arith.constant 0 : i32
    return %c0_i32, %c0_i32_0 : i32, i32
  }
  func.func @transform_16(%arg0: i32, %arg1: i32) -> (i32, i32) {
    %c0_i32 = arith.constant 0 : i32
    %c0_i32_0 = arith.constant 0 : i32
    %c0_i32_1 = arith.constant 0 : i32
    return %c0_i32, %c0_i32_0 : i32, i32
  }
  func.func @transform_17(%arg0: i32, %arg1: i32) -> (i32, i32) {
    %c0_i32 = arith.constant 0 : i32
    %c0_i32_0 = arith.constant 0 : i32
    %c0_i32_1 = arith.constant 0 : i32
    return %c0_i32, %c0_i32_0 : i32, i32
  }
  func.func @transform_18(%arg0: i32, %arg1: i32) -> (i32, i32) {
    %c0_i32 = arith.constant 0 : i32
    %c0_i32_0 = arith.constant 0 : i32
    %c0_i32_1 = arith.constant 0 : i32
    return %c0_i32, %c0_i32_0 : i32, i32
  }
  func.func @transform_19(%arg0: i32, %arg1: i32) -> (i32, i32) {
    %c0_i32 = arith.constant 0 : i32
    %c0_i32_0 = arith.constant 0 : i32
    %c0_i32_1 = arith.constant 0 : i32
    return %c0_i32, %c0_i32_0 : i32, i32
  }
  func.func @transform_20(%arg0: i32, %arg1: i32) -> (i32, i32) {
    %c0_i32 = arith.constant 0 : i32
    %c0_i32_0 = arith.constant 0 : i32
    %c0_i32_1 = arith.constant 0 : i32
    return %c0_i32, %c0_i32_0 : i32, i32
  }
  func.func @transform_21(%arg0: i32, %arg1: i32) -> (i32, i32) {
    %c0_i32 = arith.constant 0 : i32
    %c0_i32_0 = arith.constant 0 : i32
    return %arg0, %c0_i32 : i32, i32
  }
}

</mosaic_0001>

<llo_original>
// kernel: tpu_custom_call.1
$region0: #{tpu_custom_call.1}
  #allocation0 [shape = 'u32[]', space=smem, size = 0x4, offset = 0x4, fixed_abs, tag = 'smem constant byte address 0x4 - core index']
  #allocation1 [shape = 'u32[72,128]{1,0:T(1,128)}', space=vmem, size = 0x9000, scoped, tag = 'internal scratch']
  #allocation2 [shape = 'f32[4,512]{1,0:T(4,128)}', space=vmem, size = 0x2000, scoped, tag = 'scratch operand']
  #allocation3 [shape = 'f32[1,1]{1,0:T(1,128)S(1)}', space=vmem, size = 0x200, scoped, tag = 'scoped memory for tpu_custom_call.1']
  %s0 = inlined_call_operand.hbm [shape: bf16[4,384], index: 0, kind: input, shape index: {}]
  %s1 = inlined_call_operand.hbm [shape: bf16[4,5120], index: 1, kind: input, shape index: {}]
  %s2 = inlined_call_operand.hbm [shape: bf16[4,16], index: 2, kind: input, shape index: {}]
  %s3 = inlined_call_operand.hbm [shape: bf16[384,256], index: 3, kind: input, shape index: {}]
  %s4 = inlined_call_operand.hbm [shape: f32[1,256], index: 4, kind: input, shape index: {}]
  %s5 = inlined_call_operand.hbm [shape: bf16[256,128], index: 5, kind: input, shape index: {}]
  %s6 = inlined_call_operand.hbm [shape: f32[1,128], index: 6, kind: input, shape index: {}]
  %s7 = inlined_call_operand.hbm [shape: bf16[5120,512], index: 7, kind: input, shape index: {}]
  %s8 = inlined_call_operand.hbm [shape: f32[1,512], index: 8, kind: input, shape index: {}]
  %s9 = inlined_call_operand.hbm [shape: bf16[512,128], index: 9, kind: input, shape index: {}]
  %s10 = inlined_call_operand.hbm [shape: f32[1,128], index: 10, kind: input, shape index: {}]
  %s11 = inlined_call_operand.hbm [shape: bf16[16,64], index: 11, kind: input, shape index: {}]
  %s12 = inlined_call_operand.hbm [shape: f32[1,64], index: 12, kind: input, shape index: {}]
  %s13 = inlined_call_operand.vmem [shape: bf16[64,32], index: 13, kind: input, shape index: {}]
  %s14 = inlined_call_operand.hbm [shape: f32[1,32], index: 14, kind: input, shape index: {}]
  %s15 = inlined_call_operand.vmem [shape: bf16[128,64], index: 15, kind: input, shape index: {}]
  %s16 = inlined_call_operand.vmem [shape: bf16[128,64], index: 16, kind: input, shape index: {}]
  %s17 = inlined_call_operand.hbm [shape: bf16[32,64], index: 17, kind: input, shape index: {}]
  %s18 = inlined_call_operand.hbm [shape: f32[1,64], index: 18, kind: input, shape index: {}]
  %s19 = inlined_call_operand.hbm [shape: f32[1,64], index: 19, kind: input, shape index: {}]
  %s20 = inlined_call_operand.<no memory space> [shape: f32[1,1], index: 20, kind: input, shape index: {}]
  %s21 = inlined_call_operand.vmem [shape: f32[4,1], index: 21, kind: output, shape index: {}]
  %s22 = sld [smem:[#allocation0]]
  $region193: #{tpu_custom_call.1} parent=0
    _
  %s24 = ssub.s32 1, %s22
  %s25 = scalar_select 0, %s24, %s22
  %v26 = vstv %s20
  %27 = vst [vmem:[#allocation3] sm:$0x1] %v26
  $region1: #{tpu_custom_call.1} parent=0
    #allocation4 [shape = 'u8[3072]{0}', space=vmem, size = 0xc00, scoped, tag = 'input window, operand 0, single buffered']
    #allocation5 [shape = 's32[2]{0}', space=sflag, size = 0x8, scoped, tag = 'scoped memory for tpu_custom_call.1']
    #allocation6 [shape = 'u8[10240]{0}', space=vmem, size = 0x2800, scoped, tag = 'input window, operand 1']
    #allocation7 [shape = 's32[2]{0}', space=sflag, size = 0x8, scoped, tag = 'scoped memory for tpu_custom_call.1']
    #allocation8 [shape = 'u8[1024]{0}', space=vmem, size = 0x400, scoped, tag = 'input window, operand 2, single buffered']
    #allocation9 [shape = 'u8[196608]{0}', space=vmem, size = 0x30000, scoped, tag = 'input window, operand 3, single buffered']
    #allocation10 [shape = 's32[1]{0}', space=sflag, size = 0x4, scoped, tag = 'scoped memory for tpu_custom_call.1']
    #allocation11 [shape = 'u8[1024]{0}', space=vmem, size = 0x400, scoped, tag = 'input window, operand 4, single buffered']
    #allocation12 [shape = 'u8[65536]{0}', space=vmem, size = 0x10000, scoped, tag = 'input window, operand 5, single buffered']
    #allocation13 [shape = 's32[1]{0}', space=sflag, size = 0x4, scoped, tag = 'scoped memory for tpu_custom_call.1']
    #allocation14 [shape = 'u8[512]{0}', space=vmem, size = 0x400, scoped, tag = 'input window, operand 6, single buffered']
    #allocation15 [shape = 'u8[1310720]{0}', space=vmem, size = 0x140000, scoped, tag = 'input window, operand 7']
    #allocation16 [shape = 's32[2]{0}', space=sflag, size = 0x8, scoped, tag = 'scoped memory for tpu_custom_call.1']
    #allocation17 [shape = 'u8[2048]{0}', space=vmem, size = 0x800, scoped, tag = 'input window, operand 8, single buffered']
    #allocation18 [shape = 'u8[131072]{0}', space=vmem, size = 0x20000, scoped, tag = 'input window, operand 9, single buffered']
    #allocation19 [shape = 's32[1]{0}', space=sflag, size = 0x4, scoped, tag = 'scoped memory for tpu_custom_call.1']
    #allocation20 [shape = 'u8[512]{0}', space=vmem, size = 0x400, scoped, tag = 'input window, operand 10, single buffered']
    #allocation21 [shape = 'u8[4096]{0}', space=vmem, size = 0x1000, scoped, tag = 'input window, operand 11, single buffered']
    #allocation22 [shape = 's32[1]{0}', space=sflag, size = 0x4, scoped, tag = 'scoped memory for tpu_custom_call.1']
    #allocation23 [shape = 'u8[512]{0}', space=vmem, size = 0x400, scoped, tag = 'input window, operand 12, single buffered']
    #allocation24 [shape = 'u8[512]{0}', space=vmem, size = 0x400, scoped, tag = 'input window, operand 14, single buffered']
    #allocation25 [shape = 's32[1]{0}', space=sflag, size = 0x4, scoped, tag = 'scoped memory for tpu_custom_call.1']
    #allocation26 [shape = 'u8[8192]{0}', space=vmem, size = 0x2000, scoped, tag = 'input window, operand 17, single buffered']
    #allocation27 [shape = 'u8[512]{0}', space=vmem, size = 0x400, scoped, tag = 'input window, operand 18, single buffered']
    #allocation28 [shape = 's32[1]{0}', space=sflag, size = 0x4, scoped, tag = 'scoped memory for tpu_custom_call.1']
    #allocation29 [shape = 'u8[512]{0}', space=vmem, size = 0x400, scoped, tag = 'input window, operand 19, single buffered']
    %28 = vsyncpa [#allocation5], 0
    %29 = vsyncpa [#allocation7], 0
    %s30 = scalar_lea.sflag [#allocation7], 1
    %31 = vsyncpa %s30, 0
    %32 = vsyncpa [#allocation10], 0
    %33 = vsyncpa [#allocation13], 0
    %34 = vsyncpa [#allocation16], 0
    %s35 = scalar_lea.sflag [#allocation16], 1
    %36 = vsyncpa %s35, 0
    %37 = vsyncpa [#allocation19], 0
    %38 = vsyncpa [#allocation22], 0
    %39 = vsyncpa [#allocation25], 0
    %40 = vsyncpa [#allocation28], 0
    loop: start=0, step=1, limit=10
    $region2: #{tpu_custom_call.1} parent=1 // loop_pre_header
      _
    $region3: #{tpu_custom_call.1} parent=1 // loop_header
      %s42 = sphi 0, %s46
      %p43 = scmp.ge.s32.totalorder %s42, 10
      %s49 = sphi 0, %s61
      %s50 = sphi 0, %s57
      %s51 = sphi 0, %s49
      %s52 = sphi 0, %s50
      %s53 = sphi 0, %s51
      %s54 = sphi 0, %s52
      %s64 = sphi 0, %s66
      %s67 = sphi 0, %s64
      %s68 = sphi 0, %s67
      %s84 = sphi 0, %s68
      %s92 = sphi 0, %s94
      %s95 = sphi 0, %s92
      %s96 = sphi 0, %s95
      %s112 = sphi 0, %s96
      %s118 = sphi 0, %s120
      %s121 = sphi 0, %s118
      %s122 = sphi 0, %s121
      %s138 = sphi 0, %s122
      %s142 = sphi 0, %s142
      %s144 = sphi 0, %s142
      %s145 = sphi 0, %s144
      %s159 = sphi 0, %s145
      %s163 = sphi 0, %s163
      %s165 = sphi 0, %s163
      %s166 = sphi 0, %s165
      %s180 = sphi 0, %s166
      %s184 = sphi 0, %s184
      %s186 = sphi 0, %s184
      %s187 = sphi 0, %s186
      %s201 = sphi 0, %s187
      %s205 = sphi 0, %s205
      %s207 = sphi 0, %s205
      %s208 = sphi 0, %s207
      %s222 = sphi 0, %s208
      %s228 = sphi 0, %s230
      %s231 = sphi 0, %s228
      %s232 = sphi 0, %s231
      %s248 = sphi 0, %s232
      %s252 = sphi 0, %s252
      %s254 = sphi 0, %s252
      %s255 = sphi 0, %s254
      %s269 = sphi 0, %s255
      %s273 = sphi 0, %s273
      %s275 = sphi 0, %s273
      %s276 = sphi 0, %s275
      %s290 = sphi 0, %s276
      %s294 = sphi 0, %s294
      %s296 = sphi 0, %s294
      %s297 = sphi 0, %s296
      %s311 = sphi 0, %s297
      %s315 = sphi 0, %s315
      %s317 = sphi 0, %s315
      %s318 = sphi 0, %s317
      %s332 = sphi 0, %s318
      %s336 = sphi 0, %s336
      %s338 = sphi 0, %s336
      %s339 = sphi 0, %s338
      %s353 = sphi 0, %s339
      %s357 = sphi 0, %s357
      %s359 = sphi 0, %s357
      %s360 = sphi 0, %s359
      %s374 = sphi 0, %s360
      %s378 = sphi 0, %s378
      %s380 = sphi 0, %s378
      %s381 = sphi 0, %s380
      %s395 = sphi 0, %s381
      %s399 = sphi 0, %s399
      %s401 = sphi 0, %s399
      %s402 = sphi 0, %s401
      %s416 = sphi 0, %s402
      %s420 = sphi 0, %s420
      %s422 = sphi 0, %s420
      %s423 = sphi 0, %s422
      %s437 = sphi 0, %s423
      %s441 = sphi 0, %s441
      %s443 = sphi 0, %s441
      %s444 = sphi 0, %s443
      %s458 = sphi 0, %s444
      %s462 = sphi 0, %s462
      %s464 = sphi 0, %s462
      %s465 = sphi 0, %s464
      %s479 = sphi 0, %s465
      %s483 = sphi 0, %s483
      %s485 = sphi 0, %s483
      %s486 = sphi 0, %s485
      %s500 = sphi 0, %s486
      %s504 = sphi 0, %s504
      %s506 = sphi 0, %s504
      %s507 = sphi 0, %s506
      %s521 = sphi 0, %s507
      %s527 = sphi 0, %s529
      %s530 = sphi 0, %s527
      %s531 = sphi 0, %s530
      %s547 = sphi 0, %s531
    $region4: #{tpu_custom_call.1} parent=1 // loop_header_branch
      %45 = sbr.rel (%p43) target = $region8
    $region5: #{tpu_custom_call.1} parent=1 // loop_body
      %s47 = ssub.s32 %s42, 1
      %s48 = ssub.s32 %s42, 2
      %s55 = sadd.s32 1, %s50
      %p56 = scmp.ge.s32.totalorder %s55, 8
      %s57 = scalar_select %p56, 0, %s55
      %s58 = sadd.s32 1, %s49
      %s59 = scalar_select %p56, %s58, %s49
      %p60 = scmp.ge.s32.totalorder %s59, 1
      %s61 = scalar_select %p60, 0, %s59
      %s62 = ssub.s32 %s49, %s61
      %p63 = scmp.eq.s32.totalorder %s62, 0
      %s65 = sadd.s32 %s64, 1
      %s66 = scalar_select %p63, %s64, %s65
      %p69 = pneg %p63
      %p70 = scmp.eq.s32.totalorder %s42, 7
      %p71 = por %p69, %p70
      %p72 = scmp.ne.s32.totalorder %s64, %s67
      %p73 = scmp.eq.s32.totalorder %s42, 0
      %p74 = por %p72, %p73
      %p75 = scmp.ne.s32.totalorder %s64, %s67
      %p76 = scmp.eq.s32.totalorder %s47, 7
      %p77 = por %p75, %p76
      %p78 = scmp.ne.s32.totalorder %s67, %s68
      %p79 = scmp.eq.s32.totalorder %s47, 0
      %p80 = por %p78, %p79
      %p81 = scmp.ne.s32.totalorder %s67, %s68
      %p82 = scmp.eq.s32.totalorder %s48, 7
      %p83 = por %p81, %p82
      %p85 = scmp.ne.s32.totalorder %s68, %s84
      %p86 = scmp.eq.s32.totalorder %s48, 0
      %p87 = por %p85, %p86
      %s88 = ssub.s32 %s49, %s61
      %s89 = ssub.s32 %s50, %s57
      %s90 = sor.u32 %s88, %s89
      %p91 = scmp.eq.s32.totalorder %s90, 0
      %s93 = sadd.s32 %s92, 1
      %s94 = scalar_select %p91, %s92, %s93
      %p97 = pneg %p91
      %p98 = scmp.eq.s32.totalorder %s42, 7
      %p99 = por %p97, %p98
      %p100 = scmp.ne.s32.totalorder %s92, %s95
      %p101 = scmp.eq.s32.totalorder %s42, 0
      %p102 = por %p100, %p101
      %p103 = scmp.ne.s32.totalorder %s92, %s95
      %p104 = scmp.eq.s32.totalorder %s47, 7
      %p105 = por %p103, %p104
      %p106 = scmp.ne.s32.totalorder %s95, %s96
      %p107 = scmp.eq.s32.totalorder %s47, 0
      %p108 = por %p106, %p107
      %p109 = scmp.ne.s32.totalorder %s95, %s96
      %p110 = scmp.eq.s32.totalorder %s48, 7
      %p111 = por %p109, %p110
      %p113 = scmp.ne.s32.totalorder %s96, %s112
      %p114 = scmp.eq.s32.totalorder %s48, 0
      %p115 = por %p113, %p114
      %s116 = ssub.s32 %s49, %s61
      %p117 = scmp.eq.s32.totalorder %s116, 0
      %s119 = sadd.s32 %s118, 1
      %s120 = scalar_select %p117, %s118, %s119
      %p123 = pneg %p117
      %p124 = scmp.eq.s32.totalorder %s42, 7
      %p125 = por %p123, %p124
      %p126 = scmp.ne.s32.totalorder %s118, %s121
      %p127 = scmp.eq.s32.totalorder %s42, 0
      %p128 = por %p126, %p127
      %p129 = scmp.ne.s32.totalorder %s118, %s121
      %p130 = scmp.eq.s32.totalorder %s47, 7
      %p131 = por %p129, %p130
      %p132 = scmp.ne.s32.totalorder %s121, %s122
      %p133 = scmp.eq.s32.totalorder %s47, 0
      %p134 = por %p132, %p133
      %p135 = scmp.ne.s32.totalorder %s121, %s122
      %p136 = scmp.eq.s32.totalorder %s48, 7
      %p137 = por %p135, %p136
      %p139 = scmp.ne.s32.totalorder %s122, %s138
      %p140 = scmp.eq.s32.totalorder %s48, 0
      %p141 = por %p139, %p140
      %s143 = sadd.s32 %s142, 1
      %p146 = scmp.eq.s32.totalorder %s42, 7
      %p147 = scmp.ne.s32.totalorder %s142, %s144
      %p148 = scmp.eq.s32.totalorder %s42, 0
      %p149 = por %p147, %p148
      %p150 = scmp.ne.s32.totalorder %s142, %s144
      %p151 = scmp.eq.s32.totalorder %s47, 7
      %p152 = por %p150, %p151
      %p153 = scmp.ne.s32.totalorder %s144, %s145
      %p154 = scmp.eq.s32.totalorder %s47, 0
      %p155 = por %p153, %p154
      %p156 = scmp.ne.s32.totalorder %s144, %s145
      %p157 = scmp.eq.s32.totalorder %s48, 7
      %p158 = por %p156, %p157
      %p160 = scmp.ne.s32.totalorder %s145, %s159
      %p161 = scmp.eq.s32.totalorder %s48, 0
      %p162 = por %p160, %p161
      %s164 = sadd.s32 %s163, 1
      %p167 = scmp.eq.s32.totalorder %s42, 7
      %p168 = scmp.ne.s32.totalorder %s163, %s165
      %p169 = scmp.eq.s32.totalorder %s42, 0
      %p170 = por %p168, %p169
      %p171 = scmp.ne.s32.totalorder %s163, %s165
      %p172 = scmp.eq.s32.totalorder %s47, 7
      %p173 = por %p171, %p172
      %p174 = scmp.ne.s32.totalorder %s165, %s166
      %p175 = scmp.eq.s32.totalorder %s47, 0
      %p176 = por %p174, %p175
      %p177 = scmp.ne.s32.totalorder %s165, %s166
      %p178 = scmp.eq.s32.totalorder %s48, 7
      %p179 = por %p177, %p178
      %p181 = scmp.ne.s32.totalorder %s166, %s180
      %p182 = scmp.eq.s32.totalorder %s48, 0
      %p183 = por %p181, %p182
      %s185 = sadd.s32 %s184, 1
      %p188 = scmp.eq.s32.totalorder %s42, 7
      %p189 = scmp.ne.s32.totalorder %s184, %s186
      %p190 = scmp.eq.s32.totalorder %s42, 0
      %p191 = por %p189, %p190
      %p192 = scmp.ne.s32.totalorder %s184, %s186
      %p193 = scmp.eq.s32.totalorder %s47, 7
      %p194 = por %p192, %p193
      %p195 = scmp.ne.s32.totalorder %s186, %s187
      %p196 = scmp.eq.s32.totalorder %s47, 0
      %p197 = por %p195, %p196
      %p198 = scmp.ne.s32.totalorder %s186, %s187
      %p199 = scmp.eq.s32.totalorder %s48, 7
      %p200 = por %p198, %p199
      %p202 = scmp.ne.s32.totalorder %s187, %s201
      %p203 = scmp.eq.s32.totalorder %s48, 0
      %p204 = por %p202, %p203
      %s206 = sadd.s32 %s205, 1
      %p209 = scmp.eq.s32.totalorder %s42, 7
      %p210 = scmp.ne.s32.totalorder %s205, %s207
      %p211 = scmp.eq.s32.totalorder %s42, 0
      %p212 = por %p210, %p211
      %p213 = scmp.ne.s32.totalorder %s205, %s207
      %p214 = scmp.eq.s32.totalorder %s47, 7
      %p215 = por %p213, %p214
      %p216 = scmp.ne.s32.totalorder %s207, %s208
      %p217 = scmp.eq.s32.totalorder %s47, 0
      %p218 = por %p216, %p217
      %p219 = scmp.ne.s32.totalorder %s207, %s208
      %p220 = scmp.eq.s32.totalorder %s48, 7
      %p221 = por %p219, %p220
      %p223 = scmp.ne.s32.totalorder %s208, %s222
      %p224 = scmp.eq.s32.totalorder %s48, 0
      %p225 = por %p223, %p224
      %s226 = ssub.s32 %s50, %s57
      %p227 = scmp.eq.s32.totalorder %s226, 0
      %s229 = sadd.s32 %s228, 1
      %s230 = scalar_select %p227, %s228, %s229
      %p233 = pneg %p227
      %p234 = scmp.eq.s32.totalorder %s42, 7
      %p235 = por %p233, %p234
      %p236 = scmp.ne.s32.totalorder %s228, %s231
      %p237 = scmp.eq.s32.totalorder %s42, 0
      %p238 = por %p236, %p237
      %p239 = scmp.ne.s32.totalorder %s228, %s231
      %p240 = scmp.eq.s32.totalorder %s47, 7
      %p241 = por %p239, %p240
      %p242 = scmp.ne.s32.totalorder %s231, %s232
      %p243 = scmp.eq.s32.totalorder %s47, 0
      %p244 = por %p242, %p243
      %p245 = scmp.ne.s32.totalorder %s231, %s232
      %p246 = scmp.eq.s32.totalorder %s48, 7
      %p247 = por %p245, %p246
      %p249 = scmp.ne.s32.totalorder %s232, %s248
      %p250 = scmp.eq.s32.totalorder %s48, 0
      %p251 = por %p249, %p250
      %s253 = sadd.s32 %s252, 1
      %p256 = scmp.eq.s32.totalorder %s42, 7
      %p257 = scmp.ne.s32.totalorder %s252, %s254
      %p258 = scmp.eq.s32.totalorder %s42, 0
      %p259 = por %p257, %p258
      %p260 = scmp.ne.s32.totalorder %s252, %s254
      %p261 = scmp.eq.s32.totalorder %s47, 7
      %p262 = por %p260, %p261
      %p263 = scmp.ne.s32.totalorder %s254, %s255
      %p264 = scmp.eq.s32.totalorder %s47, 0
      %p265 = por %p263, %p264
      %p266 = scmp.ne.s32.totalorder %s254, %s255
      %p267 = scmp.eq.s32.totalorder %s48, 7
      %p268 = por %p266, %p267
      %p270 = scmp.ne.s32.totalorder %s255, %s269
      %p271 = scmp.eq.s32.totalorder %s48, 0
      %p272 = por %p270, %p271
      %s274 = sadd.s32 %s273, 1
      %p277 = scmp.eq.s32.totalorder %s42, 7
      %p278 = scmp.ne.s32.totalorder %s273, %s275
      %p279 = scmp.eq.s32.totalorder %s42, 0
      %p280 = por %p278, %p279
      %p281 = scmp.ne.s32.totalorder %s273, %s275
      %p282 = scmp.eq.s32.totalorder %s47, 7
      %p283 = por %p281, %p282
      %p284 = scmp.ne.s32.totalorder %s275, %s276
      %p285 = scmp.eq.s32.totalorder %s47, 0
      %p286 = por %p284, %p285
      %p287 = scmp.ne.s32.totalorder %s275, %s276
      %p288 = scmp.eq.s32.totalorder %s48, 7
      %p289 = por %p287, %p288
      %p291 = scmp.ne.s32.totalorder %s276, %s290
      %p292 = scmp.eq.s32.totalorder %s48, 0
      %p293 = por %p291, %p292
      %s295 = sadd.s32 %s294, 1
      %p298 = scmp.eq.s32.totalorder %s42, 7
      %p299 = scmp.ne.s32.totalorder %s294, %s296
      %p300 = scmp.eq.s32.totalorder %s42, 0
      %p301 = por %p299, %p300
      %p302 = scmp.ne.s32.totalorder %s294, %s296
      %p303 = scmp.eq.s32.totalorder %s47, 7
      %p304 = por %p302, %p303
      %p305 = scmp.ne.s32.totalorder %s296, %s297
      %p306 = scmp.eq.s32.totalorder %s47, 0
      %p307 = por %p305, %p306
      %p308 = scmp.ne.s32.totalorder %s296, %s297
      %p309 = scmp.eq.s32.totalorder %s48, 7
      %p310 = por %p308, %p309
      %p312 = scmp.ne.s32.totalorder %s297, %s311
      %p313 = scmp.eq.s32.totalorder %s48, 0
      %p314 = por %p312, %p313
      %s316 = sadd.s32 %s315, 1
      %p319 = scmp.eq.s32.totalorder %s42, 7
      %p320 = scmp.ne.s32.totalorder %s315, %s317
      %p321 = scmp.eq.s32.totalorder %s42, 0
      %p322 = por %p320, %p321
      %p323 = scmp.ne.s32.totalorder %s315, %s317
      %p324 = scmp.eq.s32.totalorder %s47, 7
      %p325 = por %p323, %p324
      %p326 = scmp.ne.s32.totalorder %s317, %s318
      %p327 = scmp.eq.s32.totalorder %s47, 0
      %p328 = por %p326, %p327
      %p329 = scmp.ne.s32.totalorder %s317, %s318
      %p330 = scmp.eq.s32.totalorder %s48, 7
      %p331 = por %p329, %p330
      %p333 = scmp.ne.s32.totalorder %s318, %s332
      %p334 = scmp.eq.s32.totalorder %s48, 0
      %p335 = por %p333, %p334
      %s337 = sadd.s32 %s336, 1
      %p340 = scmp.eq.s32.totalorder %s42, 7
      %p341 = scmp.ne.s32.totalorder %s336, %s338
      %p342 = scmp.eq.s32.totalorder %s42, 0
      %p343 = por %p341, %p342
      %p344 = scmp.ne.s32.totalorder %s336, %s338
      %p345 = scmp.eq.s32.totalorder %s47, 7
      %p346 = por %p344, %p345
      %p347 = scmp.ne.s32.totalorder %s338, %s339
      %p348 = scmp.eq.s32.totalorder %s47, 0
      %p349 = por %p347, %p348
      %p350 = scmp.ne.s32.totalorder %s338, %s339
      %p351 = scmp.eq.s32.totalorder %s48, 7
      %p352 = por %p350, %p351
      %p354 = scmp.ne.s32.totalorder %s339, %s353
      %p355 = scmp.eq.s32.totalorder %s48, 0
      %p356 = por %p354, %p355
      %s358 = sadd.s32 %s357, 1
      %p361 = scmp.eq.s32.totalorder %s42, 7
      %p362 = scmp.ne.s32.totalorder %s357, %s359
      %p363 = scmp.eq.s32.totalorder %s42, 0
      %p364 = por %p362, %p363
      %p365 = scmp.ne.s32.totalorder %s357, %s359
      %p366 = scmp.eq.s32.totalorder %s47, 7
      %p367 = por %p365, %p366
      %p368 = scmp.ne.s32.totalorder %s359, %s360
      %p369 = scmp.eq.s32.totalorder %s47, 0
      %p370 = por %p368, %p369
      %p371 = scmp.ne.s32.totalorder %s359, %s360
      %p372 = scmp.eq.s32.totalorder %s48, 7
      %p373 = por %p371, %p372
      %p375 = scmp.ne.s32.totalorder %s360, %s374
      %p376 = scmp.eq.s32.totalorder %s48, 0
      %p377 = por %p375, %p376
      %s379 = sadd.s32 %s378, 1
      %p382 = scmp.eq.s32.totalorder %s42, 7
      %p383 = scmp.ne.s32.totalorder %s378, %s380
      %p384 = scmp.eq.s32.totalorder %s42, 0
      %p385 = por %p383, %p384
      %p386 = scmp.ne.s32.totalorder %s378, %s380
      %p387 = scmp.eq.s32.totalorder %s47, 7
      %p388 = por %p386, %p387
      %p389 = scmp.ne.s32.totalorder %s380, %s381
      %p390 = scmp.eq.s32.totalorder %s47, 0
      %p391 = por %p389, %p390
      %p392 = scmp.ne.s32.totalorder %s380, %s381
      %p393 = scmp.eq.s32.totalorder %s48, 7
      %p394 = por %p392, %p393
      %p396 = scmp.ne.s32.totalorder %s381, %s395
      %p397 = scmp.eq.s32.totalorder %s48, 0
      %p398 = por %p396, %p397
      %s400 = sadd.s32 %s399, 1
      %p403 = scmp.eq.s32.totalorder %s42, 7
      %p404 = scmp.ne.s32.totalorder %s399, %s401
      %p405 = scmp.eq.s32.totalorder %s42, 0
      %p406 = por %p404, %p405
      %p407 = scmp.ne.s32.totalorder %s399, %s401
      %p408 = scmp.eq.s32.totalorder %s47, 7
      %p409 = por %p407, %p408
      %p410 = scmp.ne.s32.totalorder %s401, %s402
      %p411 = scmp.eq.s32.totalorder %s47, 0
      %p412 = por %p410, %p411
      %p413 = scmp.ne.s32.totalorder %s401, %s402
      %p414 = scmp.eq.s32.totalorder %s48, 7
      %p415 = por %p413, %p414
      %p417 = scmp.ne.s32.totalorder %s402, %s416
      %p418 = scmp.eq.s32.totalorder %s48, 0
      %p419 = por %p417, %p418
      %s421 = sadd.s32 %s420, 1
      %p424 = scmp.eq.s32.totalorder %s42, 7
      %p425 = scmp.ne.s32.totalorder %s420, %s422
      %p426 = scmp.eq.s32.totalorder %s42, 0
      %p427 = por %p425, %p426
      %p428 = scmp.ne.s32.totalorder %s420, %s422
      %p429 = scmp.eq.s32.totalorder %s47, 7
      %p430 = por %p428, %p429
      %p431 = scmp.ne.s32.totalorder %s422, %s423
      %p432 = scmp.eq.s32.totalorder %s47, 0
      %p433 = por %p431, %p432
      %p434 = scmp.ne.s32.totalorder %s422, %s423
      %p435 = scmp.eq.s32.totalorder %s48, 7
      %p436 = por %p434, %p435
      %p438 = scmp.ne.s32.totalorder %s423, %s437
      %p439 = scmp.eq.s32.totalorder %s48, 0
      %p440 = por %p438, %p439
      %s442 = sadd.s32 %s441, 1
      %p445 = scmp.eq.s32.totalorder %s42, 7
      %p446 = scmp.ne.s32.totalorder %s441, %s443
      %p447 = scmp.eq.s32.totalorder %s42, 0
      %p448 = por %p446, %p447
      %p449 = scmp.ne.s32.totalorder %s441, %s443
      %p450 = scmp.eq.s32.totalorder %s47, 7
      %p451 = por %p449, %p450
      %p452 = scmp.ne.s32.totalorder %s443, %s444
      %p453 = scmp.eq.s32.totalorder %s47, 0
      %p454 = por %p452, %p453
      %p455 = scmp.ne.s32.totalorder %s443, %s444
      %p456 = scmp.eq.s32.totalorder %s48, 7
      %p457 = por %p455, %p456
      %p459 = scmp.ne.s32.totalorder %s444, %s458
      %p460 = scmp.eq.s32.totalorder %s48, 0
      %p461 = por %p459, %p460
      %s463 = sadd.s32 %s462, 1
      %p466 = scmp.eq.s32.totalorder %s42, 7
      %p467 = scmp.ne.s32.totalorder %s462, %s464
      %p468 = scmp.eq.s32.totalorder %s42, 0
      %p469 = por %p467, %p468
      %p470 = scmp.ne.s32.totalorder %s462, %s464
      %p471 = scmp.eq.s32.totalorder %s47, 7
      %p472 = por %p470, %p471
      %p473 = scmp.ne.s32.totalorder %s464, %s465
      %p474 = scmp.eq.s32.totalorder %s47, 0
      %p475 = por %p473, %p474
      %p476 = scmp.ne.s32.totalorder %s464, %s465
      %p477 = scmp.eq.s32.totalorder %s48, 7
      %p478 = por %p476, %p477
      %p480 = scmp.ne.s32.totalorder %s465, %s479
      %p481 = scmp.eq.s32.totalorder %s48, 0
      %p482 = por %p480, %p481
      %s484 = sadd.s32 %s483, 1
      %p487 = scmp.eq.s32.totalorder %s42, 7
      %p488 = scmp.ne.s32.totalorder %s483, %s485
      %p489 = scmp.eq.s32.totalorder %s42, 0
      %p490 = por %p488, %p489
      %p491 = scmp.ne.s32.totalorder %s483, %s485
      %p492 = scmp.eq.s32.totalorder %s47, 7
      %p493 = por %p491, %p492
      %p494 = scmp.ne.s32.totalorder %s485, %s486
      %p495 = scmp.eq.s32.totalorder %s47, 0
      %p496 = por %p494, %p495
      %p497 = scmp.ne.s32.totalorder %s485, %s486
      %p498 = scmp.eq.s32.totalorder %s48, 7
      %p499 = por %p497, %p498
      %p501 = scmp.ne.s32.totalorder %s486, %s500
      %p502 = scmp.eq.s32.totalorder %s48, 0
      %p503 = por %p501, %p502
      %s505 = sadd.s32 %s504, 1
      %p508 = scmp.eq.s32.totalorder %s42, 7
      %p509 = scmp.ne.s32.totalorder %s504, %s506
      %p510 = scmp.eq.s32.totalorder %s42, 0
      %p511 = por %p509, %p510
      %p512 = scmp.ne.s32.totalorder %s504, %s506
      %p513 = scmp.eq.s32.totalorder %s47, 7
      %p514 = por %p512, %p513
      %p515 = scmp.ne.s32.totalorder %s506, %s507
      %p516 = scmp.eq.s32.totalorder %s47, 0
      %p517 = por %p515, %p516
      %p518 = scmp.ne.s32.totalorder %s506, %s507
      %p519 = scmp.eq.s32.totalorder %s48, 7
      %p520 = por %p518, %p519
      %p522 = scmp.ne.s32.totalorder %s507, %s521
      %p523 = scmp.eq.s32.totalorder %s48, 0
      %p524 = por %p522, %p523
      %s525 = ssub.s32 %s49, %s61
      %p526 = scmp.eq.s32.totalorder %s525, 0
      %s528 = sadd.s32 %s527, 1
      %s529 = scalar_select %p526, %s527, %s528
      %p532 = pneg %p526
      %p533 = scmp.eq.s32.totalorder %s42, 7
      %p534 = por %p532, %p533
      %p535 = scmp.ne.s32.totalorder %s527, %s530
      %p536 = scmp.eq.s32.totalorder %s42, 0
      %p537 = por %p535, %p536
      %p538 = scmp.ne.s32.totalorder %s527, %s530
      %p539 = scmp.eq.s32.totalorder %s47, 7
      %p540 = por %p538, %p539
      %p541 = scmp.ne.s32.totalorder %s530, %s531
      %p542 = scmp.eq.s32.totalorder %s47, 0
      %p543 = por %p541, %p542
      %p544 = scmp.ne.s32.totalorder %s530, %s531
      %p545 = scmp.eq.s32.totalorder %s48, 7
      %p546 = por %p544, %p545
      %p548 = scmp.ne.s32.totalorder %s531, %s547
      %p549 = scmp.eq.s32.totalorder %s48, 0
      %p550 = por %p548, %p549
      %p551 = scmp.le.s32.totalorder 1, %s42
      %p552 = scmp.lt.s32.totalorder %s42, 9
      %p553 = pnand %p551, %p552
      %p554 = pneg %p553
      // Predicated region
      $region9: #{tpu_custom_call.1} parent=5 // pred_check
        _
      $region10: #{tpu_custom_call.1} parent=5 // pred_check_branch
        %556 = sbr.rel (%p553) target = $region12
      $region11: #{tpu_custom_call.1} parent=5 // pred_region
        %s557 = ssub.s32 %s42, 1
        // Predicated region
        $region13: #{tpu_custom_call.1} parent=11 // pred_check
          %p558 = pneg %p80
        $region14: #{tpu_custom_call.1} parent=11 // pred_check_branch
          %560 = sbr.rel (%p558) target = $region16
        $region15: #{tpu_custom_call.1} parent=11 // pred_region
          %562 = vsyncadd [#allocation5], 0
          %s563 = smul.addr %s51, 3
          %s564 = smul.addr %s563, 2
          %s565 = scalar_lea.hbm %s0, %s564
          %s567 = sshll.u32 %s565, 4
          %s568 = int_to_ptr.hbm [resolvable:$true] %s567
          %s569 = sshll.u32 [#allocation4], 4
          %s570 = int_to_ptr.vmem [resolvable:$true] %s569
          %572 = dma.hbm_to_vmem [thread:$0]  %s568, 96, %s570, [#allocation5]
        $region16: #{tpu_custom_call.1} parent=11 // pred_fallthru
          _
        // Predicated region
        $region17: #{tpu_custom_call.1} parent=11 // pred_check
          %p573 = pneg %p134
        $region18: #{tpu_custom_call.1} parent=11 // pred_check_branch
          %575 = sbr.rel (%p573) target = $region20
        $region19: #{tpu_custom_call.1} parent=11 // pred_region
          %577 = vsyncadd [#allocation7], 0
          %s578 = smul.addr %s51, 2
          %s579 = scalar_lea.hbm %s2, %s578
          %s581 = sshll.u32 %s579, 4
          %s582 = int_to_ptr.hbm [resolvable:$true] %s581
          %s583 = sshll.u32 [#allocation8], 4
          %s584 = int_to_ptr.vmem [resolvable:$true] %s583
          %586 = dma.hbm_to_vmem [thread:$0]  %s582, 32, %s584, [#allocation7]
        $region20: #{tpu_custom_call.1} parent=11 // pred_fallthru
          _
        // Predicated region
        $region21: #{tpu_custom_call.1} parent=11 // pred_check
          %p587 = pneg %p155
        $region22: #{tpu_custom_call.1} parent=11 // pred_check_branch
          %589 = sbr.rel (%p587) target = $region24
        $region23: #{tpu_custom_call.1} parent=11 // pred_region
          %591 = vsyncadd [#allocation10], 0
          %s592 = sshll.u32 %s3, 4
          %s593 = int_to_ptr.hbm [resolvable:$true] %s592
          %s594 = sshll.u32 [#allocation9], 4
          %s595 = int_to_ptr.vmem [resolvable:$true] %s594
          %600 = dma.hbm_to_vmem [thread:$0]  %s593, 6144, %s595, [#allocation10], 128, 128, 8
        $region24: #{tpu_custom_call.1} parent=11 // pred_fallthru
          _
        // Predicated region
        $region25: #{tpu_custom_call.1} parent=11 // pred_check
          %p601 = pneg %p176
        $region26: #{tpu_custom_call.1} parent=11 // pred_check_branch
          %603 = sbr.rel (%p601) target = $region28
        $region27: #{tpu_custom_call.1} parent=11 // pred_region
          %605 = vsyncadd [#allocation10], 0
          %s607 = sshll.u32 %s4, 4
          %s608 = int_to_ptr.hbm [resolvable:$true] %s607
          %s609 = sshll.u32 [#allocation11], 4
          %s610 = int_to_ptr.vmem [resolvable:$true] %s609
          %612 = dma.hbm_to_vmem [thread:$0]  %s608, 32, %s610, [#allocation10]
        $region28: #{tpu_custom_call.1} parent=11 // pred_fallthru
          _
        // Predicated region
        $region29: #{tpu_custom_call.1} parent=11 // pred_check
          %p613 = pneg %p197
        $region30: #{tpu_custom_call.1} parent=11 // pred_check_branch
          %615 = sbr.rel (%p613) target = $region32
        $region31: #{tpu_custom_call.1} parent=11 // pred_region
          %617 = vsyncadd [#allocation13], 0
          %s618 = sshll.u32 %s5, 4
          %s619 = int_to_ptr.hbm [resolvable:$true] %s618
          %s620 = sshll.u32 [#allocation12], 4
          %s621 = int_to_ptr.vmem [resolvable:$true] %s620
          %626 = dma.hbm_to_vmem [thread:$0]  %s619, 2048, %s621, [#allocation13], 64, 64, 4
        $region32: #{tpu_custom_call.1} parent=11 // pred_fallthru
          _
        // Predicated region
        $region33: #{tpu_custom_call.1} parent=11 // pred_check
          %p627 = pneg %p218
        $region34: #{tpu_custom_call.1} parent=11 // pred_check_branch
          %629 = sbr.rel (%p627) target = $region36
        $region35: #{tpu_custom_call.1} parent=11 // pred_region
          %631 = vsyncadd [#allocation13], 0
          %s633 = sshll.u32 %s6, 4
          %s634 = int_to_ptr.hbm [resolvable:$true] %s633
          %s635 = sshll.u32 [#allocation14], 4
          %s636 = int_to_ptr.vmem [resolvable:$true] %s635
          %638 = dma.hbm_to_vmem [thread:$0]  %s634, 16, %s636, [#allocation13]
        $region36: #{tpu_custom_call.1} parent=11 // pred_fallthru
          _
        // Predicated region
        $region37: #{tpu_custom_call.1} parent=11 // pred_check
          %p639 = pneg %p265
        $region38: #{tpu_custom_call.1} parent=11 // pred_check_branch
          %641 = sbr.rel (%p639) target = $region40
        $region39: #{tpu_custom_call.1} parent=11 // pred_region
          %643 = vsyncadd [#allocation16], 0
          %s645 = sshll.u32 %s8, 4
          %s646 = int_to_ptr.hbm [resolvable:$true] %s645
          %s647 = sshll.u32 [#allocation17], 4
          %s648 = int_to_ptr.vmem [resolvable:$true] %s647
          %650 = dma.hbm_to_vmem [thread:$0]  %s646, 64, %s648, [#allocation16]
        $region40: #{tpu_custom_call.1} parent=11 // pred_fallthru
          _
        // Predicated region
        $region41: #{tpu_custom_call.1} parent=11 // pred_check
          %p651 = pneg %p286
        $region42: #{tpu_custom_call.1} parent=11 // pred_check_branch
          %653 = sbr.rel (%p651) target = $region44
        $region43: #{tpu_custom_call.1} parent=11 // pred_region
          %655 = vsyncadd [#allocation19], 0
          %s656 = sshll.u32 %s9, 4
          %s657 = int_to_ptr.hbm [resolvable:$true] %s656
          %s658 = sshll.u32 [#allocation18], 4
          %s659 = int_to_ptr.vmem [resolvable:$true] %s658
          %664 = dma.hbm_to_vmem [thread:$0]  %s657, 4096, %s659, [#allocation19], 64, 64, 4
        $region44: #{tpu_custom_call.1} parent=11 // pred_fallthru
          _
        // Predicated region
        $region45: #{tpu_custom_call.1} parent=11 // pred_check
          %p665 = pneg %p307
        $region46: #{tpu_custom_call.1} parent=11 // pred_check_branch
          %667 = sbr.rel (%p665) target = $region48
        $region47: #{tpu_custom_call.1} parent=11 // pred_region
          %669 = vsyncadd [#allocation19], 0
          %s671 = sshll.u32 %s10, 4
          %s672 = int_to_ptr.hbm [resolvable:$true] %s671
          %s673 = sshll.u32 [#allocation20], 4
          %s674 = int_to_ptr.vmem [resolvable:$true] %s673
          %676 = dma.hbm_to_vmem [thread:$0]  %s672, 16, %s674, [#allocation19]
        $region48: #{tpu_custom_call.1} parent=11 // pred_fallthru
          _
        // Predicated region
        $region49: #{tpu_custom_call.1} parent=11 // pred_check
          %p677 = pneg %p328
        $region50: #{tpu_custom_call.1} parent=11 // pred_check_branch
          %679 = sbr.rel (%p677) target = $region52
        $region51: #{tpu_custom_call.1} parent=11 // pred_region
          %681 = vsyncadd [#allocation22], 0
          %s682 = sshll.u32 %s11, 4
          %s683 = int_to_ptr.hbm [resolvable:$true] %s682
          %s684 = sshll.u32 [#allocation21], 4
          %s685 = int_to_ptr.vmem [resolvable:$true] %s684
          %690 = dma.hbm_to_vmem [thread:$0]  %s683, 128, %s685, [#allocation22], 64, 64, 4
        $region52: #{tpu_custom_call.1} parent=11 // pred_fallthru
          _
        // Predicated region
        $region53: #{tpu_custom_call.1} parent=11 // pred_check
          %p691 = pneg %p349
        $region54: #{tpu_custom_call.1} parent=11 // pred_check_branch
          %693 = sbr.rel (%p691) target = $region56
        $region55: #{tpu_custom_call.1} parent=11 // pred_region
          %695 = vsyncadd [#allocation22], 0
          %s697 = sshll.u32 %s12, 4
          %s698 = int_to_ptr.hbm [resolvable:$true] %s697
          %s699 = sshll.u32 [#allocation23], 4
          %s700 = int_to_ptr.vmem [resolvable:$true] %s699
          %702 = dma.hbm_to_vmem [thread:$0]  %s698, 16, %s700, [#allocation22]
        $region56: #{tpu_custom_call.1} parent=11 // pred_fallthru
          _
        // Predicated region
        $region57: #{tpu_custom_call.1} parent=11 // pred_check
          %p703 = pneg %p370
        $region58: #{tpu_custom_call.1} parent=11 // pred_check_branch
          %705 = sbr.rel (%p703) target = $region60
        $region59: #{tpu_custom_call.1} parent=11 // pred_region
          _
        $region60: #{tpu_custom_call.1} parent=11 // pred_fallthru
          _
        // Predicated region
        $region61: #{tpu_custom_call.1} parent=11 // pred_check
          %p706 = pneg %p391
        $region62: #{tpu_custom_call.1} parent=11 // pred_check_branch
          %708 = sbr.rel (%p706) target = $region64
        $region63: #{tpu_custom_call.1} parent=11 // pred_region
          %710 = vsyncadd [#allocation25], 0
          %s712 = sshll.u32 %s14, 4
          %s713 = int_to_ptr.hbm [resolvable:$true] %s712
          %s714 = sshll.u32 [#allocation24], 4
          %s715 = int_to_ptr.vmem [resolvable:$true] %s714
          %717 = dma.hbm_to_vmem [thread:$0]  %s713, 16, %s715, [#allocation25]
        $region64: #{tpu_custom_call.1} parent=11 // pred_fallthru
          _
        // Predicated region
        $region65: #{tpu_custom_call.1} parent=11 // pred_check
          %p718 = pneg %p412
        $region66: #{tpu_custom_call.1} parent=11 // pred_check_branch
          %720 = sbr.rel (%p718) target = $region68
        $region67: #{tpu_custom_call.1} parent=11 // pred_region
          _
        $region68: #{tpu_custom_call.1} parent=11 // pred_fallthru
          _
        // Predicated region
        $region69: #{tpu_custom_call.1} parent=11 // pred_check
          %p721 = pneg %p433
        $region70: #{tpu_custom_call.1} parent=11 // pred_check_branch
          %723 = sbr.rel (%p721) target = $region72
        $region71: #{tpu_custom_call.1} parent=11 // pred_region
          _
        $region72: #{tpu_custom_call.1} parent=11 // pred_fallthru
          _
        // Predicated region
        $region73: #{tpu_custom_call.1} parent=11 // pred_check
          %p724 = pneg %p454
        $region74: #{tpu_custom_call.1} parent=11 // pred_check_branch
          %726 = sbr.rel (%p724) target = $region76
        $region75: #{tpu_custom_call.1} parent=11 // pred_region
          %728 = vsyncadd [#allocation25], 0
          %s729 = sshll.u32 %s17, 4
          %s730 = int_to_ptr.hbm [resolvable:$true] %s729
          %s731 = sshll.u32 [#allocation26], 4
          %s732 = int_to_ptr.vmem [resolvable:$true] %s731
          %737 = dma.hbm_to_vmem [thread:$0]  %s730, 256, %s732, [#allocation25], 64, 64, 4
        $region76: #{tpu_custom_call.1} parent=11 // pred_fallthru
          _
        // Predicated region
        $region77: #{tpu_custom_call.1} parent=11 // pred_check
          %p738 = pneg %p475
        $region78: #{tpu_custom_call.1} parent=11 // pred_check_branch
          %740 = sbr.rel (%p738) target = $region80
        $region79: #{tpu_custom_call.1} parent=11 // pred_region
          %742 = vsyncadd [#allocation28], 0
          %s744 = sshll.u32 %s18, 4
          %s745 = int_to_ptr.hbm [resolvable:$true] %s744
          %s746 = sshll.u32 [#allocation27], 4
          %s747 = int_to_ptr.vmem [resolvable:$true] %s746
          %749 = dma.hbm_to_vmem [thread:$0]  %s745, 16, %s747, [#allocation28]
        $region80: #{tpu_custom_call.1} parent=11 // pred_fallthru
          _
        // Predicated region
        $region81: #{tpu_custom_call.1} parent=11 // pred_check
          %p750 = pneg %p496
        $region82: #{tpu_custom_call.1} parent=11 // pred_check_branch
          %752 = sbr.rel (%p750) target = $region84
        $region83: #{tpu_custom_call.1} parent=11 // pred_region
          %754 = vsyncadd [#allocation28], 0
          %s756 = sshll.u32 %s19, 4
          %s757 = int_to_ptr.hbm [resolvable:$true] %s756
          %s758 = sshll.u32 [#allocation29], 4
          %s759 = int_to_ptr.vmem [resolvable:$true] %s758
          %761 = dma.hbm_to_vmem [thread:$0]  %s757, 16, %s759, [#allocation28]
        $region84: #{tpu_custom_call.1} parent=11 // pred_fallthru
          _
        // Predicated region
        $region85: #{tpu_custom_call.1} parent=11 // pred_check
          %p762 = pneg %p517
        $region86: #{tpu_custom_call.1} parent=11 // pred_check_branch
          %764 = sbr.rel (%p762) target = $region88
        $region87: #{tpu_custom_call.1} parent=11 // pred_region
          _
        $region88: #{tpu_custom_call.1} parent=11 // pred_fallthru
          _
      $region12: #{tpu_custom_call.1} parent=5 // pred_fallthru
        _
      %p765 = scmp.lt.s32.totalorder %s42, 8
      // Predicated region
      $region89: #{tpu_custom_call.1} parent=5 // pred_check
        %p766 = pneg %p765
      $region90: #{tpu_custom_call.1} parent=5 // pred_check_branch
        %768 = sbr.rel (%p766) target = $region92
      $region91: #{tpu_custom_call.1} parent=5 // pred_region
        // Predicated region
        $region93: #{tpu_custom_call.1} parent=91 // pred_check
          %p769 = pneg %p102
        $region94: #{tpu_custom_call.1} parent=91 // pred_check_branch
          %771 = sbr.rel (%p769) target = $region96
        $region95: #{tpu_custom_call.1} parent=91 // pred_region
          %s772 = sand.u32 %s42, 1
          %s773 = scalar_lea.sflag [#allocation7], %s772
          %s774 = sand.u32 %s92, 1
          %s775 = smul.addr %s774, 10
          %s776 = scalar_lea.vmem [#allocation6], %s775
          %s777 = smul.u32 5, %s50
          %779 = vsyncadd %s773, 0
          %s780 = smul.addr %s49, 40
          %s781 = sadd.s32 %s777, %s780
          %s782 = smul.addr %s781, 2
          %s783 = scalar_lea.hbm %s1, %s782
          %s785 = sshll.u32 %s783, 4
          %s786 = int_to_ptr.hbm [resolvable:$true] %s785
          %s787 = sshll.u32 %s776, 4
          %s788 = int_to_ptr.vmem [resolvable:$true] %s787
          %790 = dma.hbm_to_vmem [thread:$0]  %s786, 160, %s788, %s773
        $region96: #{tpu_custom_call.1} parent=91 // pred_fallthru
          _
        // Predicated region
        $region97: #{tpu_custom_call.1} parent=91 // pred_check
          %p791 = pneg %p238
        $region98: #{tpu_custom_call.1} parent=91 // pred_check_branch
          %793 = sbr.rel (%p791) target = $region100
        $region99: #{tpu_custom_call.1} parent=91 // pred_region
          %s794 = sand.u32 %s42, 1
          %s795 = scalar_lea.sflag [#allocation16], %s794
          %s796 = sand.u32 %s228, 1
          %s797 = smul.addr %s796, 1280
          %s798 = scalar_lea.vmem [#allocation15], %s797
          %s799 = smul.u32 80, %s50
          %801 = vsyncadd %s795, 0
          %s802 = smul.addr %s799, 4
          %s803 = smul.addr %s802, 4
          %s804 = scalar_lea.hbm %s7, %s803
          %s805 = sshll.u32 %s804, 4
          %s806 = int_to_ptr.hbm [resolvable:$true] %s805
          %s807 = sshll.u32 %s798, 4
          %s808 = int_to_ptr.vmem [resolvable:$true] %s807
          %813 = dma.hbm_to_vmem [thread:$0]  %s806, 20480, %s808, %s795, 256, 256, 16
        $region100: #{tpu_custom_call.1} parent=91 // pred_fallthru
          _
      $region92: #{tpu_custom_call.1} parent=5 // pred_fallthru
        _
      %p814 = scmp.le.s32.totalorder 1, %s42
      %p815 = scmp.lt.s32.totalorder %s42, 9
      %p816 = pnand %p814, %p815
      %p817 = pneg %p816
      // Predicated region
      $region101: #{tpu_custom_call.1} parent=5 // pred_check
        _
      $region102: #{tpu_custom_call.1} parent=5 // pred_check_branch
        %819 = sbr.rel (%p816) target = $region104
      $region103: #{tpu_custom_call.1} parent=5 // pred_region
        %s820 = ssub.s32 %s42, 1
        // Predicated region
        $region105: #{tpu_custom_call.1} parent=103 // pred_check
          %p821 = pneg %p80
        $region106: #{tpu_custom_call.1} parent=103 // pred_check_branch
          %823 = sbr.rel (%p821) target = $region108
        $region107: #{tpu_custom_call.1} parent=103 // pred_region
          %825 = dma.done [#allocation5], 96
        $region108: #{tpu_custom_call.1} parent=103 // pred_fallthru
          _
        %s826 = sand.u32 %s47, 1
        %s827 = scalar_lea.sflag [#allocation7], %s826
        %s828 = sand.u32 %s95, 1
        %s829 = smul.addr %s828, 10
        %s830 = scalar_lea.vmem [#allocation6], %s829
        // Predicated region
        $region109: #{tpu_custom_call.1} parent=103 // pred_check
          %p831 = pneg %p108
        $region110: #{tpu_custom_call.1} parent=103 // pred_check_branch
          %833 = sbr.rel (%p831) target = $region112
        $region111: #{tpu_custom_call.1} parent=103 // pred_region
          %835 = dma.done %s827, 160
        $region112: #{tpu_custom_call.1} parent=103 // pred_fallthru
          _
        // Predicated region
        $region113: #{tpu_custom_call.1} parent=103 // pred_check
          %p836 = pneg %p134
        $region114: #{tpu_custom_call.1} parent=103 // pred_check_branch
          %838 = sbr.rel (%p836) target = $region116
        $region115: #{tpu_custom_call.1} parent=103 // pred_region
          %840 = dma.done [#allocation7], 32
        $region116: #{tpu_custom_call.1} parent=103 // pred_fallthru
          _
        // Predicated region
        $region117: #{tpu_custom_call.1} parent=103 // pred_check
          %p841 = pneg %p155
        $region118: #{tpu_custom_call.1} parent=103 // pred_check_branch
          %843 = sbr.rel (%p841) target = $region120
        $region119: #{tpu_custom_call.1} parent=103 // pred_region
          %845 = dma.done [#allocation10], 6144
        $region120: #{tpu_custom_call.1} parent=103 // pred_fallthru
          _
        // Predicated region
        $region121: #{tpu_custom_call.1} parent=103 // pred_check
          %p846 = pneg %p176
        $region122: #{tpu_custom_call.1} parent=103 // pred_check_branch
          %848 = sbr.rel (%p846) target = $region124
        $region123: #{tpu_custom_call.1} parent=103 // pred_region
          %850 = dma.done [#allocation10], 32
        $region124: #{tpu_custom_call.1} parent=103 // pred_fallthru
          _
        // Predicated region
        $region125: #{tpu_custom_call.1} parent=103 // pred_check
          %p851 = pneg %p197
        $region126: #{tpu_custom_call.1} parent=103 // pred_check_branch
          %853 = sbr.rel (%p851) target = $region128
        $region127: #{tpu_custom_call.1} parent=103 // pred_region
          %855 = dma.done [#allocation13], 2048
        $region128: #{tpu_custom_call.1} parent=103 // pred_fallthru
          _
        // Predicated region
        $region129: #{tpu_custom_call.1} parent=103 // pred_check
          %p856 = pneg %p218
        $region130: #{tpu_custom_call.1} parent=103 // pred_check_branch
          %858 = sbr.rel (%p856) target = $region132
        $region131: #{tpu_custom_call.1} parent=103 // pred_region
          %860 = dma.done [#allocation13], 16
        $region132: #{tpu_custom_call.1} parent=103 // pred_fallthru
          _
        %s861 = sand.u32 %s47, 1
        %s862 = scalar_lea.sflag [#allocation16], %s861
        %s863 = sand.u32 %s231, 1
        %s864 = smul.addr %s863, 1280
        %s865 = scalar_lea.vmem [#allocation15], %s864
        // Predicated region
        $region133: #{tpu_custom_call.1} parent=103 // pred_check
          %p866 = pneg %p244
        $region134: #{tpu_custom_call.1} parent=103 // pred_check_branch
          %868 = sbr.rel (%p866) target = $region136
        $region135: #{tpu_custom_call.1} parent=103 // pred_region
          %870 = dma.done %s862, 20480
        $region136: #{tpu_custom_call.1} parent=103 // pred_fallthru
          _
        // Predicated region
        $region137: #{tpu_custom_call.1} parent=103 // pred_check
          %p871 = pneg %p265
        $region138: #{tpu_custom_call.1} parent=103 // pred_check_branch
          %873 = sbr.rel (%p871) target = $region140
        $region139: #{tpu_custom_call.1} parent=103 // pred_region
          %875 = dma.done [#allocation16], 64
        $region140: #{tpu_custom_call.1} parent=103 // pred_fallthru
          _
        // Predicated region
        $region141: #{tpu_custom_call.1} parent=103 // pred_check
          %p876 = pneg %p286
        $region142: #{tpu_custom_call.1} parent=103 // pred_check_branch
          %878 = sbr.rel (%p876) target = $region144
        $region143: #{tpu_custom_call.1} parent=103 // pred_region
          %880 = dma.done [#allocation19], 4096
        $region144: #{tpu_custom_call.1} parent=103 // pred_fallthru
          _
        // Predicated region
        $region145: #{tpu_custom_call.1} parent=103 // pred_check
          %p881 = pneg %p307
        $region146: #{tpu_custom_call.1} parent=103 // pred_check_branch
          %883 = sbr.rel (%p881) target = $region148
        $region147: #{tpu_custom_call.1} parent=103 // pred_region
          %885 = dma.done [#allocation19], 16
        $region148: #{tpu_custom_call.1} parent=103 // pred_fallthru
          _
        // Predicated region
        $region149: #{tpu_custom_call.1} parent=103 // pred_check
          %p886 = pneg %p328
        $region150: #{tpu_custom_call.1} parent=103 // pred_check_branch
          %888 = sbr.rel (%p886) target = $region152
        $region151: #{tpu_custom_call.1} parent=103 // pred_region
          %890 = dma.done [#allocation22], 128
        $region152: #{tpu_custom_call.1} parent=103 // pred_fallthru
          _
        // Predicated region
        $region153: #{tpu_custom_call.1} parent=103 // pred_check
          %p891 = pneg %p349
        $region154: #{tpu_custom_call.1} parent=103 // pred_check_branch
          %893 = sbr.rel (%p891) target = $region156
        $region155: #{tpu_custom_call.1} parent=103 // pred_region
          %895 = dma.done [#allocation22], 16
        $region156: #{tpu_custom_call.1} parent=103 // pred_fallthru
          _
        // Predicated region
        $region157: #{tpu_custom_call.1} parent=103 // pred_check
          %p896 = pneg %p391
        $region158: #{tpu_custom_call.1} parent=103 // pred_check_branch
          %898 = sbr.rel (%p896) target = $region160
        $region159: #{tpu_custom_call.1} parent=103 // pred_region
          %900 = dma.done [#allocation25], 16
        $region160: #{tpu_custom_call.1} parent=103 // pred_fallthru
          _
        // Predicated region
        $region161: #{tpu_custom_call.1} parent=103 // pred_check
          %p901 = pneg %p454
        $region162: #{tpu_custom_call.1} parent=103 // pred_check_branch
          %903 = sbr.rel (%p901) target = $region164
        $region163: #{tpu_custom_call.1} parent=103 // pred_region
          %905 = dma.done [#allocation25], 256
        $region164: #{tpu_custom_call.1} parent=103 // pred_fallthru
          _
        // Predicated region
        $region165: #{tpu_custom_call.1} parent=103 // pred_check
          %p906 = pneg %p475
        $region166: #{tpu_custom_call.1} parent=103 // pred_check_branch
          %908 = sbr.rel (%p906) target = $region168
        $region167: #{tpu_custom_call.1} parent=103 // pred_region
          %910 = dma.done [#allocation28], 16
        $region168: #{tpu_custom_call.1} parent=103 // pred_fallthru
          _
        // Predicated region
        $region169: #{tpu_custom_call.1} parent=103 // pred_check
          %p911 = pneg %p496
        $region170: #{tpu_custom_call.1} parent=103 // pred_check_branch
          %913 = sbr.rel (%p911) target = $region172
        $region171: #{tpu_custom_call.1} parent=103 // pred_region
          %915 = dma.done [#allocation28], 16
        $region172: #{tpu_custom_call.1} parent=103 // pred_fallthru
          _
        %p916 = pneg %p80
        %p917 = pneg %p77
        %s918 = sand.u32 %s47, 1
        %s919 = scalar_lea.sflag [#allocation7], %s918
        %s920 = sand.u32 %s95, 1
        %s921 = smul.addr %s920, 10
        %s922 = scalar_lea.vmem [#allocation6], %s921
        %p923 = pneg %p108
        %p924 = pneg %p105
        %p925 = pneg %p134
        %p926 = pneg %p131
        %p927 = pneg %p155
        %p928 = pneg %p152
        %p929 = pneg %p176
        %p930 = pneg %p173
        %p931 = pneg %p197
        %p932 = pneg %p194
        %p933 = pneg %p218
        %p934 = pneg %p215
        %s935 = sand.u32 %s47, 1
        %s936 = scalar_lea.sflag [#allocation16], %s935
        %s937 = sand.u32 %s231, 1
        %s938 = smul.addr %s937, 1280
        %s939 = scalar_lea.vmem [#allocation15], %s938
        %p940 = pneg %p244
        %p941 = pneg %p241
        %p942 = pneg %p265
        %p943 = pneg %p262
        %p944 = pneg %p286
        %p945 = pneg %p283
        %p946 = pneg %p307
        %p947 = pneg %p304
        %p948 = pneg %p328
        %p949 = pneg %p325
        %p950 = pneg %p349
        %p951 = pneg %p346
        %p952 = pneg %p370
        %p953 = pneg %p367
        %p954 = pneg %p391
        %p955 = pneg %p388
        %p956 = pneg %p412
        %p957 = pneg %p409
        %p958 = pneg %p433
        %p959 = pneg %p430
        %p960 = pneg %p454
        %p961 = pneg %p451
        %p962 = pneg %p475
        %p963 = pneg %p472
        %p964 = pneg %p496
        %p965 = pneg %p493
        %p966 = pneg %p517
        %p967 = pneg %p514
        %p968 = pneg %p543
        %p969 = pneg %p540
        %p970 = scmp.lt.s32.totalorder %s51, 0
        %s971 = scalar_select %p970, %s51, 0
        %s972 = smul.addr %s971, 4
        %s973 = scalar_lea.vmem %s21, %s972
        %s974 = smul.u32 5, %s52
        %s975 = smul.u32 80, %s52
        %p976 = scmp.lt.s32.totalorder %s51, 0
        %s977 = scalar_select %p976, %s51, 0
        %s978 = smul.addr %s977, 4
        %s979 = scalar_lea.vmem %s21, %s978
        %p981 = scmp.eq.s32.totalorder %s52, 0
        // Predicated region
        $region173: #{tpu_custom_call.1} parent=103 // pred_check
          %p982 = pneg %p981
        $region174: #{tpu_custom_call.1} parent=103 // pred_check_branch
          %984 = sbr.rel (%p982) target = $region176
        $region175: #{tpu_custom_call.1} parent=103 // pred_region
          %985 = vst [vmem:[#allocation2] sm:$0xff] 0.0
          %986 = vst [vmem:[#allocation2 + $0x8] sm:$0xff] 0.0
        $region176: #{tpu_custom_call.1} parent=103 // pred_fallthru
          _
        %v987 = vld [vmem:[#allocation2] sm:$0xff]
        %v988 = vld [vmem:[#allocation2 + $0x8] sm:$0xff]
        %v989 = vld [vmem:[%s830] sm:$0xff]
        %v990 = vld [vmem:[%s830 + $0x8] sm:$0x3]
        %v991 = vld [vmem:[%s865] sm:$0xff]
        %v992 = vld [vmem:[%s865 + $0x8] sm:$0xff]
        %v993 = vld [vmem:[%s865 + $0x10] sm:$0xff]
        %v994 = vld [vmem:[%s865 + $0x18] sm:$0xff]
        %v995 = vld [vmem:[%s865 + $0x20] sm:$0xff]
        %v996 = vld [vmem:[%s865 + $0x28] sm:$0xff]
        %v997 = vld [vmem:[%s865 + $0x30] sm:$0xff]
        %v998 = vld [vmem:[%s865 + $0x38] sm:$0xff]
        %v999 = vld [vmem:[%s865 + $0x40] sm:$0xff]
        %v1000 = vld [vmem:[%s865 + $0x48] sm:$0xff]
        %v1001 = vld [vmem:[%s865 + $0x50] sm:$0xff]
        %v1002 = vld [vmem:[%s865 + $0x58] sm:$0xff]
        %v1003 = vld [vmem:[%s865 + $0x60] sm:$0xff]
        %v1004 = vld [vmem:[%s865 + $0x68] sm:$0xff]
        %v1005 = vld [vmem:[%s865 + $0x70] sm:$0xff]
        %v1006 = vld [vmem:[%s865 + $0x78] sm:$0xff]
        %v1007 = vld [vmem:[%s865 + $0x80] sm:$0xff]
        %v1008 = vld [vmem:[%s865 + $0x88] sm:$0xff]
        %v1009 = vld [vmem:[%s865 + $0x90] sm:$0xff]
        %v1010 = vld [vmem:[%s865 + $0x98] sm:$0xff]
        %v1011 = vld [vmem:[%s865 + $0xa0] sm:$0xff]
        %v1012 = vld [vmem:[%s865 + $0xa8] sm:$0xff]
        %v1013 = vld [vmem:[%s865 + $0xb0] sm:$0xff]
        %v1014 = vld [vmem:[%s865 + $0xb8] sm:$0xff]
        %v1015 = vld [vmem:[%s865 + $0xc0] sm:$0xff]
        %v1016 = vld [vmem:[%s865 + $0xc8] sm:$0xff]
        %v1017 = vld [vmem:[%s865 + $0xd0] sm:$0xff]
        %v1018 = vld [vmem:[%s865 + $0xd8] sm:$0xff]
        %v1019 = vld [vmem:[%s865 + $0xe0] sm:$0xff]
        %v1020 = vld [vmem:[%s865 + $0xe8] sm:$0xff]
        %v1021 = vld [vmem:[%s865 + $0xf0] sm:$0xff]
        %v1022 = vld [vmem:[%s865 + $0xf8] sm:$0xff]
        %v1023 = vld [vmem:[%s865 + $0x100] sm:$0xff]
        %v1024 = vld [vmem:[%s865 + $0x108] sm:$0xff]
        %v1025 = vld [vmem:[%s865 + $0x110] sm:$0xff]
        %v1026 = vld [vmem:[%s865 + $0x118] sm:$0xff]
        %v1027 = vld [vmem:[%s865 + $0x120] sm:$0xff]
        %v1028 = vld [vmem:[%s865 + $0x128] sm:$0xff]
        %v1029 = vld [vmem:[%s865 + $0x130] sm:$0xff]
        %v1030 = vld [vmem:[%s865 + $0x138] sm:$0xff]
        %v1031 = vld [vmem:[%s865 + $0x140] sm:$0xff]
        %v1032 = vld [vmem:[%s865 + $0x148] sm:$0xff]
        %v1033 = vld [vmem:[%s865 + $0x150] sm:$0xff]
        %v1034 = vld [vmem:[%s865 + $0x158] sm:$0xff]
        %v1035 = vld [vmem:[%s865 + $0x160] sm:$0xff]
        %v1036 = vld [vmem:[%s865 + $0x168] sm:$0xff]
        %v1037 = vld [vmem:[%s865 + $0x170] sm:$0xff]
        %v1038 = vld [vmem:[%s865 + $0x178] sm:$0xff]
        %v1039 = vld [vmem:[%s865 + $0x180] sm:$0xff]
        %v1040 = vld [vmem:[%s865 + $0x188] sm:$0xff]
        %v1041 = vld [vmem:[%s865 + $0x190] sm:$0xff]
        %v1042 = vld [vmem:[%s865 + $0x198] sm:$0xff]
        %v1043 = vld [vmem:[%s865 + $0x1a0] sm:$0xff]
        %v1044 = vld [vmem:[%s865 + $0x1a8] sm:$0xff]
        %v1045 = vld [vmem:[%s865 + $0x1b0] sm:$0xff]
        %v1046 = vld [vmem:[%s865 + $0x1b8] sm:$0xff]
        %v1047 = vld [vmem:[%s865 + $0x1c0] sm:$0xff]
        %v1048 = vld [vmem:[%s865 + $0x1c8] sm:$0xff]
        %v1049 = vld [vmem:[%s865 + $0x1d0] sm:$0xff]
        %v1050 = vld [vmem:[%s865 + $0x1d8] sm:$0xff]
        %v1051 = vld [vmem:[%s865 + $0x1e0] sm:$0xff]
        %v1052 = vld [vmem:[%s865 + $0x1e8] sm:$0xff]
        %v1053 = vld [vmem:[%s865 + $0x1f0] sm:$0xff]
        %v1054 = vld [vmem:[%s865 + $0x1f8] sm:$0xff]
        %v1055 = vld [vmem:[%s865 + $0x200] sm:$0xff]
        %v1056 = vld [vmem:[%s865 + $0x208] sm:$0xff]
        %v1057 = vld [vmem:[%s865 + $0x210] sm:$0xff]
        %v1058 = vld [vmem:[%s865 + $0x218] sm:$0xff]
        %v1059 = vld [vmem:[%s865 + $0x220] sm:$0xff]
        %v1060 = vld [vmem:[%s865 + $0x228] sm:$0xff]
        %v1061 = vld [vmem:[%s865 + $0x230] sm:$0xff]
        %v1062 = vld [vmem:[%s865 + $0x238] sm:$0xff]
        %v1063 = vld [vmem:[%s865 + $0x240] sm:$0xff]
        %v1064 = vld [vmem:[%s865 + $0x248] sm:$0xff]
        %v1065 = vld [vmem:[%s865 + $0x250] sm:$0xff]
        %v1066 = vld [vmem:[%s865 + $0x258] sm:$0xff]
        %v1067 = vld [vmem:[%s865 + $0x260] sm:$0xff]
        %v1068 = vld [vmem:[%s865 + $0x268] sm:$0xff]
        %v1069 = vld [vmem:[%s865 + $0x270] sm:$0xff]
        %v1070 = vld [vmem:[%s865 + $0x278] sm:$0xff]
        %v1071 = vld [vmem:[%s865 + $0x280] sm:$0xff]
        %v1072 = vld [vmem:[%s865 + $0x288] sm:$0xff]
        %v1073 = vld [vmem:[%s865 + $0x290] sm:$0xff]
        %v1074 = vld [vmem:[%s865 + $0x298] sm:$0xff]
        %v1075 = vld [vmem:[%s865 + $0x2a0] sm:$0xff]
        %v1076 = vld [vmem:[%s865 + $0x2a8] sm:$0xff]
        %v1077 = vld [vmem:[%s865 + $0x2b0] sm:$0xff]
        %v1078 = vld [vmem:[%s865 + $0x2b8] sm:$0xff]
        %v1079 = vld [vmem:[%s865 + $0x2c0] sm:$0xff]
        %v1080 = vld [vmem:[%s865 + $0x2c8] sm:$0xff]
        %v1081 = vld [vmem:[%s865 + $0x2d0] sm:$0xff]
        %v1082 = vld [vmem:[%s865 + $0x2d8] sm:$0xff]
        %v1083 = vld [vmem:[%s865 + $0x2e0] sm:$0xff]
        %v1084 = vld [vmem:[%s865 + $0x2e8] sm:$0xff]
        %v1085 = vld [vmem:[%s865 + $0x2f0] sm:$0xff]
        %v1086 = vld [vmem:[%s865 + $0x2f8] sm:$0xff]
        %v1087 = vld [vmem:[%s865 + $0x300] sm:$0xff]
        %v1088 = vld [vmem:[%s865 + $0x308] sm:$0xff]
        %v1089 = vld [vmem:[%s865 + $0x310] sm:$0xff]
        %v1090 = vld [vmem:[%s865 + $0x318] sm:$0xff]
        %v1091 = vld [vmem:[%s865 + $0x320] sm:$0xff]
        %v1092 = vld [vmem:[%s865 + $0x328] sm:$0xff]
        %v1093 = vld [vmem:[%s865 + $0x330] sm:$0xff]
        %v1094 = vld [vmem:[%s865 + $0x338] sm:$0xff]
        %v1095 = vld [vmem:[%s865 + $0x340] sm:$0xff]
        %v1096 = vld [vmem:[%s865 + $0x348] sm:$0xff]
        %v1097 = vld [vmem:[%s865 + $0x350] sm:$0xff]
        %v1098 = vld [vmem:[%s865 + $0x358] sm:$0xff]
        %v1099 = vld [vmem:[%s865 + $0x360] sm:$0xff]
        %v1100 = vld [vmem:[%s865 + $0x368] sm:$0xff]
        %v1101 = vld [vmem:[%s865 + $0x370] sm:$0xff]
        %v1102 = vld [vmem:[%s865 + $0x378] sm:$0xff]
        %v1103 = vld [vmem:[%s865 + $0x380] sm:$0xff]
        %v1104 = vld [vmem:[%s865 + $0x388] sm:$0xff]
        %v1105 = vld [vmem:[%s865 + $0x390] sm:$0xff]
        %v1106 = vld [vmem:[%s865 + $0x398] sm:$0xff]
        %v1107 = vld [vmem:[%s865 + $0x3a0] sm:$0xff]
        %v1108 = vld [vmem:[%s865 + $0x3a8] sm:$0xff]
        %v1109 = vld [vmem:[%s865 + $0x3b0] sm:$0xff]
        %v1110 = vld [vmem:[%s865 + $0x3b8] sm:$0xff]
        %v1111 = vld [vmem:[%s865 + $0x3c0] sm:$0xff]
        %v1112 = vld [vmem:[%s865 + $0x3c8] sm:$0xff]
        %v1113 = vld [vmem:[%s865 + $0x3d0] sm:$0xff]
        %v1114 = vld [vmem:[%s865 + $0x3d8] sm:$0xff]
        %v1115 = vld [vmem:[%s865 + $0x3e0] sm:$0xff]
        %v1116 = vld [vmem:[%s865 + $0x3e8] sm:$0xff]
        %v1117 = vld [vmem:[%s865 + $0x3f0] sm:$0xff]
        %v1118 = vld [vmem:[%s865 + $0x3f8] sm:$0xff]
        %v1119 = vld [vmem:[%s865 + $0x400] sm:$0xff]
        %v1120 = vld [vmem:[%s865 + $0x408] sm:$0xff]
        %v1121 = vld [vmem:[%s865 + $0x410] sm:$0xff]
        %v1122 = vld [vmem:[%s865 + $0x418] sm:$0xff]
        %v1123 = vld [vmem:[%s865 + $0x420] sm:$0xff]
        %v1124 = vld [vmem:[%s865 + $0x428] sm:$0xff]
        %v1125 = vld [vmem:[%s865 + $0x430] sm:$0xff]
        %v1126 = vld [vmem:[%s865 + $0x438] sm:$0xff]
        %v1127 = vld [vmem:[%s865 + $0x440] sm:$0xff]
        %v1128 = vld [vmem:[%s865 + $0x448] sm:$0xff]
        %v1129 = vld [vmem:[%s865 + $0x450] sm:$0xff]
        %v1130 = vld [vmem:[%s865 + $0x458] sm:$0xff]
        %v1131 = vld [vmem:[%s865 + $0x460] sm:$0xff]
        %v1132 = vld [vmem:[%s865 + $0x468] sm:$0xff]
        %v1133 = vld [vmem:[%s865 + $0x470] sm:$0xff]
        %v1134 = vld [vmem:[%s865 + $0x478] sm:$0xff]
        %v1135 = vld [vmem:[%s865 + $0x480] sm:$0xff]
        %v1136 = vld [vmem:[%s865 + $0x488] sm:$0xff]
        %v1137 = vld [vmem:[%s865 + $0x490] sm:$0xff]
        %v1138 = vld [vmem:[%s865 + $0x498] sm:$0xff]
        %v1139 = vld [vmem:[%s865 + $0x4a0] sm:$0xff]
        %v1140 = vld [vmem:[%s865 + $0x4a8] sm:$0xff]
        %v1141 = vld [vmem:[%s865 + $0x4b0] sm:$0xff]
        %v1142 = vld [vmem:[%s865 + $0x4b8] sm:$0xff]
        %v1143 = vld [vmem:[%s865 + $0x4c0] sm:$0xff]
        %v1144 = vld [vmem:[%s865 + $0x4c8] sm:$0xff]
        %v1145 = vld [vmem:[%s865 + $0x4d0] sm:$0xff]
        %v1146 = vld [vmem:[%s865 + $0x4d8] sm:$0xff]
        %v1147 = vld [vmem:[%s865 + $0x4e0] sm:$0xff]
        %v1148 = vld [vmem:[%s865 + $0x4e8] sm:$0xff]
        %v1149 = vld [vmem:[%s865 + $0x4f0] sm:$0xff]
        %v1150 = vld [vmem:[%s865 + $0x4f8] sm:$0xff]
        %1152 = vst [vmem:[#allocation1] ss:$4 sm:$0xff] %v989
        %s1154 = scalar_lea.vmem [#allocation1], 32
        %1155 = vst [vmem:[%s1154] ss:$4 sm:$0xff] %v990
        %v1156 = vld.sshfl [vmem:[#allocation1] sm:$0xff pattern:$0x73625140]
        %v1157 = vld.sshfl [vmem:[#allocation1 + $0x8] sm:$0xff pattern:$0x73625140]
        %v1158 = vld.sshfl [vmem:[#allocation1 + $0x10] sm:$0xff pattern:$0x73625140]
        %v1159 = vld.sshfl [vmem:[#allocation1 + $0x18] sm:$0xff pattern:$0x73625140]
        %v1160 = vld.sshfl [vmem:[#allocation1 + $0x20] sm:$0xff pattern:$0x73625140]
        %v1326 = vunpack.c.l.b16 %v991
        %v1327 = vunpack.c.h.b16 %v991
        %v1328 = vunpack.c.l.b16 %v992
        %v1329 = vunpack.c.h.b16 %v992
        %v1330 = vunpack.c.l.b16 %v993
        %v1331 = vunpack.c.h.b16 %v993
        %v1332 = vunpack.c.l.b16 %v994
        %v1333 = vunpack.c.h.b16 %v994
        %v1334 = vunpack.c.l.b16 %v995
        %v1335 = vunpack.c.h.b16 %v995
        %v1336 = vunpack.c.l.b16 %v996
        %v1337 = vunpack.c.h.b16 %v996
        %v1338 = vunpack.c.l.b16 %v997
        %v1339 = vunpack.c.h.b16 %v997
        %v1340 = vunpack.c.l.b16 %v998
        %v1341 = vunpack.c.h.b16 %v998
        %v1342 = vunpack.c.l.b16 %v999
        %v1343 = vunpack.c.h.b16 %v999
        %v1344 = vunpack.c.l.b16 %v1000
        %v1345 = vunpack.c.h.b16 %v1000
        %v1346 = vunpack.c.l.b16 %v1001
        %v1347 = vunpack.c.h.b16 %v1001
        %v1348 = vunpack.c.l.b16 %v1002
        %v1349 = vunpack.c.h.b16 %v1002
        %v1350 = vunpack.c.l.b16 %v1003
        %v1351 = vunpack.c.h.b16 %v1003
        %v1352 = vunpack.c.l.b16 %v1004
        %v1353 = vunpack.c.h.b16 %v1004
        %v1354 = vunpack.c.l.b16 %v1005
        %v1355 = vunpack.c.h.b16 %v1005
        %v1356 = vunpack.c.l.b16 %v1006
        %v1357 = vunpack.c.h.b16 %v1006
        %v1358 = vunpack.c.l.b16 %v1007
        %v1359 = vunpack.c.h.b16 %v1007
        %v1360 = vunpack.c.l.b16 %v1008
        %v1361 = vunpack.c.h.b16 %v1008
        %v1362 = vunpack.c.l.b16 %v1009
        %v1363 = vunpack.c.h.b16 %v1009
        %v1364 = vunpack.c.l.b16 %v1010
        %v1365 = vunpack.c.h.b16 %v1010
        %v1366 = vunpack.c.l.b16 %v1011
        %v1367 = vunpack.c.h.b16 %v1011
        %v1368 = vunpack.c.l.b16 %v1012
        %v1369 = vunpack.c.h.b16 %v1012
        %v1370 = vunpack.c.l.b16 %v1013
        %v1371 = vunpack.c.h.b16 %v1013
        %v1372 = vunpack.c.l.b16 %v1014
        %v1373 = vunpack.c.h.b16 %v1014
        %v1374 = vunpack.c.l.b16 %v1015
        %v1375 = vunpack.c.h.b16 %v1015
        %v1376 = vunpack.c.l.b16 %v1016
        %v1377 = vunpack.c.h.b16 %v1016
        %v1378 = vunpack.c.l.b16 %v1017
        %v1379 = vunpack.c.h.b16 %v1017
        %v1380 = vunpack.c.l.b16 %v1018
        %v1381 = vunpack.c.h.b16 %v1018
        %v1382 = vunpack.c.l.b16 %v1019
        %v1383 = vunpack.c.h.b16 %v1019
        %v1384 = vunpack.c.l.b16 %v1020
        %v1385 = vunpack.c.h.b16 %v1020
        %v1386 = vunpack.c.l.b16 %v1021
        %v1387 = vunpack.c.h.b16 %v1021
        %v1388 = vunpack.c.l.b16 %v1022
        %v1389 = vunpack.c.h.b16 %v1022
        %v1390 = vunpack.c.l.b16 %v1023
        %v1391 = vunpack.c.h.b16 %v1023
        %v1392 = vunpack.c.l.b16 %v1024
        %v1393 = vunpack.c.h.b16 %v1024
        %v1394 = vunpack.c.l.b16 %v1025
        %v1395 = vunpack.c.h.b16 %v1025
        %v1396 = vunpack.c.l.b16 %v1026
        %v1397 = vunpack.c.h.b16 %v1026
        %v1398 = vunpack.c.l.b16 %v1027
        %v1399 = vunpack.c.h.b16 %v1027
        %v1400 = vunpack.c.l.b16 %v1028
        %v1401 = vunpack.c.h.b16 %v1028
        %v1402 = vunpack.c.l.b16 %v1029
        %v1403 = vunpack.c.h.b16 %v1029
        %v1404 = vunpack.c.l.b16 %v1030
        %v1405 = vunpack.c.h.b16 %v1030
        %v1406 = vunpack.c.l.b16 %v1031
        %v1407 = vunpack.c.h.b16 %v1031
        %v1408 = vunpack.c.l.b16 %v1032
        %v1409 = vunpack.c.h.b16 %v1032
        %v1410 = vunpack.c.l.b16 %v1033
        %v1411 = vunpack.c.h.b16 %v1033
        %v1412 = vunpack.c.l.b16 %v1034
        %v1413 = vunpack.c.h.b16 %v1034
        %v1414 = vunpack.c.l.b16 %v1035
        %v1415 = vunpack.c.h.b16 %v1035
        %v1416 = vunpack.c.l.b16 %v1036
        %v1417 = vunpack.c.h.b16 %v1036
        %v1418 = vunpack.c.l.b16 %v1037
        %v1419 = vunpack.c.h.b16 %v1037
        %v1420 = vunpack.c.l.b16 %v1038
        %v1421 = vunpack.c.h.b16 %v1038
        %v1422 = vunpack.c.l.b16 %v1039
        %v1423 = vunpack.c.h.b16 %v1039
        %v1424 = vunpack.c.l.b16 %v1040
        %v1425 = vunpack.c.h.b16 %v1040
        %v1426 = vunpack.c.l.b16 %v1041
        %v1427 = vunpack.c.h.b16 %v1041
        %v1428 = vunpack.c.l.b16 %v1042
        %v1429 = vunpack.c.h.b16 %v1042
        %v1430 = vunpack.c.l.b16 %v1043
        %v1431 = vunpack.c.h.b16 %v1043
        %v1432 = vunpack.c.l.b16 %v1044
        %v1433 = vunpack.c.h.b16 %v1044
        %v1434 = vunpack.c.l.b16 %v1045
        %v1435 = vunpack.c.h.b16 %v1045
        %v1436 = vunpack.c.l.b16 %v1046
        %v1437 = vunpack.c.h.b16 %v1046
        %v1438 = vunpack.c.l.b16 %v1047
        %v1439 = vunpack.c.h.b16 %v1047
        %v1440 = vunpack.c.l.b16 %v1048
        %v1441 = vunpack.c.h.b16 %v1048
        %v1442 = vunpack.c.l.b16 %v1049
        %v1443 = vunpack.c.h.b16 %v1049
        %v1444 = vunpack.c.l.b16 %v1050
        %v1445 = vunpack.c.h.b16 %v1050
        %v1446 = vunpack.c.l.b16 %v1051
        %v1447 = vunpack.c.h.b16 %v1051
        %v1448 = vunpack.c.l.b16 %v1052
        %v1449 = vunpack.c.h.b16 %v1052
        %v1450 = vunpack.c.l.b16 %v1053
        %v1451 = vunpack.c.h.b16 %v1053
        %v1452 = vunpack.c.l.b16 %v1054
        %v1453 = vunpack.c.h.b16 %v1054
        %v1454 = vunpack.c.l.b16 %v1055
        %v1455 = vunpack.c.h.b16 %v1055
        %v1456 = vunpack.c.l.b16 %v1056
        %v1457 = vunpack.c.h.b16 %v1056
        %v1458 = vunpack.c.l.b16 %v1057
        %v1459 = vunpack.c.h.b16 %v1057
        %v1460 = vunpack.c.l.b16 %v1058
        %v1461 = vunpack.c.h.b16 %v1058
        %v1462 = vunpack.c.l.b16 %v1059
        %v1463 = vunpack.c.h.b16 %v1059
        %v1464 = vunpack.c.l.b16 %v1060
        %v1465 = vunpack.c.h.b16 %v1060
        %v1466 = vunpack.c.l.b16 %v1061
        %v1467 = vunpack.c.h.b16 %v1061
        %v1468 = vunpack.c.l.b16 %v1062
        %v1469 = vunpack.c.h.b16 %v1062
        %v1470 = vunpack.c.l.b16 %v1063
        %v1471 = vunpack.c.h.b16 %v1063
        %v1472 = vunpack.c.l.b16 %v1064
        %v1473 = vunpack.c.h.b16 %v1064
        %v1474 = vunpack.c.l.b16 %v1065
        %v1475 = vunpack.c.h.b16 %v1065
        %v1476 = vunpack.c.l.b16 %v1066
        %v1477 = vunpack.c.h.b16 %v1066
        %v1478 = vunpack.c.l.b16 %v1067
        %v1479 = vunpack.c.h.b16 %v1067
        %v1480 = vunpack.c.l.b16 %v1068
        %v1481 = vunpack.c.h.b16 %v1068
        %v1482 = vunpack.c.l.b16 %v1069
        %v1483 = vunpack.c.h.b16 %v1069
        %v1484 = vunpack.c.l.b16 %v1070
        %v1485 = vunpack.c.h.b16 %v1070
        %v1486 = vunpack.c.l.b16 %v1071
        %v1487 = vunpack.c.h.b16 %v1071
        %v1488 = vunpack.c.l.b16 %v1072
        %v1489 = vunpack.c.h.b16 %v1072
        %v1490 = vunpack.c.l.b16 %v1073
        %v1491 = vunpack.c.h.b16 %v1073
        %v1492 = vunpack.c.l.b16 %v1074
        %v1493 = vunpack.c.h.b16 %v1074
        %v1494 = vunpack.c.l.b16 %v1075
        %v1495 = vunpack.c.h.b16 %v1075
        %v1496 = vunpack.c.l.b16 %v1076
        %v1497 = vunpack.c.h.b16 %v1076
        %v1498 = vunpack.c.l.b16 %v1077
        %v1499 = vunpack.c.h.b16 %v1077
        %v1500 = vunpack.c.l.b16 %v1078
        %v1501 = vunpack.c.h.b16 %v1078
        %v1502 = vunpack.c.l.b16 %v1079
        %v1503 = vunpack.c.h.b16 %v1079
        %v1504 = vunpack.c.l.b16 %v1080
        %v1505 = vunpack.c.h.b16 %v1080
        %v1506 = vunpack.c.l.b16 %v1081
        %v1507 = vunpack.c.h.b16 %v1081
        %v1508 = vunpack.c.l.b16 %v1082
        %v1509 = vunpack.c.h.b16 %v1082
        %v1510 = vunpack.c.l.b16 %v1083
        %v1511 = vunpack.c.h.b16 %v1083
        %v1512 = vunpack.c.l.b16 %v1084
        %v1513 = vunpack.c.h.b16 %v1084
        %v1514 = vunpack.c.l.b16 %v1085
        %v1515 = vunpack.c.h.b16 %v1085
        %v1516 = vunpack.c.l.b16 %v1086
        %v1517 = vunpack.c.h.b16 %v1086
        %v1518 = vunpack.c.l.b16 %v1087
        %v1519 = vunpack.c.h.b16 %v1087
        %v1520 = vunpack.c.l.b16 %v1088
        %v1521 = vunpack.c.h.b16 %v1088
        %v1522 = vunpack.c.l.b16 %v1089
        %v1523 = vunpack.c.h.b16 %v1089
        %v1524 = vunpack.c.l.b16 %v1090
        %v1525 = vunpack.c.h.b16 %v1090
        %v1526 = vunpack.c.l.b16 %v1091
        %v1527 = vunpack.c.h.b16 %v1091
        %v1528 = vunpack.c.l.b16 %v1092
        %v1529 = vunpack.c.h.b16 %v1092
        %v1530 = vunpack.c.l.b16 %v1093
        %v1531 = vunpack.c.h.b16 %v1093
        %v1532 = vunpack.c.l.b16 %v1094
        %v1533 = vunpack.c.h.b16 %v1094
        %v1534 = vunpack.c.l.b16 %v1095
        %v1535 = vunpack.c.h.b16 %v1095
        %v1536 = vunpack.c.l.b16 %v1096
        %v1537 = vunpack.c.h.b16 %v1096
        %v1538 = vunpack.c.l.b16 %v1097
        %v1539 = vunpack.c.h.b16 %v1097
        %v1540 = vunpack.c.l.b16 %v1098
        %v1541 = vunpack.c.h.b16 %v1098
        %v1542 = vunpack.c.l.b16 %v1099
        %v1543 = vunpack.c.h.b16 %v1099
        %v1544 = vunpack.c.l.b16 %v1100
        %v1545 = vunpack.c.h.b16 %v1100
        %v1546 = vunpack.c.l.b16 %v1101
        %v1547 = vunpack.c.h.b16 %v1101
        %v1548 = vunpack.c.l.b16 %v1102
        %v1549 = vunpack.c.h.b16 %v1102
        %v1550 = vunpack.c.l.b16 %v1103
        %v1551 = vunpack.c.h.b16 %v1103
        %v1552 = vunpack.c.l.b16 %v1104
        %v1553 = vunpack.c.h.b16 %v1104
        %v1554 = vunpack.c.l.b16 %v1105
        %v1555 = vunpack.c.h.b16 %v1105
        %v1556 = vunpack.c.l.b16 %v1106
        %v1557 = vunpack.c.h.b16 %v1106
        %v1558 = vunpack.c.l.b16 %v1107
        %v1559 = vunpack.c.h.b16 %v1107
        %v1560 = vunpack.c.l.b16 %v1108
        %v1561 = vunpack.c.h.b16 %v1108
        %v1562 = vunpack.c.l.b16 %v1109
        %v1563 = vunpack.c.h.b16 %v1109
        %v1564 = vunpack.c.l.b16 %v1110
        %v1565 = vunpack.c.h.b16 %v1110
        %v1566 = vunpack.c.l.b16 %v1111
        %v1567 = vunpack.c.h.b16 %v1111
        %v1568 = vunpack.c.l.b16 %v1112
        %v1569 = vunpack.c.h.b16 %v1112
        %v1570 = vunpack.c.l.b16 %v1113
        %v1571 = vunpack.c.h.b16 %v1113
        %v1572 = vunpack.c.l.b16 %v1114
        %v1573 = vunpack.c.h.b16 %v1114
        %v1574 = vunpack.c.l.b16 %v1115
        %v1575 = vunpack.c.h.b16 %v1115
        %v1576 = vunpack.c.l.b16 %v1116
        %v1577 = vunpack.c.h.b16 %v1116
        %v1578 = vunpack.c.l.b16 %v1117
        %v1579 = vunpack.c.h.b16 %v1117
        %v1580 = vunpack.c.l.b16 %v1118
        %v1581 = vunpack.c.h.b16 %v1118
        %v1582 = vunpack.c.l.b16 %v1119
        %v1583 = vunpack.c.h.b16 %v1119
        %v1584 = vunpack.c.l.b16 %v1120
        %v1585 = vunpack.c.h.b16 %v1120
        %v1586 = vunpack.c.l.b16 %v1121
        %v1587 = vunpack.c.h.b16 %v1121
        %v1588 = vunpack.c.l.b16 %v1122
        %v1589 = vunpack.c.h.b16 %v1122
        %v1590 = vunpack.c.l.b16 %v1123
        %v1591 = vunpack.c.h.b16 %v1123
        %v1592 = vunpack.c.l.b16 %v1124
        %v1593 = vunpack.c.h.b16 %v1124
        %v1594 = vunpack.c.l.b16 %v1125
        %v1595 = vunpack.c.h.b16 %v1125
        %v1596 = vunpack.c.l.b16 %v1126
        %v1597 = vunpack.c.h.b16 %v1126
        %v1598 = vunpack.c.l.b16 %v1127
        %v1599 = vunpack.c.h.b16 %v1127
        %v1600 = vunpack.c.l.b16 %v1128
        %v1601 = vunpack.c.h.b16 %v1128
        %v1602 = vunpack.c.l.b16 %v1129
        %v1603 = vunpack.c.h.b16 %v1129
        %v1604 = vunpack.c.l.b16 %v1130
        %v1605 = vunpack.c.h.b16 %v1130
        %v1606 = vunpack.c.l.b16 %v1131
        %v1607 = vunpack.c.h.b16 %v1131
        %v1608 = vunpack.c.l.b16 %v1132
        %v1609 = vunpack.c.h.b16 %v1132
        %v1610 = vunpack.c.l.b16 %v1133
        %v1611 = vunpack.c.h.b16 %v1133
        %v1612 = vunpack.c.l.b16 %v1134
        %v1613 = vunpack.c.h.b16 %v1134
        %v1614 = vunpack.c.l.b16 %v1135
        %v1615 = vunpack.c.h.b16 %v1135
        %v1616 = vunpack.c.l.b16 %v1136
        %v1617 = vunpack.c.h.b16 %v1136
        %v1618 = vunpack.c.l.b16 %v1137
        %v1619 = vunpack.c.h.b16 %v1137
        %v1620 = vunpack.c.l.b16 %v1138
        %v1621 = vunpack.c.h.b16 %v1138
        %v1622 = vunpack.c.l.b16 %v1139
        %v1623 = vunpack.c.h.b16 %v1139
        %v1624 = vunpack.c.l.b16 %v1140
        %v1625 = vunpack.c.h.b16 %v1140
        %v1626 = vunpack.c.l.b16 %v1141
        %v1627 = vunpack.c.h.b16 %v1141
        %v1628 = vunpack.c.l.b16 %v1142
        %v1629 = vunpack.c.h.b16 %v1142
        %v1630 = vunpack.c.l.b16 %v1143
        %v1631 = vunpack.c.h.b16 %v1143
        %v1632 = vunpack.c.l.b16 %v1144
        %v1633 = vunpack.c.h.b16 %v1144
        %v1634 = vunpack.c.l.b16 %v1145
        %v1635 = vunpack.c.h.b16 %v1145
        %v1636 = vunpack.c.l.b16 %v1146
        %v1637 = vunpack.c.h.b16 %v1146
        %v1638 = vunpack.c.l.b16 %v1147
        %v1639 = vunpack.c.h.b16 %v1147
        %v1640 = vunpack.c.l.b16 %v1148
        %v1641 = vunpack.c.h.b16 %v1148
        %v1642 = vunpack.c.l.b16 %v1149
        %v1643 = vunpack.c.h.b16 %v1149
        %v1644 = vunpack.c.l.b16 %v1150
        %v1645 = vunpack.c.h.b16 %v1150
        %v1646 = vpack.c.b16 %v1330, %v1326
        %v1647 = vpack.c.b16 %v1331, %v1327
        %v1648 = vpack.c.b16 %v1332, %v1328
        %v1649 = vpack.c.b16 %v1333, %v1329
        %v1650 = vpack.c.b16 %v1338, %v1334
        %v1651 = vpack.c.b16 %v1339, %v1335
        %v1652 = vpack.c.b16 %v1340, %v1336
        %v1653 = vpack.c.b16 %v1341, %v1337
        %v1654 = vpack.c.b16 %v1346, %v1342
        %v1655 = vpack.c.b16 %v1347, %v1343
        %v1656 = vpack.c.b16 %v1348, %v1344
        %v1657 = vpack.c.b16 %v1349, %v1345
        %v1658 = vpack.c.b16 %v1354, %v1350
        %v1659 = vpack.c.b16 %v1355, %v1351
        %v1660 = vpack.c.b16 %v1356, %v1352
        %v1661 = vpack.c.b16 %v1357, %v1353
        %v1662 = vpack.c.b16 %v1362, %v1358
        %v1663 = vpack.c.b16 %v1363, %v1359
        %v1664 = vpack.c.b16 %v1364, %v1360
        %v1665 = vpack.c.b16 %v1365, %v1361
        %v1666 = vpack.c.b16 %v1370, %v1366
        %v1667 = vpack.c.b16 %v1371, %v1367
        %v1668 = vpack.c.b16 %v1372, %v1368
        %v1669 = vpack.c.b16 %v1373, %v1369
        %v1670 = vpack.c.b16 %v1378, %v1374
        %v1671 = vpack.c.b16 %v1379, %v1375
        %v1672 = vpack.c.b16 %v1380, %v1376
        %v1673 = vpack.c.b16 %v1381, %v1377
        %v1674 = vpack.c.b16 %v1386, %v1382
        %v1675 = vpack.c.b16 %v1387, %v1383
        %v1676 = vpack.c.b16 %v1388, %v1384
        %v1677 = vpack.c.b16 %v1389, %v1385
        %v1678 = vpack.c.b16 %v1394, %v1390
        %v1679 = vpack.c.b16 %v1395, %v1391
        %v1680 = vpack.c.b16 %v1396, %v1392
        %v1681 = vpack.c.b16 %v1397, %v1393
        %v1682 = vpack.c.b16 %v1402, %v1398
        %v1683 = vpack.c.b16 %v1403, %v1399
        %v1684 = vpack.c.b16 %v1404, %v1400
        %v1685 = vpack.c.b16 %v1405, %v1401
        %v1686 = vpack.c.b16 %v1410, %v1406
        %v1687 = vpack.c.b16 %v1411, %v1407
        %v1688 = vpack.c.b16 %v1412, %v1408
        %v1689 = vpack.c.b16 %v1413, %v1409
        %v1690 = vpack.c.b16 %v1418, %v1414
        %v1691 = vpack.c.b16 %v1419, %v1415
        %v1692 = vpack.c.b16 %v1420, %v1416
        %v1693 = vpack.c.b16 %v1421, %v1417
        %v1694 = vpack.c.b16 %v1426, %v1422
        %v1695 = vpack.c.b16 %v1427, %v1423
        %v1696 = vpack.c.b16 %v1428, %v1424
        %v1697 = vpack.c.b16 %v1429, %v1425
        %v1698 = vpack.c.b16 %v1434, %v1430
        %v1699 = vpack.c.b16 %v1435, %v1431
        %v1700 = vpack.c.b16 %v1436, %v1432
        %v1701 = vpack.c.b16 %v1437, %v1433
        %v1702 = vpack.c.b16 %v1442, %v1438
        %v1703 = vpack.c.b16 %v1443, %v1439
        %v1704 = vpack.c.b16 %v1444, %v1440
        %v1705 = vpack.c.b16 %v1445, %v1441
        %v1706 = vpack.c.b16 %v1450, %v1446
        %v1707 = vpack.c.b16 %v1451, %v1447
        %v1708 = vpack.c.b16 %v1452, %v1448
        %v1709 = vpack.c.b16 %v1453, %v1449
        %v1710 = vpack.c.b16 %v1458, %v1454
        %v1711 = vpack.c.b16 %v1459, %v1455
        %v1712 = vpack.c.b16 %v1460, %v1456
        %v1713 = vpack.c.b16 %v1461, %v1457
        %v1714 = vpack.c.b16 %v1466, %v1462
        %v1715 = vpack.c.b16 %v1467, %v1463
        %v1716 = vpack.c.b16 %v1468, %v1464
        %v1717 = vpack.c.b16 %v1469, %v1465
        %v1718 = vpack.c.b16 %v1474, %v1470
        %v1719 = vpack.c.b16 %v1475, %v1471
        %v1720 = vpack.c.b16 %v1476, %v1472
        %v1721 = vpack.c.b16 %v1477, %v1473
        %v1722 = vpack.c.b16 %v1482, %v1478
        %v1723 = vpack.c.b16 %v1483, %v1479
        %v1724 = vpack.c.b16 %v1484, %v1480
        %v1725 = vpack.c.b16 %v1485, %v1481
        %v1726 = vpack.c.b16 %v1490, %v1486
        %v1727 = vpack.c.b16 %v1491, %v1487
        %v1728 = vpack.c.b16 %v1492, %v1488
        %v1729 = vpack.c.b16 %v1493, %v1489
        %v1730 = vpack.c.b16 %v1498, %v1494
        %v1731 = vpack.c.b16 %v1499, %v1495
        %v1732 = vpack.c.b16 %v1500, %v1496
        %v1733 = vpack.c.b16 %v1501, %v1497
        %v1734 = vpack.c.b16 %v1506, %v1502
        %v1735 = vpack.c.b16 %v1507, %v1503
        %v1736 = vpack.c.b16 %v1508, %v1504
        %v1737 = vpack.c.b16 %v1509, %v1505
        %v1738 = vpack.c.b16 %v1514, %v1510
        %v1739 = vpack.c.b16 %v1515, %v1511
        %v1740 = vpack.c.b16 %v1516, %v1512
        %v1741 = vpack.c.b16 %v1517, %v1513
        %v1742 = vpack.c.b16 %v1522, %v1518
        %v1743 = vpack.c.b16 %v1523, %v1519
        %v1744 = vpack.c.b16 %v1524, %v1520
        %v1745 = vpack.c.b16 %v1525, %v1521
        %v1746 = vpack.c.b16 %v1530, %v1526
        %v1747 = vpack.c.b16 %v1531, %v1527
        %v1748 = vpack.c.b16 %v1532, %v1528
        %v1749 = vpack.c.b16 %v1533, %v1529
        %v1750 = vpack.c.b16 %v1538, %v1534
        %v1751 = vpack.c.b16 %v1539, %v1535
        %v1752 = vpack.c.b16 %v1540, %v1536
        %v1753 = vpack.c.b16 %v1541, %v1537
        %v1754 = vpack.c.b16 %v1546, %v1542
        %v1755 = vpack.c.b16 %v1547, %v1543
        %v1756 = vpack.c.b16 %v1548, %v1544
        %v1757 = vpack.c.b16 %v1549, %v1545
        %v1758 = vpack.c.b16 %v1554, %v1550
        %v1759 = vpack.c.b16 %v1555, %v1551
        %v1760 = vpack.c.b16 %v1556, %v1552
        %v1761 = vpack.c.b16 %v1557, %v1553
        %v1762 = vpack.c.b16 %v1562, %v1558
        %v1763 = vpack.c.b16 %v1563, %v1559
        %v1764 = vpack.c.b16 %v1564, %v1560
        %v1765 = vpack.c.b16 %v1565, %v1561
        %v1766 = vpack.c.b16 %v1570, %v1566
        %v1767 = vpack.c.b16 %v1571, %v1567
        %v1768 = vpack.c.b16 %v1572, %v1568
        %v1769 = vpack.c.b16 %v1573, %v1569
        %v1770 = vpack.c.b16 %v1578, %v1574
        %v1771 = vpack.c.b16 %v1579, %v1575
        %v1772 = vpack.c.b16 %v1580, %v1576
        %v1773 = vpack.c.b16 %v1581, %v1577
        %v1774 = vpack.c.b16 %v1586, %v1582
        %v1775 = vpack.c.b16 %v1587, %v1583
        %v1776 = vpack.c.b16 %v1588, %v1584
        %v1777 = vpack.c.b16 %v1589, %v1585
        %v1778 = vpack.c.b16 %v1594, %v1590
        %v1779 = vpack.c.b16 %v1595, %v1591
        %v1780 = vpack.c.b16 %v1596, %v1592
        %v1781 = vpack.c.b16 %v1597, %v1593
        %v1782 = vpack.c.b16 %v1602, %v1598
        %v1783 = vpack.c.b16 %v1603, %v1599
        %v1784 = vpack.c.b16 %v1604, %v1600
        %v1785 = vpack.c.b16 %v1605, %v1601
        %v1786 = vpack.c.b16 %v1610, %v1606
        %v1787 = vpack.c.b16 %v1611, %v1607
        %v1788 = vpack.c.b16 %v1612, %v1608
        %v1789 = vpack.c.b16 %v1613, %v1609
        %v1790 = vpack.c.b16 %v1618, %v1614
        %v1791 = vpack.c.b16 %v1619, %v1615
        %v1792 = vpack.c.b16 %v1620, %v1616
        %v1793 = vpack.c.b16 %v1621, %v1617
        %v1794 = vpack.c.b16 %v1626, %v1622
        %v1795 = vpack.c.b16 %v1627, %v1623
        %v1796 = vpack.c.b16 %v1628, %v1624
        %v1797 = vpack.c.b16 %v1629, %v1625
        %v1798 = vpack.c.b16 %v1634, %v1630
        %v1799 = vpack.c.b16 %v1635, %v1631
        %v1800 = vpack.c.b16 %v1636, %v1632
        %v1801 = vpack.c.b16 %v1637, %v1633
        %v1802 = vpack.c.b16 %v1642, %v1638
        %v1803 = vpack.c.b16 %v1643, %v1639
        %v1804 = vpack.c.b16 %v1644, %v1640
        %v1805 = vpack.c.b16 %v1645, %v1641
        %1966 = vmatpush.bf16.msra.mxu0 %v1674
        %1967 = vmatpush.bf16.msra.mxu0 %v1670
        %1968 = vmatpush.bf16.msra.mxu0 %v1666
        %1969 = vmatpush.bf16.msra.mxu0 %v1662
        %1970 = vmatpush.bf16.msra.mxu0 %v1658
        %1971 = vmatpush.bf16.msra.mxu0 %v1654
        %1972 = vmatpush.bf16.msra.mxu0 %v1650
        %1973 = vmatpush.bf16.msra.mxu0 %v1646
        %1974 = vmatmul.bf16.gmra.mxu0 %v1156
        %v1975 = vpop.f32.mrf.mxu0
        %v1976 = vadd.f32 0.0, %v1975
        %v1977 = vpop.f32.mrf.mxu0
        %1978 = vdwg.mxu0
        %1979 = vmatpush.bf16.msra.mxu0 %v1706
        %1980 = vmatpush.bf16.msra.mxu0 %v1702
        %1981 = vmatpush.bf16.msra.mxu0 %v1698
        %1982 = vmatpush.bf16.msra.mxu0 %v1694
        %1983 = vmatpush.bf16.msra.mxu0 %v1690
        %1984 = vmatpush.bf16.msra.mxu0 %v1686
        %1985 = vmatpush.bf16.msra.mxu0 %v1682
        %1986 = vmatpush.bf16.msra.mxu0 %v1678
        %1987 = vmatmul.bf16.gmra.mxu0 %v1157
        %v1988 = vpop.f32.mrf.mxu0
        %v1989 = vadd.f32 %v1976, %v1988
        %v1990 = vpop.f32.mrf.mxu0
        %1991 = vdwg.mxu0
        %1992 = vmatpush.bf16.msra.mxu0 %v1738
        %1993 = vmatpush.bf16.msra.mxu0 %v1734
        %1994 = vmatpush.bf16.msra.mxu0 %v1730
        %1995 = vmatpush.bf16.msra.mxu0 %v1726
        %1996 = vmatpush.bf16.msra.mxu0 %v1722
        %1997 = vmatpush.bf16.msra.mxu0 %v1718
        %1998 = vmatpush.bf16.msra.mxu0 %v1714
        %1999 = vmatpush.bf16.msra.mxu0 %v1710
        %2000 = vmatmul.bf16.gmra.mxu0 %v1158
        %v2001 = vpop.f32.mrf.mxu0
        %v2002 = vadd.f32 %v1989, %v2001
        %v2003 = vpop.f32.mrf.mxu0
        %2004 = vdwg.mxu0
        %2005 = vmatpush.bf16.msra.mxu0 %v1770
        %2006 = vmatpush.bf16.msra.mxu0 %v1766
        %2007 = vmatpush.bf16.msra.mxu0 %v1762
        %2008 = vmatpush.bf16.msra.mxu0 %v1758
        %2009 = vmatpush.bf16.msra.mxu0 %v1754
        %2010 = vmatpush.bf16.msra.mxu0 %v1750
        %2011 = vmatpush.bf16.msra.mxu0 %v1746
        %2012 = vmatpush.bf16.msra.mxu0 %v1742
        %2013 = vmatmul.bf16.gmra.mxu0 %v1159
        %v2014 = vpop.f32.mrf.mxu0
        %v2015 = vadd.f32 %v2002, %v2014
        %v2016 = vpop.f32.mrf.mxu0
        %2017 = vdwg.mxu0
        %2018 = vmatpush.bf16.msra.mxu0 %v1802
        %2019 = vmatpush.bf16.msra.mxu0 %v1798
        %2020 = vmatpush.bf16.msra.mxu0 %v1794
        %2021 = vmatpush.bf16.msra.mxu0 %v1790
        %2022 = vmatpush.bf16.msra.mxu0 %v1786
        %2023 = vmatpush.bf16.msra.mxu0 %v1782
        %2024 = vmatpush.bf16.msra.mxu0 %v1778
        %2025 = vmatpush.bf16.msra.mxu0 %v1774
        %2026 = vmatmul.bf16.gmra.mxu0 %v1160
        %v2027 = vpop.f32.mrf.mxu0
        %v2028 = vadd.f32 %v2015, %v2027
        %v2029 = vpop.f32.mrf.mxu0
        %2030 = vdwg.mxu0
        %2031 = vmatpush.bf16.msra.mxu0 %v1675
        %2032 = vmatpush.bf16.msra.mxu0 %v1671
        %2033 = vmatpush.bf16.msra.mxu0 %v1667
        %2034 = vmatpush.bf16.msra.mxu0 %v1663
        %2035 = vmatpush.bf16.msra.mxu0 %v1659
        %2036 = vmatpush.bf16.msra.mxu0 %v1655
        %2037 = vmatpush.bf16.msra.mxu0 %v1651
        %2038 = vmatpush.bf16.msra.mxu0 %v1647
        %2039 = vmatmul.bf16.gmra.mxu0 %v1156
        %v2040 = vpop.f32.mrf.mxu0
        %v2041 = vadd.f32 0.0, %v2040
        %v2042 = vpop.f32.mrf.mxu0
        %2043 = vdwg.mxu0
        %2044 = vmatpush.bf16.msra.mxu0 %v1707
        %2045 = vmatpush.bf16.msra.mxu0 %v1703
        %2046 = vmatpush.bf16.msra.mxu0 %v1699
        %2047 = vmatpush.bf16.msra.mxu0 %v1695
        %2048 = vmatpush.bf16.msra.mxu0 %v1691
        %2049 = vmatpush.bf16.msra.mxu0 %v1687
        %2050 = vmatpush.bf16.msra.mxu0 %v1683
        %2051 = vmatpush.bf16.msra.mxu0 %v1679
        %2052 = vmatmul.bf16.gmra.mxu0 %v1157
        %v2053 = vpop.f32.mrf.mxu0
        %v2054 = vadd.f32 %v2041, %v2053
        %v2055 = vpop.f32.mrf.mxu0
        %2056 = vdwg.mxu0
        %2057 = vmatpush.bf16.msra.mxu0 %v1739
        %2058 = vmatpush.bf16.msra.mxu0 %v1735
        %2059 = vmatpush.bf16.msra.mxu0 %v1731
        %2060 = vmatpush.bf16.msra.mxu0 %v1727
        %2061 = vmatpush.bf16.msra.mxu0 %v1723
        %2062 = vmatpush.bf16.msra.mxu0 %v1719
        %2063 = vmatpush.bf16.msra.mxu0 %v1715
        %2064 = vmatpush.bf16.msra.mxu0 %v1711
        %2065 = vmatmul.bf16.gmra.mxu0 %v1158
        %v2066 = vpop.f32.mrf.mxu0
        %v2067 = vadd.f32 %v2054, %v2066
        %v2068 = vpop.f32.mrf.mxu0
        %2069 = vdwg.mxu0
        %2070 = vmatpush.bf16.msra.mxu0 %v1771
        %2071 = vmatpush.bf16.msra.mxu0 %v1767
        %2072 = vmatpush.bf16.msra.mxu0 %v1763
        %2073 = vmatpush.bf16.msra.mxu0 %v1759
        %2074 = vmatpush.bf16.msra.mxu0 %v1755
        %2075 = vmatpush.bf16.msra.mxu0 %v1751
        %2076 = vmatpush.bf16.msra.mxu0 %v1747
        %2077 = vmatpush.bf16.msra.mxu0 %v1743
        %2078 = vmatmul.bf16.gmra.mxu0 %v1159
        %v2079 = vpop.f32.mrf.mxu0
        %v2080 = vadd.f32 %v2067, %v2079
        %v2081 = vpop.f32.mrf.mxu0
        %2082 = vdwg.mxu0
        %2083 = vmatpush.bf16.msra.mxu0 %v1803
        %2084 = vmatpush.bf16.msra.mxu0 %v1799
        %2085 = vmatpush.bf16.msra.mxu0 %v1795
        %2086 = vmatpush.bf16.msra.mxu0 %v1791
        %2087 = vmatpush.bf16.msra.mxu0 %v1787
        %2088 = vmatpush.bf16.msra.mxu0 %v1783
        %2089 = vmatpush.bf16.msra.mxu0 %v1779
        %2090 = vmatpush.bf16.msra.mxu0 %v1775
        %2091 = vmatmul.bf16.gmra.mxu0 %v1160
        %v2092 = vpop.f32.mrf.mxu0
        %v2093 = vadd.f32 %v2080, %v2092
        %v2094 = vpop.f32.mrf.mxu0
        %2095 = vdwg.mxu0
        %2096 = vmatpush.bf16.msra.mxu0 %v1676
        %2097 = vmatpush.bf16.msra.mxu0 %v1672
        %2098 = vmatpush.bf16.msra.mxu0 %v1668
        %2099 = vmatpush.bf16.msra.mxu0 %v1664
        %2100 = vmatpush.bf16.msra.mxu0 %v1660
        %2101 = vmatpush.bf16.msra.mxu0 %v1656
        %2102 = vmatpush.bf16.msra.mxu0 %v1652
        %2103 = vmatpush.bf16.msra.mxu0 %v1648
        %2104 = vmatmul.bf16.gmra.mxu0 %v1156
        %v2105 = vpop.f32.mrf.mxu0
        %v2106 = vadd.f32 0.0, %v2105
        %v2107 = vpop.f32.mrf.mxu0
        %2108 = vdwg.mxu0
        %2109 = vmatpush.bf16.msra.mxu0 %v1708
        %2110 = vmatpush.bf16.msra.mxu0 %v1704
        %2111 = vmatpush.bf16.msra.mxu0 %v1700
        %2112 = vmatpush.bf16.msra.mxu0 %v1696
        %2113 = vmatpush.bf16.msra.mxu0 %v1692
        %2114 = vmatpush.bf16.msra.mxu0 %v1688
        %2115 = vmatpush.bf16.msra.mxu0 %v1684
        %2116 = vmatpush.bf16.msra.mxu0 %v1680
        %2117 = vmatmul.bf16.gmra.mxu0 %v1157
        %v2118 = vpop.f32.mrf.mxu0
        %v2119 = vadd.f32 %v2106, %v2118
        %v2120 = vpop.f32.mrf.mxu0
        %2121 = vdwg.mxu0
        %2122 = vmatpush.bf16.msra.mxu0 %v1740
        %2123 = vmatpush.bf16.msra.mxu0 %v1736
        %2124 = vmatpush.bf16.msra.mxu0 %v1732
        %2125 = vmatpush.bf16.msra.mxu0 %v1728
        %2126 = vmatpush.bf16.msra.mxu0 %v1724
        %2127 = vmatpush.bf16.msra.mxu0 %v1720
        %2128 = vmatpush.bf16.msra.mxu0 %v1716
        %2129 = vmatpush.bf16.msra.mxu0 %v1712
        %2130 = vmatmul.bf16.gmra.mxu0 %v1158
        %v2131 = vpop.f32.mrf.mxu0
        %v2132 = vadd.f32 %v2119, %v2131
        %v2133 = vpop.f32.mrf.mxu0
        %2134 = vdwg.mxu0
        %2135 = vmatpush.bf16.msra.mxu0 %v1772
        %2136 = vmatpush.bf16.msra.mxu0 %v1768
        %2137 = vmatpush.bf16.msra.mxu0 %v1764
        %2138 = vmatpush.bf16.msra.mxu0 %v1760
        %2139 = vmatpush.bf16.msra.mxu0 %v1756
        %2140 = vmatpush.bf16.msra.mxu0 %v1752
        %2141 = vmatpush.bf16.msra.mxu0 %v1748
        %2142 = vmatpush.bf16.msra.mxu0 %v1744
        %2143 = vmatmul.bf16.gmra.mxu0 %v1159
        %v2144 = vpop.f32.mrf.mxu0
        %v2145 = vadd.f32 %v2132, %v2144
        %v2146 = vpop.f32.mrf.mxu0
        %2147 = vdwg.mxu0
        %2148 = vmatpush.bf16.msra.mxu0 %v1804
        %2149 = vmatpush.bf16.msra.mxu0 %v1800
        %2150 = vmatpush.bf16.msra.mxu0 %v1796
        %2151 = vmatpush.bf16.msra.mxu0 %v1792
        %2152 = vmatpush.bf16.msra.mxu0 %v1788
        %2153 = vmatpush.bf16.msra.mxu0 %v1784
        %2154 = vmatpush.bf16.msra.mxu0 %v1780
        %2155 = vmatpush.bf16.msra.mxu0 %v1776
        %2156 = vmatmul.bf16.gmra.mxu0 %v1160
        %v2157 = vpop.f32.mrf.mxu0
        %v2158 = vadd.f32 %v2145, %v2157
        %v2159 = vpop.f32.mrf.mxu0
        %2160 = vdwg.mxu0
        %2161 = vmatpush.bf16.msra.mxu0 %v1677
        %2162 = vmatpush.bf16.msra.mxu0 %v1673
        %2163 = vmatpush.bf16.msra.mxu0 %v1669
        %2164 = vmatpush.bf16.msra.mxu0 %v1665
        %2165 = vmatpush.bf16.msra.mxu0 %v1661
        %2166 = vmatpush.bf16.msra.mxu0 %v1657
        %2167 = vmatpush.bf16.msra.mxu0 %v1653
        %2168 = vmatpush.bf16.msra.mxu0 %v1649
        %2169 = vmatmul.bf16.gmra.mxu0 %v1156
        %v2170 = vpop.f32.mrf.mxu0
        %v2171 = vadd.f32 0.0, %v2170
        %v2172 = vpop.f32.mrf.mxu0
        %2173 = vdwg.mxu0
        %2174 = vmatpush.bf16.msra.mxu0 %v1709
        %2175 = vmatpush.bf16.msra.mxu0 %v1705
        %2176 = vmatpush.bf16.msra.mxu0 %v1701
        %2177 = vmatpush.bf16.msra.mxu0 %v1697
        %2178 = vmatpush.bf16.msra.mxu0 %v1693
        %2179 = vmatpush.bf16.msra.mxu0 %v1689
        %2180 = vmatpush.bf16.msra.mxu0 %v1685
        %2181 = vmatpush.bf16.msra.mxu0 %v1681
        %2182 = vmatmul.bf16.gmra.mxu0 %v1157
        %v2183 = vpop.f32.mrf.mxu0
        %v2184 = vadd.f32 %v2171, %v2183
        %v2185 = vpop.f32.mrf.mxu0
        %2186 = vdwg.mxu0
        %2187 = vmatpush.bf16.msra.mxu0 %v1741
        %2188 = vmatpush.bf16.msra.mxu0 %v1737
        %2189 = vmatpush.bf16.msra.mxu0 %v1733
        %2190 = vmatpush.bf16.msra.mxu0 %v1729
        %2191 = vmatpush.bf16.msra.mxu0 %v1725
        %2192 = vmatpush.bf16.msra.mxu0 %v1721
        %2193 = vmatpush.bf16.msra.mxu0 %v1717
        %2194 = vmatpush.bf16.msra.mxu0 %v1713
        %2195 = vmatmul.bf16.gmra.mxu0 %v1158
        %v2196 = vpop.f32.mrf.mxu0
        %v2197 = vadd.f32 %v2184, %v2196
        %v2198 = vpop.f32.mrf.mxu0
        %2199 = vdwg.mxu0
        %2200 = vmatpush.bf16.msra.mxu0 %v1773
        %2201 = vmatpush.bf16.msra.mxu0 %v1769
        %2202 = vmatpush.bf16.msra.mxu0 %v1765
        %2203 = vmatpush.bf16.msra.mxu0 %v1761
        %2204 = vmatpush.bf16.msra.mxu0 %v1757
        %2205 = vmatpush.bf16.msra.mxu0 %v1753
        %2206 = vmatpush.bf16.msra.mxu0 %v1749
        %2207 = vmatpush.bf16.msra.mxu0 %v1745
        %2208 = vmatmul.bf16.gmra.mxu0 %v1159
        %v2209 = vpop.f32.mrf.mxu0
        %v2210 = vadd.f32 %v2197, %v2209
        %v2211 = vpop.f32.mrf.mxu0
        %2212 = vdwg.mxu0
        %2213 = vmatpush.bf16.msra.mxu0 %v1805
        %2214 = vmatpush.bf16.msra.mxu0 %v1801
        %2215 = vmatpush.bf16.msra.mxu0 %v1797
        %2216 = vmatpush.bf16.msra.mxu0 %v1793
        %2217 = vmatpush.bf16.msra.mxu0 %v1789
        %2218 = vmatpush.bf16.msra.mxu0 %v1785
        %2219 = vmatpush.bf16.msra.mxu0 %v1781
        %2220 = vmatpush.bf16.msra.mxu0 %v1777
        %2221 = vmatmul.bf16.gmra.mxu0 %v1160
        %v2222 = vpop.f32.mrf.mxu0
        %v2223 = vadd.f32 %v2210, %v2222
        %v2224 = vpop.f32.mrf.mxu0
        %2225 = vdwg.mxu0
        %v2230 = vrot.slane %v2093, 4
        %v2231 = vrot.slane %v2223, 4
        %vm2232 = vcmask 1043456
        %v2233 = vsel %vm2232, %v2028, %v2230
        %v2234 = vsel %vm2232, %v2158, %v2231
        %v2237 = vadd.f32 %v987, %v2233
        %v2238 = vadd.f32 %v988, %v2234
        %2239 = vst [vmem:[#allocation2] sm:$0xff] %v2237
        %2240 = vst [vmem:[#allocation2 + $0x8] sm:$0xff] %v2238
        %p2241 = scmp.eq.s32.totalorder %s52, 7
        // Predicated region
        $region177: #{tpu_custom_call.1} parent=103 // pred_check
          %p2242 = pneg %p2241
        $region178: #{tpu_custom_call.1} parent=103 // pred_check_branch
          %2244 = sbr.rel (%p2242) target = $region180
        $region179: #{tpu_custom_call.1} parent=103 // pred_region
          %v2245 = vld [vmem:[#allocation2] sm:$0xff]
          %v2246 = vld [vmem:[#allocation2 + $0x8] sm:$0xff]
          %v2247 = vld [vmem:[#allocation17] sm:$0xf]
          %v2249 = vperm.slane %v2247, 0
          %v2250 = vperm.slane %v2247, 1
          %v2251 = vperm.slane %v2247, 2
          %v2252 = vperm.slane %v2247, 3
          %v2253 = vrot.slane %v2250, 4
          %v2254 = vrot.slane %v2252, 4
          %v2255 = vsel %vm2232, %v2249, %v2253
          %v2256 = vsel %vm2232, %v2251, %v2254
          %v2259 = vadd.f32 %v2245, %v2255
          %v2260 = vadd.f32 %v2246, %v2256
          %v2261 = vmax.f32 %v2259, 0.0
          %v2262 = vmax.f32 %v2260, 0.0
          %2265 = vst [vmem:[#allocation1] ss:$2 sm:$0xff] %v2261
          %s2266 = scalar_lea.vmem [#allocation1], 16
          %2267 = vst [vmem:[%s2266] ss:$2 sm:$0xff] %v2262
          %v2268 = vld.sshfl [vmem:[#allocation1] sm:$0xff pattern:$0x75316420]
          %v2269 = vld.sshfl [vmem:[#allocation1 + $0x8] sm:$0xff pattern:$0x75316420]
          %v2270 = vld.sshfl [vmem:[#allocation1 + $0x10] sm:$0xff pattern:$0x75316420]
          %v2271 = vld.sshfl [vmem:[#allocation1 + $0x18] sm:$0xff pattern:$0x75316420]
          %v2276 = vpack.c.bf16 %v2268, %v2268
          %v2277 = vpack.c.bf16 %v2269, %v2269
          %v2278 = vpack.c.bf16 %v2270, %v2270
          %v2279 = vpack.c.bf16 %v2271, %v2271
          %v2280 = vld [vmem:[#allocation18] sm:$0xf]
          %v2281 = vld [vmem:[#allocation18 + $0x4] sm:$0xf]
          %v2282 = vld [vmem:[#allocation18 + $0x8] sm:$0xf]
          %v2283 = vld [vmem:[#allocation18 + $0xc] sm:$0xf]
          %v2284 = vld [vmem:[#allocation18 + $0x10] sm:$0xf]
          %v2285 = vld [vmem:[#allocation18 + $0x14] sm:$0xf]
          %v2286 = vld [vmem:[#allocation18 + $0x18] sm:$0xf]
          %v2287 = vld [vmem:[#allocation18 + $0x1c] sm:$0xf]
          %v2288 = vld [vmem:[#allocation18 + $0x20] sm:$0xf]
          %v2289 = vld [vmem:[#allocation18 + $0x24] sm:$0xf]
          %v2290 = vld [vmem:[#allocation18 + $0x28] sm:$0xf]
          %v2291 = vld [vmem:[#allocation18 + $0x2c] sm:$0xf]
          %v2292 = vld [vmem:[#allocation18 + $0x30] sm:$0xf]
          %v2293 = vld [vmem:[#allocation18 + $0x34] sm:$0xf]
          %v2294 = vld [vmem:[#allocation18 + $0x38] sm:$0xf]
          %v2295 = vld [vmem:[#allocation18 + $0x3c] sm:$0xf]
          %v2296 = vld [vmem:[#allocation18 + $0x40] sm:$0xf]
          %v2297 = vld [vmem:[#allocation18 + $0x44] sm:$0xf]
          %v2298 = vld [vmem:[#allocation18 + $0x48] sm:$0xf]
          %v2299 = vld [vmem:[#allocation18 + $0x4c] sm:$0xf]
          %v2300 = vld [vmem:[#allocation18 + $0x50] sm:$0xf]
          %v2301 = vld [vmem:[#allocation18 + $0x54] sm:$0xf]
          %v2302 = vld [vmem:[#allocation18 + $0x58] sm:$0xf]
          %v2303 = vld [vmem:[#allocation18 + $0x5c] sm:$0xf]
          %v2304 = vld [vmem:[#allocation18 + $0x60] sm:$0xf]
          %v2305 = vld [vmem:[#allocation18 + $0x64] sm:$0xf]
          %v2306 = vld [vmem:[#allocation18 + $0x68] sm:$0xf]
          %v2307 = vld [vmem:[#allocation18 + $0x6c] sm:$0xf]
          %v2308 = vld [vmem:[#allocation18 + $0x70] sm:$0xf]
          %v2309 = vld [vmem:[#allocation18 + $0x74] sm:$0xf]
          %v2310 = vld [vmem:[#allocation18 + $0x78] sm:$0xf]
          %v2311 = vld [vmem:[#allocation18 + $0x7c] sm:$0xf]
          %v2312 = vld [vmem:[#allocation18 + $0x80] sm:$0xf]
          %v2313 = vld [vmem:[#allocation18 + $0x84] sm:$0xf]
          %v2314 = vld [vmem:[#allocation18 + $0x88] sm:$0xf]
          %v2315 = vld [vmem:[#allocation18 + $0x8c] sm:$0xf]
          %v2316 = vld [vmem:[#allocation18 + $0x90] sm:$0xf]
          %v2317 = vld [vmem:[#allocation18 + $0x94] sm:$0xf]
          %v2318 = vld [vmem:[#allocation18 + $0x98] sm:$0xf]
          %v2319 = vld [vmem:[#allocation18 + $0x9c] sm:$0xf]
          %v2320 = vld [vmem:[#allocation18 + $0xa0] sm:$0xf]
          %v2321 = vld [vmem:[#allocation18 + $0xa4] sm:$0xf]
          %v2322 = vld [vmem:[#allocation18 + $0xa8] sm:$0xf]
          %v2323 = vld [vmem:[#allocation18 + $0xac] sm:$0xf]
          %v2324 = vld [vmem:[#allocation18 + $0xb0] sm:$0xf]
          %v2325 = vld [vmem:[#allocation18 + $0xb4] sm:$0xf]
          %v2326 = vld [vmem:[#allocation18 + $0xb8] sm:$0xf]
          %v2327 = vld [vmem:[#allocation18 + $0xbc] sm:$0xf]
          %v2328 = vld [vmem:[#allocation18 + $0xc0] sm:$0xf]
          %v2329 = vld [vmem:[#allocation18 + $0xc4] sm:$0xf]
          %v2330 = vld [vmem:[#allocation18 + $0xc8] sm:$0xf]
          %v2331 = vld [vmem:[#allocation18 + $0xcc] sm:$0xf]
          %v2332 = vld [vmem:[#allocation18 + $0xd0] sm:$0xf]
          %v2333 = vld [vmem:[#allocation18 + $0xd4] sm:$0xf]
          %v2334 = vld [vmem:[#allocation18 + $0xd8] sm:$0xf]
          %v2335 = vld [vmem:[#allocation18 + $0xdc] sm:$0xf]
          %v2336 = vld [vmem:[#allocation18 + $0xe0] sm:$0xf]
          %v2337 = vld [vmem:[#allocation18 + $0xe4] sm:$0xf]
          %v2338 = vld [vmem:[#allocation18 + $0xe8] sm:$0xf]
          %v2339 = vld [vmem:[#allocation18 + $0xec] sm:$0xf]
          %v2340 = vld [vmem:[#allocation18 + $0xf0] sm:$0xf]
          %v2341 = vld [vmem:[#allocation18 + $0xf4] sm:$0xf]
          %v2342 = vld [vmem:[#allocation18 + $0xf8] sm:$0xf]
          %v2343 = vld [vmem:[#allocation18 + $0xfc] sm:$0xf]
          %v2344 = vld [vmem:[#allocation20] sm:$0x1]
          %v2346 = vperm.slane %v2344, 0
          %v2412 = vunpack.c.l.b16 %v2280
          %v2413 = vunpack.c.l.b16 %v2281
          %v2414 = vunpack.c.l.b16 %v2282
          %v2415 = vunpack.c.l.b16 %v2283
          %v2416 = vunpack.c.l.b16 %v2284
          %v2417 = vunpack.c.l.b16 %v2285
          %v2418 = vunpack.c.l.b16 %v2286
          %v2419 = vunpack.c.l.b16 %v2287
          %v2420 = vunpack.c.l.b16 %v2288
          %v2421 = vunpack.c.l.b16 %v2289
          %v2422 = vunpack.c.l.b16 %v2290
          %v2423 = vunpack.c.l.b16 %v2291
          %v2424 = vunpack.c.l.b16 %v2292
          %v2425 = vunpack.c.l.b16 %v2293
          %v2426 = vunpack.c.l.b16 %v2294
          %v2427 = vunpack.c.l.b16 %v2295
          %v2428 = vunpack.c.l.b16 %v2296
          %v2429 = vunpack.c.l.b16 %v2297
          %v2430 = vunpack.c.l.b16 %v2298
          %v2431 = vunpack.c.l.b16 %v2299
          %v2432 = vunpack.c.l.b16 %v2300
          %v2433 = vunpack.c.l.b16 %v2301
          %v2434 = vunpack.c.l.b16 %v2302
          %v2435 = vunpack.c.l.b16 %v2303
          %v2436 = vunpack.c.l.b16 %v2304
          %v2437 = vunpack.c.l.b16 %v2305
          %v2438 = vunpack.c.l.b16 %v2306
          %v2439 = vunpack.c.l.b16 %v2307
          %v2440 = vunpack.c.l.b16 %v2308
          %v2441 = vunpack.c.l.b16 %v2309
          %v2442 = vunpack.c.l.b16 %v2310
          %v2443 = vunpack.c.l.b16 %v2311
          %v2444 = vunpack.c.l.b16 %v2312
          %v2445 = vunpack.c.l.b16 %v2313
          %v2446 = vunpack.c.l.b16 %v2314
          %v2447 = vunpack.c.l.b16 %v2315
          %v2448 = vunpack.c.l.b16 %v2316
          %v2449 = vunpack.c.l.b16 %v2317
          %v2450 = vunpack.c.l.b16 %v2318
          %v2451 = vunpack.c.l.b16 %v2319
          %v2452 = vunpack.c.l.b16 %v2320
          %v2453 = vunpack.c.l.b16 %v2321
          %v2454 = vunpack.c.l.b16 %v2322
          %v2455 = vunpack.c.l.b16 %v2323
          %v2456 = vunpack.c.l.b16 %v2324
          %v2457 = vunpack.c.l.b16 %v2325
          %v2458 = vunpack.c.l.b16 %v2326
          %v2459 = vunpack.c.l.b16 %v2327
          %v2460 = vunpack.c.l.b16 %v2328
          %v2461 = vunpack.c.l.b16 %v2329
          %v2462 = vunpack.c.l.b16 %v2330
          %v2463 = vunpack.c.l.b16 %v2331
          %v2464 = vunpack.c.l.b16 %v2332
          %v2465 = vunpack.c.l.b16 %v2333
          %v2466 = vunpack.c.l.b16 %v2334
          %v2467 = vunpack.c.l.b16 %v2335
          %v2468 = vunpack.c.l.b16 %v2336
          %v2469 = vunpack.c.l.b16 %v2337
          %v2470 = vunpack.c.l.b16 %v2338
          %v2471 = vunpack.c.l.b16 %v2339
          %v2472 = vunpack.c.l.b16 %v2340
          %v2473 = vunpack.c.l.b16 %v2341
          %v2474 = vunpack.c.l.b16 %v2342
          %v2475 = vunpack.c.l.b16 %v2343
          %v2476 = vpack.c.b16 %v2413, %v2412
          %v2477 = vpack.c.b16 %v2415, %v2414
          %v2478 = vpack.c.b16 %v2417, %v2416
          %v2479 = vpack.c.b16 %v2419, %v2418
          %v2480 = vpack.c.b16 %v2421, %v2420
          %v2481 = vpack.c.b16 %v2423, %v2422
          %v2482 = vpack.c.b16 %v2425, %v2424
          %v2483 = vpack.c.b16 %v2427, %v2426
          %v2484 = vpack.c.b16 %v2429, %v2428
          %v2485 = vpack.c.b16 %v2431, %v2430
          %v2486 = vpack.c.b16 %v2433, %v2432
          %v2487 = vpack.c.b16 %v2435, %v2434
          %v2488 = vpack.c.b16 %v2437, %v2436
          %v2489 = vpack.c.b16 %v2439, %v2438
          %v2490 = vpack.c.b16 %v2441, %v2440
          %v2491 = vpack.c.b16 %v2443, %v2442
          %v2492 = vpack.c.b16 %v2445, %v2444
          %v2493 = vpack.c.b16 %v2447, %v2446
          %v2494 = vpack.c.b16 %v2449, %v2448
          %v2495 = vpack.c.b16 %v2451, %v2450
          %v2496 = vpack.c.b16 %v2453, %v2452
          %v2497 = vpack.c.b16 %v2455, %v2454
          %v2498 = vpack.c.b16 %v2457, %v2456
          %v2499 = vpack.c.b16 %v2459, %v2458
          %v2500 = vpack.c.b16 %v2461, %v2460
          %v2501 = vpack.c.b16 %v2463, %v2462
          %v2502 = vpack.c.b16 %v2465, %v2464
          %v2503 = vpack.c.b16 %v2467, %v2466
          %v2504 = vpack.c.b16 %v2469, %v2468
          %v2505 = vpack.c.b16 %v2471, %v2470
          %v2506 = vpack.c.b16 %v2473, %v2472
          %v2507 = vpack.c.b16 %v2475, %v2474
          %2540 = vmatpush.bf16.msra.mxu0 %v2483
          %2541 = vmatpush.bf16.msra.mxu0 %v2482
          %2542 = vmatpush.bf16.msra.mxu0 %v2481
          %2543 = vmatpush.bf16.msra.mxu0 %v2480
          %2544 = vmatpush.bf16.msra.mxu0 %v2479
          %2545 = vmatpush.bf16.msra.mxu0 %v2478
          %2546 = vmatpush.bf16.msra.mxu0 %v2477
          %2547 = vmatpush.bf16.msra.mxu0 %v2476
          %2548 = vmatmul.bf16.gmra.mxu0 %v2276
          %v2549 = vpop.f32.mrf.mxu0
          %v2550 = vadd.f32 %v2346, %v2549
          %v2551 = vpop.f32.mrf.mxu0
          %2552 = vdwg.mxu0
          %2553 = vmatpush.bf16.msra.mxu0 %v2491
          %2554 = vmatpush.bf16.msra.mxu0 %v2490
          %2555 = vmatpush.bf16.msra.mxu0 %v2489
          %2556 = vmatpush.bf16.msra.mxu0 %v2488
          %2557 = vmatpush.bf16.msra.mxu0 %v2487
          %2558 = vmatpush.bf16.msra.mxu0 %v2486
          %2559 = vmatpush.bf16.msra.mxu0 %v2485
          %2560 = vmatpush.bf16.msra.mxu0 %v2484
          %2561 = vmatmul.bf16.gmra.mxu0 %v2277
          %v2562 = vpop.f32.mrf.mxu0
          %v2563 = vadd.f32 %v2550, %v2562
          %v2564 = vpop.f32.mrf.mxu0
          %2565 = vdwg.mxu0
          %2566 = vmatpush.bf16.msra.mxu0 %v2499
          %2567 = vmatpush.bf16.msra.mxu0 %v2498
          %2568 = vmatpush.bf16.msra.mxu0 %v2497
          %2569 = vmatpush.bf16.msra.mxu0 %v2496
          %2570 = vmatpush.bf16.msra.mxu0 %v2495
          %2571 = vmatpush.bf16.msra.mxu0 %v2494
          %2572 = vmatpush.bf16.msra.mxu0 %v2493
          %2573 = vmatpush.bf16.msra.mxu0 %v2492
          %2574 = vmatmul.bf16.gmra.mxu0 %v2278
          %v2575 = vpop.f32.mrf.mxu0
          %v2576 = vadd.f32 %v2563, %v2575
          %v2577 = vpop.f32.mrf.mxu0
          %2578 = vdwg.mxu0
          %2579 = vmatpush.bf16.msra.mxu0 %v2507
          %2580 = vmatpush.bf16.msra.mxu0 %v2506
          %2581 = vmatpush.bf16.msra.mxu0 %v2505
          %2582 = vmatpush.bf16.msra.mxu0 %v2504
          %2583 = vmatpush.bf16.msra.mxu0 %v2503
          %2584 = vmatpush.bf16.msra.mxu0 %v2502
          %2585 = vmatpush.bf16.msra.mxu0 %v2501
          %2586 = vmatpush.bf16.msra.mxu0 %v2500
          %2587 = vmatmul.bf16.gmra.mxu0 %v2279
          %v2588 = vpop.f32.mrf.mxu0
          %v2589 = vadd.f32 %v2576, %v2588
          %v2590 = vpop.f32.mrf.mxu0
          %2591 = vdwg.mxu0
          %v2592 = vmax.f32 %v2589, 0.0
          %v2593 = vld [vmem:[#allocation4] sm:$0x3f]
          %v2594 = vld [vmem:[#allocation9] sm:$0xff]
          %v2595 = vld [vmem:[#allocation9 + $0x8] sm:$0xff]
          %v2596 = vld [vmem:[#allocation9 + $0x10] sm:$0xff]
          %v2597 = vld [vmem:[#allocation9 + $0x18] sm:$0xff]
          %v2598 = vld [vmem:[#allocation9 + $0x20] sm:$0xff]
          %v2599 = vld [vmem:[#allocation9 + $0x28] sm:$0xff]
          %v2600 = vld [vmem:[#allocation9 + $0x30] sm:$0xff]
          %v2601 = vld [vmem:[#allocation9 + $0x38] sm:$0xff]
          %v2602 = vld [vmem:[#allocation9 + $0x40] sm:$0xff]
          %v2603 = vld [vmem:[#allocation9 + $0x48] sm:$0xff]
          %v2604 = vld [vmem:[#allocation9 + $0x50] sm:$0xff]
          %v2605 = vld [vmem:[#allocation9 + $0x58] sm:$0xff]
          %v2606 = vld [vmem:[#allocation9 + $0x60] sm:$0xff]
          %v2607 = vld [vmem:[#allocation9 + $0x68] sm:$0xff]
          %v2608 = vld [vmem:[#allocation9 + $0x70] sm:$0xff]
          %v2609 = vld [vmem:[#allocation9 + $0x78] sm:$0xff]
          %v2610 = vld [vmem:[#allocation9 + $0x80] sm:$0xff]
          %v2611 = vld [vmem:[#allocation9 + $0x88] sm:$0xff]
          %v2612 = vld [vmem:[#allocation9 + $0x90] sm:$0xff]
          %v2613 = vld [vmem:[#allocation9 + $0x98] sm:$0xff]
          %v2614 = vld [vmem:[#allocation9 + $0xa0] sm:$0xff]
          %v2615 = vld [vmem:[#allocation9 + $0xa8] sm:$0xff]
          %v2616 = vld [vmem:[#allocation9 + $0xb0] sm:$0xff]
          %v2617 = vld [vmem:[#allocation9 + $0xb8] sm:$0xff]
          %v2618 = vld [vmem:[#allocation9 + $0xc0] sm:$0xff]
          %v2619 = vld [vmem:[#allocation9 + $0xc8] sm:$0xff]
          %v2620 = vld [vmem:[#allocation9 + $0xd0] sm:$0xff]
          %v2621 = vld [vmem:[#allocation9 + $0xd8] sm:$0xff]
          %v2622 = vld [vmem:[#allocation9 + $0xe0] sm:$0xff]
          %v2623 = vld [vmem:[#allocation9 + $0xe8] sm:$0xff]
          %v2624 = vld [vmem:[#allocation9 + $0xf0] sm:$0xff]
          %v2625 = vld [vmem:[#allocation9 + $0xf8] sm:$0xff]
          %v2626 = vld [vmem:[#allocation9 + $0x100] sm:$0xff]
          %v2627 = vld [vmem:[#allocation9 + $0x108] sm:$0xff]
          %v2628 = vld [vmem:[#allocation9 + $0x110] sm:$0xff]
          %v2629 = vld [vmem:[#allocation9 + $0x118] sm:$0xff]
          %v2630 = vld [vmem:[#allocation9 + $0x120] sm:$0xff]
          %v2631 = vld [vmem:[#allocation9 + $0x128] sm:$0xff]
          %v2632 = vld [vmem:[#allocation9 + $0x130] sm:$0xff]
          %v2633 = vld [vmem:[#allocation9 + $0x138] sm:$0xff]
          %v2634 = vld [vmem:[#allocation9 + $0x140] sm:$0xff]
          %v2635 = vld [vmem:[#allocation9 + $0x148] sm:$0xff]
          %v2636 = vld [vmem:[#allocation9 + $0x150] sm:$0xff]
          %v2637 = vld [vmem:[#allocation9 + $0x158] sm:$0xff]
          %v2638 = vld [vmem:[#allocation9 + $0x160] sm:$0xff]
          %v2639 = vld [vmem:[#allocation9 + $0x168] sm:$0xff]
          %v2640 = vld [vmem:[#allocation9 + $0x170] sm:$0xff]
          %v2641 = vld [vmem:[#allocation9 + $0x178] sm:$0xff]
          %v2642 = vld [vmem:[#allocation11] sm:$0x3]
          %v2644 = vperm.slane %v2642, 0
          %v2645 = vperm.slane %v2642, 1
          %2649 = vst [vmem:[#allocation1] ss:$4 sm:$0xff] %v2593
          %v2650 = vld.sshfl [vmem:[#allocation1] sm:$0xff pattern:$0x73625140]
          %v2651 = vld.sshfl [vmem:[#allocation1 + $0x8] sm:$0xff pattern:$0x73625140]
          %v2652 = vld.sshfl [vmem:[#allocation1 + $0x10] sm:$0xff pattern:$0x73625140]
          %v2704 = vunpack.c.l.b16 %v2594
          %v2705 = vunpack.c.h.b16 %v2594
          %v2706 = vunpack.c.l.b16 %v2595
          %v2707 = vunpack.c.h.b16 %v2595
          %v2708 = vunpack.c.l.b16 %v2596
          %v2709 = vunpack.c.h.b16 %v2596
          %v2710 = vunpack.c.l.b16 %v2597
          %v2711 = vunpack.c.h.b16 %v2597
          %v2712 = vunpack.c.l.b16 %v2598
          %v2713 = vunpack.c.h.b16 %v2598
          %v2714 = vunpack.c.l.b16 %v2599
          %v2715 = vunpack.c.h.b16 %v2599
          %v2716 = vunpack.c.l.b16 %v2600
          %v2717 = vunpack.c.h.b16 %v2600
          %v2718 = vunpack.c.l.b16 %v2601
          %v2719 = vunpack.c.h.b16 %v2601
          %v2720 = vunpack.c.l.b16 %v2602
          %v2721 = vunpack.c.h.b16 %v2602
          %v2722 = vunpack.c.l.b16 %v2603
          %v2723 = vunpack.c.h.b16 %v2603
          %v2724 = vunpack.c.l.b16 %v2604
          %v2725 = vunpack.c.h.b16 %v2604
          %v2726 = vunpack.c.l.b16 %v2605
          %v2727 = vunpack.c.h.b16 %v2605
          %v2728 = vunpack.c.l.b16 %v2606
          %v2729 = vunpack.c.h.b16 %v2606
          %v2730 = vunpack.c.l.b16 %v2607
          %v2731 = vunpack.c.h.b16 %v2607
          %v2732 = vunpack.c.l.b16 %v2608
          %v2733 = vunpack.c.h.b16 %v2608
          %v2734 = vunpack.c.l.b16 %v2609
          %v2735 = vunpack.c.h.b16 %v2609
          %v2736 = vunpack.c.l.b16 %v2610
          %v2737 = vunpack.c.h.b16 %v2610
          %v2738 = vunpack.c.l.b16 %v2611
          %v2739 = vunpack.c.h.b16 %v2611
          %v2740 = vunpack.c.l.b16 %v2612
          %v2741 = vunpack.c.h.b16 %v2612
          %v2742 = vunpack.c.l.b16 %v2613
          %v2743 = vunpack.c.h.b16 %v2613
          %v2744 = vunpack.c.l.b16 %v2614
          %v2745 = vunpack.c.h.b16 %v2614
          %v2746 = vunpack.c.l.b16 %v2615
          %v2747 = vunpack.c.h.b16 %v2615
          %v2748 = vunpack.c.l.b16 %v2616
          %v2749 = vunpack.c.h.b16 %v2616
          %v2750 = vunpack.c.l.b16 %v2617
          %v2751 = vunpack.c.h.b16 %v2617
          %v2752 = vunpack.c.l.b16 %v2618
          %v2753 = vunpack.c.h.b16 %v2618
          %v2754 = vunpack.c.l.b16 %v2619
          %v2755 = vunpack.c.h.b16 %v2619
          %v2756 = vunpack.c.l.b16 %v2620
          %v2757 = vunpack.c.h.b16 %v2620
          %v2758 = vunpack.c.l.b16 %v2621
          %v2759 = vunpack.c.h.b16 %v2621
          %v2760 = vunpack.c.l.b16 %v2622
          %v2761 = vunpack.c.h.b16 %v2622
          %v2762 = vunpack.c.l.b16 %v2623
          %v2763 = vunpack.c.h.b16 %v2623
          %v2764 = vunpack.c.l.b16 %v2624
          %v2765 = vunpack.c.h.b16 %v2624
          %v2766 = vunpack.c.l.b16 %v2625
          %v2767 = vunpack.c.h.b16 %v2625
          %v2768 = vunpack.c.l.b16 %v2626
          %v2769 = vunpack.c.h.b16 %v2626
          %v2770 = vunpack.c.l.b16 %v2627
          %v2771 = vunpack.c.h.b16 %v2627
          %v2772 = vunpack.c.l.b16 %v2628
          %v2773 = vunpack.c.h.b16 %v2628
          %v2774 = vunpack.c.l.b16 %v2629
          %v2775 = vunpack.c.h.b16 %v2629
          %v2776 = vunpack.c.l.b16 %v2630
          %v2777 = vunpack.c.h.b16 %v2630
          %v2778 = vunpack.c.l.b16 %v2631
          %v2779 = vunpack.c.h.b16 %v2631
          %v2780 = vunpack.c.l.b16 %v2632
          %v2781 = vunpack.c.h.b16 %v2632
          %v2782 = vunpack.c.l.b16 %v2633
          %v2783 = vunpack.c.h.b16 %v2633
          %v2784 = vunpack.c.l.b16 %v2634
          %v2785 = vunpack.c.h.b16 %v2634
          %v2786 = vunpack.c.l.b16 %v2635
          %v2787 = vunpack.c.h.b16 %v2635
          %v2788 = vunpack.c.l.b16 %v2636
          %v2789 = vunpack.c.h.b16 %v2636
          %v2790 = vunpack.c.l.b16 %v2637
          %v2791 = vunpack.c.h.b16 %v2637
          %v2792 = vunpack.c.l.b16 %v2638
          %v2793 = vunpack.c.h.b16 %v2638
          %v2794 = vunpack.c.l.b16 %v2639
          %v2795 = vunpack.c.h.b16 %v2639
          %v2796 = vunpack.c.l.b16 %v2640
          %v2797 = vunpack.c.h.b16 %v2640
          %v2798 = vunpack.c.l.b16 %v2641
          %v2799 = vunpack.c.h.b16 %v2641
          %v2800 = vpack.c.b16 %v2706, %v2704
          %v2801 = vpack.c.b16 %v2707, %v2705
          %v2802 = vpack.c.b16 %v2710, %v2708
          %v2803 = vpack.c.b16 %v2711, %v2709
          %v2804 = vpack.c.b16 %v2714, %v2712
          %v2805 = vpack.c.b16 %v2715, %v2713
          %v2806 = vpack.c.b16 %v2718, %v2716
          %v2807 = vpack.c.b16 %v2719, %v2717
          %v2808 = vpack.c.b16 %v2722, %v2720
          %v2809 = vpack.c.b16 %v2723, %v2721
          %v2810 = vpack.c.b16 %v2726, %v2724
          %v2811 = vpack.c.b16 %v2727, %v2725
          %v2812 = vpack.c.b16 %v2730, %v2728
          %v2813 = vpack.c.b16 %v2731, %v2729
          %v2814 = vpack.c.b16 %v2734, %v2732
          %v2815 = vpack.c.b16 %v2735, %v2733
          %v2816 = vpack.c.b16 %v2738, %v2736
          %v2817 = vpack.c.b16 %v2739, %v2737
          %v2818 = vpack.c.b16 %v2742, %v2740
          %v2819 = vpack.c.b16 %v2743, %v2741
          %v2820 = vpack.c.b16 %v2746, %v2744
          %v2821 = vpack.c.b16 %v2747, %v2745
          %v2822 = vpack.c.b16 %v2750, %v2748
          %v2823 = vpack.c.b16 %v2751, %v2749
          %v2824 = vpack.c.b16 %v2754, %v2752
          %v2825 = vpack.c.b16 %v2755, %v2753
          %v2826 = vpack.c.b16 %v2758, %v2756
          %v2827 = vpack.c.b16 %v2759, %v2757
          %v2828 = vpack.c.b16 %v2762, %v2760
          %v2829 = vpack.c.b16 %v2763, %v2761
          %v2830 = vpack.c.b16 %v2766, %v2764
          %v2831 = vpack.c.b16 %v2767, %v2765
          %v2832 = vpack.c.b16 %v2770, %v2768
          %v2833 = vpack.c.b16 %v2771, %v2769
          %v2834 = vpack.c.b16 %v2774, %v2772
          %v2835 = vpack.c.b16 %v2775, %v2773
          %v2836 = vpack.c.b16 %v2778, %v2776
          %v2837 = vpack.c.b16 %v2779, %v2777
          %v2838 = vpack.c.b16 %v2782, %v2780
          %v2839 = vpack.c.b16 %v2783, %v2781
          %v2840 = vpack.c.b16 %v2786, %v2784
          %v2841 = vpack.c.b16 %v2787, %v2785
          %v2842 = vpack.c.b16 %v2790, %v2788
          %v2843 = vpack.c.b16 %v2791, %v2789
          %v2844 = vpack.c.b16 %v2794, %v2792
          %v2845 = vpack.c.b16 %v2795, %v2793
          %v2846 = vpack.c.b16 %v2798, %v2796
          %v2847 = vpack.c.b16 %v2799, %v2797
          %2896 = vmatpush.bf16.msra.mxu0 %v2814
          %2897 = vmatpush.bf16.msra.mxu0 %v2812
          %2898 = vmatpush.bf16.msra.mxu0 %v2810
          %2899 = vmatpush.bf16.msra.mxu0 %v2808
          %2900 = vmatpush.bf16.msra.mxu0 %v2806
          %2901 = vmatpush.bf16.msra.mxu0 %v2804
          %2902 = vmatpush.bf16.msra.mxu0 %v2802
          %2903 = vmatpush.bf16.msra.mxu0 %v2800
          %2904 = vmatmul.bf16.gmra.mxu0 %v2650
          %v2905 = vpop.f32.mrf.mxu0
          %v2906 = vadd.f32 %v2644, %v2905
          %v2907 = vpop.f32.mrf.mxu0
          %2908 = vdwg.mxu0
          %2909 = vmatpush.bf16.msra.mxu0 %v2830
          %2910 = vmatpush.bf16.msra.mxu0 %v2828
          %2911 = vmatpush.bf16.msra.mxu0 %v2826
          %2912 = vmatpush.bf16.msra.mxu0 %v2824
          %2913 = vmatpush.bf16.msra.mxu0 %v2822
          %2914 = vmatpush.bf16.msra.mxu0 %v2820
          %2915 = vmatpush.bf16.msra.mxu0 %v2818
          %2916 = vmatpush.bf16.msra.mxu0 %v2816
          %2917 = vmatmul.bf16.gmra.mxu0 %v2651
          %v2918 = vpop.f32.mrf.mxu0
          %v2919 = vadd.f32 %v2906, %v2918
          %v2920 = vpop.f32.mrf.mxu0
          %2921 = vdwg.mxu0
          %2922 = vmatpush.bf16.msra.mxu0 %v2846
          %2923 = vmatpush.bf16.msra.mxu0 %v2844
          %2924 = vmatpush.bf16.msra.mxu0 %v2842
          %2925 = vmatpush.bf16.msra.mxu0 %v2840
          %2926 = vmatpush.bf16.msra.mxu0 %v2838
          %2927 = vmatpush.bf16.msra.mxu0 %v2836
          %2928 = vmatpush.bf16.msra.mxu0 %v2834
          %2929 = vmatpush.bf16.msra.mxu0 %v2832
          %2930 = vmatmul.bf16.gmra.mxu0 %v2652
          %v2931 = vpop.f32.mrf.mxu0
          %v2932 = vadd.f32 %v2919, %v2931
          %v2933 = vpop.f32.mrf.mxu0
          %2934 = vdwg.mxu0
          %2935 = vmatpush.bf16.msra.mxu0 %v2815
          %2936 = vmatpush.bf16.msra.mxu0 %v2813
          %2937 = vmatpush.bf16.msra.mxu0 %v2811
          %2938 = vmatpush.bf16.msra.mxu0 %v2809
          %2939 = vmatpush.bf16.msra.mxu0 %v2807
          %2940 = vmatpush.bf16.msra.mxu0 %v2805
          %2941 = vmatpush.bf16.msra.mxu0 %v2803
          %2942 = vmatpush.bf16.msra.mxu0 %v2801
          %2943 = vmatmul.bf16.gmra.mxu0 %v2650
          %v2944 = vpop.f32.mrf.mxu0
          %v2945 = vadd.f32 %v2645, %v2944
          %v2946 = vpop.f32.mrf.mxu0
          %2947 = vdwg.mxu0
          %2948 = vmatpush.bf16.msra.mxu0 %v2831
          %2949 = vmatpush.bf16.msra.mxu0 %v2829
          %2950 = vmatpush.bf16.msra.mxu0 %v2827
          %2951 = vmatpush.bf16.msra.mxu0 %v2825
          %2952 = vmatpush.bf16.msra.mxu0 %v2823
          %2953 = vmatpush.bf16.msra.mxu0 %v2821
          %2954 = vmatpush.bf16.msra.mxu0 %v2819
          %2955 = vmatpush.bf16.msra.mxu0 %v2817
          %2956 = vmatmul.bf16.gmra.mxu0 %v2651
          %v2957 = vpop.f32.mrf.mxu0
          %v2958 = vadd.f32 %v2945, %v2957
          %v2959 = vpop.f32.mrf.mxu0
          %2960 = vdwg.mxu0
          %2961 = vmatpush.bf16.msra.mxu0 %v2847
          %2962 = vmatpush.bf16.msra.mxu0 %v2845
          %2963 = vmatpush.bf16.msra.mxu0 %v2843
          %2964 = vmatpush.bf16.msra.mxu0 %v2841
          %2965 = vmatpush.bf16.msra.mxu0 %v2839
          %2966 = vmatpush.bf16.msra.mxu0 %v2837
          %2967 = vmatpush.bf16.msra.mxu0 %v2835
          %2968 = vmatpush.bf16.msra.mxu0 %v2833
          %2969 = vmatmul.bf16.gmra.mxu0 %v2652
          %v2970 = vpop.f32.mrf.mxu0
          %v2971 = vadd.f32 %v2958, %v2970
          %v2972 = vpop.f32.mrf.mxu0
          %2973 = vdwg.mxu0
          %v2974 = vmax.f32 %v2932, 0.0
          %v2975 = vmax.f32 %v2971, 0.0
          %v2976 = vpack.c.bf16 %v2974, %v2974
          %v2977 = vpack.c.bf16 %v2975, %v2975
          %v2978 = vld [vmem:[#allocation12] sm:$0xf]
          %v2979 = vld [vmem:[#allocation12 + $0x4] sm:$0xf]
          %v2980 = vld [vmem:[#allocation12 + $0x8] sm:$0xf]
          %v2981 = vld [vmem:[#allocation12 + $0xc] sm:$0xf]
          %v2982 = vld [vmem:[#allocation12 + $0x10] sm:$0xf]
          %v2983 = vld [vmem:[#allocation12 + $0x14] sm:$0xf]
          %v2984 = vld [vmem:[#allocation12 + $0x18] sm:$0xf]
          %v2985 = vld [vmem:[#allocation12 + $0x1c] sm:$0xf]
          %v2986 = vld [vmem:[#allocation12 + $0x20] sm:$0xf]
          %v2987 = vld [vmem:[#allocation12 + $0x24] sm:$0xf]
          %v2988 = vld [vmem:[#allocation12 + $0x28] sm:$0xf]
          %v2989 = vld [vmem:[#allocation12 + $0x2c] sm:$0xf]
          %v2990 = vld [vmem:[#allocation12 + $0x30] sm:$0xf]
          %v2991 = vld [vmem:[#allocation12 + $0x34] sm:$0xf]
          %v2992 = vld [vmem:[#allocation12 + $0x38] sm:$0xf]
          %v2993 = vld [vmem:[#allocation12 + $0x3c] sm:$0xf]
          %v2994 = vld [vmem:[#allocation12 + $0x40] sm:$0xf]
          %v2995 = vld [vmem:[#allocation12 + $0x44] sm:$0xf]
          %v2996 = vld [vmem:[#allocation12 + $0x48] sm:$0xf]
          %v2997 = vld [vmem:[#allocation12 + $0x4c] sm:$0xf]
          %v2998 = vld [vmem:[#allocation12 + $0x50] sm:$0xf]
          %v2999 = vld [vmem:[#allocation12 + $0x54] sm:$0xf]
          %v3000 = vld [vmem:[#allocation12 + $0x58] sm:$0xf]
          %v3001 = vld [vmem:[#allocation12 + $0x5c] sm:$0xf]
          %v3002 = vld [vmem:[#allocation12 + $0x60] sm:$0xf]
          %v3003 = vld [vmem:[#allocation12 + $0x64] sm:$0xf]
          %v3004 = vld [vmem:[#allocation12 + $0x68] sm:$0xf]
          %v3005 = vld [vmem:[#allocation12 + $0x6c] sm:$0xf]
          %v3006 = vld [vmem:[#allocation12 + $0x70] sm:$0xf]
          %v3007 = vld [vmem:[#allocation12 + $0x74] sm:$0xf]
          %v3008 = vld [vmem:[#allocation12 + $0x78] sm:$0xf]
          %v3009 = vld [vmem:[#allocation12 + $0x7c] sm:$0xf]
          %v3010 = vld [vmem:[#allocation14] sm:$0x1]
          %v3012 = vperm.slane %v3010, 0
          %v3046 = vunpack.c.l.b16 %v2978
          %v3047 = vunpack.c.l.b16 %v2979
          %v3048 = vunpack.c.l.b16 %v2980
          %v3049 = vunpack.c.l.b16 %v2981
          %v3050 = vunpack.c.l.b16 %v2982
          %v3051 = vunpack.c.l.b16 %v2983
          %v3052 = vunpack.c.l.b16 %v2984
          %v3053 = vunpack.c.l.b16 %v2985
          %v3054 = vunpack.c.l.b16 %v2986
          %v3055 = vunpack.c.l.b16 %v2987
          %v3056 = vunpack.c.l.b16 %v2988
          %v3057 = vunpack.c.l.b16 %v2989
          %v3058 = vunpack.c.l.b16 %v2990
          %v3059 = vunpack.c.l.b16 %v2991
          %v3060 = vunpack.c.l.b16 %v2992
          %v3061 = vunpack.c.l.b16 %v2993
          %v3062 = vunpack.c.l.b16 %v2994
          %v3063 = vunpack.c.l.b16 %v2995
          %v3064 = vunpack.c.l.b16 %v2996
          %v3065 = vunpack.c.l.b16 %v2997
          %v3066 = vunpack.c.l.b16 %v2998
          %v3067 = vunpack.c.l.b16 %v2999
          %v3068 = vunpack.c.l.b16 %v3000
          %v3069 = vunpack.c.l.b16 %v3001
          %v3070 = vunpack.c.l.b16 %v3002
          %v3071 = vunpack.c.l.b16 %v3003
          %v3072 = vunpack.c.l.b16 %v3004
          %v3073 = vunpack.c.l.b16 %v3005
          %v3074 = vunpack.c.l.b16 %v3006
          %v3075 = vunpack.c.l.b16 %v3007
          %v3076 = vunpack.c.l.b16 %v3008
          %v3077 = vunpack.c.l.b16 %v3009
          %v3078 = vpack.c.b16 %v3047, %v3046
          %v3079 = vpack.c.b16 %v3049, %v3048
          %v3080 = vpack.c.b16 %v3051, %v3050
          %v3081 = vpack.c.b16 %v3053, %v3052
          %v3082 = vpack.c.b16 %v3055, %v3054
          %v3083 = vpack.c.b16 %v3057, %v3056
          %v3084 = vpack.c.b16 %v3059, %v3058
          %v3085 = vpack.c.b16 %v3061, %v3060
          %v3086 = vpack.c.b16 %v3063, %v3062
          %v3087 = vpack.c.b16 %v3065, %v3064
          %v3088 = vpack.c.b16 %v3067, %v3066
          %v3089 = vpack.c.b16 %v3069, %v3068
          %v3090 = vpack.c.b16 %v3071, %v3070
          %v3091 = vpack.c.b16 %v3073, %v3072
          %v3092 = vpack.c.b16 %v3075, %v3074
          %v3093 = vpack.c.b16 %v3077, %v3076
          %3110 = vmatpush.bf16.msra.mxu0 %v3085
          %3111 = vmatpush.bf16.msra.mxu0 %v3084
          %3112 = vmatpush.bf16.msra.mxu0 %v3083
          %3113 = vmatpush.bf16.msra.mxu0 %v3082
          %3114 = vmatpush.bf16.msra.mxu0 %v3081
          %3115 = vmatpush.bf16.msra.mxu0 %v3080
          %3116 = vmatpush.bf16.msra.mxu0 %v3079
          %3117 = vmatpush.bf16.msra.mxu0 %v3078
          %3118 = vmatmul.bf16.gmra.mxu0 %v2976
          %v3119 = vpop.f32.mrf.mxu0
          %v3120 = vadd.f32 %v3012, %v3119
          %v3121 = vpop.f32.mrf.mxu0
          %3122 = vdwg.mxu0
          %3123 = vmatpush.bf16.msra.mxu0 %v3093
          %3124 = vmatpush.bf16.msra.mxu0 %v3092
          %3125 = vmatpush.bf16.msra.mxu0 %v3091
          %3126 = vmatpush.bf16.msra.mxu0 %v3090
          %3127 = vmatpush.bf16.msra.mxu0 %v3089
          %3128 = vmatpush.bf16.msra.mxu0 %v3088
          %3129 = vmatpush.bf16.msra.mxu0 %v3087
          %3130 = vmatpush.bf16.msra.mxu0 %v3086
          %3131 = vmatmul.bf16.gmra.mxu0 %v2977
          %v3132 = vpop.f32.mrf.mxu0
          %v3133 = vadd.f32 %v3120, %v3132
          %v3134 = vpop.f32.mrf.mxu0
          %3135 = vdwg.mxu0
          %v3136 = vmax.f32 %v3133, 0.0
          %v3137 = vld [vmem:[#allocation8] sm:$0x3]
          %v3138 = vld [vmem:[#allocation21] sm:$0xf]
          %v3139 = vld [vmem:[#allocation21 + $0x4] sm:$0xf]
          %v3140 = vld [vmem:[#allocation23] sm:$0x1]
          %v3142 = vperm.slane %v3140, 0
          %v3146 = vunpack.c.l.b16 %v3138
          %v3147 = vunpack.c.l.b16 %v3139
          %v3148 = vpack.c.b16 %v3147, %v3146
          %vm3150 = vcmask 130048
          %v3152 = vsel %vm3150, %v3137, 0
          %3154 = vmatpush.bf16.msra.mxu0 0
          %3155 = vmatpush.bf16.msra.mxu0 0
          %3156 = vmatpush.bf16.msra.mxu0 0
          %3157 = vmatpush.bf16.msra.mxu0 0
          %3158 = vmatpush.bf16.msra.mxu0 0
          %3159 = vmatpush.bf16.msra.mxu0 0
          %3160 = vmatpush.bf16.msra.mxu0 0
          %3161 = vmatpush.bf16.msra.mxu0 %v3148
          %3162 = vmatmul.bf16.gmra.mxu0 %v3152
          %v3163 = vpop.f32.mrf.mxu0
          %v3164 = vadd.f32 %v3142, %v3163
          %v3165 = vpop.f32.mrf.mxu0
          %3166 = vdwg.mxu0
          %v3167 = vmax.f32 %v3164, 0.0
          %v3168 = vpack.c.bf16 %v3167, %v3167
          %v3169 = vld [vmem:[%s13] sm:$0xf]
          %v3170 = vld [vmem:[%s13 + $0x4] sm:$0xf]
          %v3171 = vld [vmem:[%s13 + $0x8] sm:$0xf]
          %v3172 = vld [vmem:[%s13 + $0xc] sm:$0xf]
          %v3173 = vld [vmem:[%s13 + $0x10] sm:$0xf]
          %v3174 = vld [vmem:[%s13 + $0x14] sm:$0xf]
          %v3175 = vld [vmem:[%s13 + $0x18] sm:$0xf]
          %v3176 = vld [vmem:[%s13 + $0x1c] sm:$0xf]
          %v3177 = vld [vmem:[#allocation24] sm:$0x1]
          %v3179 = vperm.slane %v3177, 0
          %v3189 = vunpack.c.l.b16 %v3169
          %v3190 = vunpack.c.l.b16 %v3170
          %v3191 = vunpack.c.l.b16 %v3171
          %v3192 = vunpack.c.l.b16 %v3172
          %v3193 = vunpack.c.l.b16 %v3173
          %v3194 = vunpack.c.l.b16 %v3174
          %v3195 = vunpack.c.l.b16 %v3175
          %v3196 = vunpack.c.l.b16 %v3176
          %v3197 = vpack.c.b16 %v3190, %v3189
          %v3198 = vpack.c.b16 %v3192, %v3191
          %v3199 = vpack.c.b16 %v3194, %v3193
          %v3200 = vpack.c.b16 %v3196, %v3195
          %vm3205 = vcmask 523264
          %v3207 = vsel %vm3205, %v3168, 0
          %3209 = vmatpush.bf16.msra.mxu0 0
          %3210 = vmatpush.bf16.msra.mxu0 0
          %3211 = vmatpush.bf16.msra.mxu0 0
          %3212 = vmatpush.bf16.msra.mxu0 0
          %3213 = vmatpush.bf16.msra.mxu0 %v3200
          %3214 = vmatpush.bf16.msra.mxu0 %v3199
          %3215 = vmatpush.bf16.msra.mxu0 %v3198
          %3216 = vmatpush.bf16.msra.mxu0 %v3197
          %3217 = vmatmul.bf16.gmra.mxu0 %v3207
          %v3218 = vpop.f32.mrf.mxu0
          %v3219 = vadd.f32 %v3179, %v3218
          %v3220 = vpop.f32.mrf.mxu0
          %3221 = vdwg.mxu0
          %v3222 = vmax.f32 %v3219, 0.0
          %v3223 = vpack.c.bf16 %v3136, %v3136
          %v3224 = vld [vmem:[%s15] sm:$0xf]
          %v3225 = vld [vmem:[%s15 + $0x4] sm:$0xf]
          %v3226 = vld [vmem:[%s15 + $0x8] sm:$0xf]
          %v3227 = vld [vmem:[%s15 + $0xc] sm:$0xf]
          %v3228 = vld [vmem:[%s15 + $0x10] sm:$0xf]
          %v3229 = vld [vmem:[%s15 + $0x14] sm:$0xf]
          %v3230 = vld [vmem:[%s15 + $0x18] sm:$0xf]
          %v3231 = vld [vmem:[%s15 + $0x1c] sm:$0xf]
          %v3232 = vld [vmem:[%s15 + $0x20] sm:$0xf]
          %v3233 = vld [vmem:[%s15 + $0x24] sm:$0xf]
          %v3234 = vld [vmem:[%s15 + $0x28] sm:$0xf]
          %v3235 = vld [vmem:[%s15 + $0x2c] sm:$0xf]
          %v3236 = vld [vmem:[%s15 + $0x30] sm:$0xf]
          %v3237 = vld [vmem:[%s15 + $0x34] sm:$0xf]
          %v3238 = vld [vmem:[%s15 + $0x38] sm:$0xf]
          %v3239 = vld [vmem:[%s15 + $0x3c] sm:$0xf]
          %v3240 = vpack.c.bf16 %v2592, %v2592
          %v3241 = vld [vmem:[%s16] sm:$0xf]
          %v3242 = vld [vmem:[%s16 + $0x4] sm:$0xf]
          %v3243 = vld [vmem:[%s16 + $0x8] sm:$0xf]
          %v3244 = vld [vmem:[%s16 + $0xc] sm:$0xf]
          %v3245 = vld [vmem:[%s16 + $0x10] sm:$0xf]
          %v3246 = vld [vmem:[%s16 + $0x14] sm:$0xf]
          %v3247 = vld [vmem:[%s16 + $0x18] sm:$0xf]
          %v3248 = vld [vmem:[%s16 + $0x1c] sm:$0xf]
          %v3249 = vld [vmem:[%s16 + $0x20] sm:$0xf]
          %v3250 = vld [vmem:[%s16 + $0x24] sm:$0xf]
          %v3251 = vld [vmem:[%s16 + $0x28] sm:$0xf]
          %v3252 = vld [vmem:[%s16 + $0x2c] sm:$0xf]
          %v3253 = vld [vmem:[%s16 + $0x30] sm:$0xf]
          %v3254 = vld [vmem:[%s16 + $0x34] sm:$0xf]
          %v3255 = vld [vmem:[%s16 + $0x38] sm:$0xf]
          %v3256 = vld [vmem:[%s16 + $0x3c] sm:$0xf]
          %v3273 = vunpack.c.l.b16 %v3241
          %v3274 = vunpack.c.l.b16 %v3242
          %v3275 = vunpack.c.l.b16 %v3243
          %v3276 = vunpack.c.l.b16 %v3244
          %v3277 = vunpack.c.l.b16 %v3245
          %v3278 = vunpack.c.l.b16 %v3246
          %v3279 = vunpack.c.l.b16 %v3247
          %v3280 = vunpack.c.l.b16 %v3248
          %v3281 = vunpack.c.l.b16 %v3249
          %v3282 = vunpack.c.l.b16 %v3250
          %v3283 = vunpack.c.l.b16 %v3251
          %v3284 = vunpack.c.l.b16 %v3252
          %v3285 = vunpack.c.l.b16 %v3253
          %v3286 = vunpack.c.l.b16 %v3254
          %v3287 = vunpack.c.l.b16 %v3255
          %v3288 = vunpack.c.l.b16 %v3256
          %v3289 = vpack.c.b16 %v3274, %v3273
          %v3290 = vpack.c.b16 %v3276, %v3275
          %v3291 = vpack.c.b16 %v3278, %v3277
          %v3292 = vpack.c.b16 %v3280, %v3279
          %v3293 = vpack.c.b16 %v3282, %v3281
          %v3294 = vpack.c.b16 %v3284, %v3283
          %v3295 = vpack.c.b16 %v3286, %v3285
          %v3296 = vpack.c.b16 %v3288, %v3287
          %3305 = vmatpush.bf16.msra.mxu0 %v3296
          %3306 = vmatpush.bf16.msra.mxu0 %v3295
          %3307 = vmatpush.bf16.msra.mxu0 %v3294
          %3308 = vmatpush.bf16.msra.mxu0 %v3293
          %3309 = vmatpush.bf16.msra.mxu0 %v3292
          %3310 = vmatpush.bf16.msra.mxu0 %v3291
          %3311 = vmatpush.bf16.msra.mxu0 %v3290
          %3312 = vmatpush.bf16.msra.mxu0 %v3289
          %3313 = vmatmul.bf16.gmra.mxu0 %v3240
          %v3314 = vpop.f32.mrf.mxu0
          %v3315 = vadd.f32 0.0, %v3314
          %v3316 = vpop.f32.mrf.mxu0
          %3317 = vdwg.mxu0
          %v3334 = vunpack.c.l.b16 %v3224
          %v3335 = vunpack.c.l.b16 %v3225
          %v3336 = vunpack.c.l.b16 %v3226
          %v3337 = vunpack.c.l.b16 %v3227
          %v3338 = vunpack.c.l.b16 %v3228
          %v3339 = vunpack.c.l.b16 %v3229
          %v3340 = vunpack.c.l.b16 %v3230
          %v3341 = vunpack.c.l.b16 %v3231
          %v3342 = vunpack.c.l.b16 %v3232
          %v3343 = vunpack.c.l.b16 %v3233
          %v3344 = vunpack.c.l.b16 %v3234
          %v3345 = vunpack.c.l.b16 %v3235
          %v3346 = vunpack.c.l.b16 %v3236
          %v3347 = vunpack.c.l.b16 %v3237
          %v3348 = vunpack.c.l.b16 %v3238
          %v3349 = vunpack.c.l.b16 %v3239
          %v3350 = vpack.c.b16 %v3335, %v3334
          %v3351 = vpack.c.b16 %v3337, %v3336
          %v3352 = vpack.c.b16 %v3339, %v3338
          %v3353 = vpack.c.b16 %v3341, %v3340
          %v3354 = vpack.c.b16 %v3343, %v3342
          %v3355 = vpack.c.b16 %v3345, %v3344
          %v3356 = vpack.c.b16 %v3347, %v3346
          %v3357 = vpack.c.b16 %v3349, %v3348
          %3366 = vmatpush.bf16.msra.mxu0 %v3357
          %3367 = vmatpush.bf16.msra.mxu0 %v3356
          %3368 = vmatpush.bf16.msra.mxu0 %v3355
          %3369 = vmatpush.bf16.msra.mxu0 %v3354
          %3370 = vmatpush.bf16.msra.mxu0 %v3353
          %3371 = vmatpush.bf16.msra.mxu0 %v3352
          %3372 = vmatpush.bf16.msra.mxu0 %v3351
          %3373 = vmatpush.bf16.msra.mxu0 %v3350
          %3374 = vmatmul.bf16.gmra.mxu0 %v3223
          %v3375 = vpop.f32.mrf.mxu0
          %v3376 = vadd.f32 %v3315, %v3375
          %v3377 = vpop.f32.mrf.mxu0
          %3378 = vdwg.mxu0
          %v3379 = vpack.c.bf16 %v3222, %v3222
          %v3380 = vld [vmem:[#allocation26] sm:$0xf]
          %v3381 = vld [vmem:[#allocation26 + $0x4] sm:$0xf]
          %v3382 = vld [vmem:[#allocation26 + $0x8] sm:$0xf]
          %v3383 = vld [vmem:[#allocation26 + $0xc] sm:$0xf]
          %v3388 = vunpack.c.l.b16 %v3380
          %v3389 = vunpack.c.l.b16 %v3381
          %v3390 = vunpack.c.l.b16 %v3382
          %v3391 = vunpack.c.l.b16 %v3383
          %v3392 = vpack.c.b16 %v3389, %v3388
          %v3393 = vpack.c.b16 %v3391, %v3390
          %vm3396 = vcmask 261120
          %v3398 = vsel %vm3396, %v3379, 0
          %3400 = vmatpush.bf16.msra.mxu0 0
          %3401 = vmatpush.bf16.msra.mxu0 0
          %3402 = vmatpush.bf16.msra.mxu0 0
          %3403 = vmatpush.bf16.msra.mxu0 0
          %3404 = vmatpush.bf16.msra.mxu0 0
          %3405 = vmatpush.bf16.msra.mxu0 0
          %3406 = vmatpush.bf16.msra.mxu0 %v3393
          %3407 = vmatpush.bf16.msra.mxu0 %v3392
          %3408 = vmatmul.bf16.gmra.mxu0 %v3398
          %v3409 = vpop.f32.mrf.mxu0
          %v3410 = vadd.f32 0.0, %v3409
          %v3411 = vpop.f32.mrf.mxu0
          %3412 = vdwg.mxu0
          %v3413 = vadd.f32 %v3376, %v3410
          %v3414 = vld [vmem:[#allocation27] sm:$0x1]
          %v3416 = vperm.slane %v3414, 0
          %v3418 = vadd.f32 %v3413, %v3416
          %v3419 = vmax.f32 %v3418, 0.0
          %v3420 = vld [vmem:[#allocation29] sm:$0x1]
          %v3422 = vperm.slane %v3420, 0
          %v3424 = vmul.f32 %v3419, %v3422
          %vm3425 = vcmask 519168
          %v3426 = vsel %vm3425, %v3424, 0.0
          %3427 = vadd.xlane.f32.xlu0 %v3426
          %v3428 = vpop.xlane.xlu0 %3427
          %v3429 = vld [vmem:[#allocation3] sm:$0x1]
          %v3431 = vperm.slane %v3429, 0
          %v3433 = vadd.f32 %v3428, %v3431
          %vm3434 = vcmask 3072
          %3435 = vst.msk [vmem:[%s979] sm:$0xf] %vm3434, %v3433
        $region180: #{tpu_custom_call.1} parent=103 // pred_fallthru
          _
        %p3436 = scmp.lt.s32.totalorder %s51, 0
        %s3437 = scalar_select %p3436, %s51, 0
        %s3438 = smul.addr %s3437, 4
        %s3439 = scalar_lea.vmem %s21, %s3438
        // Predicated region
        $region181: #{tpu_custom_call.1} parent=103 // pred_check
          %p3440 = pneg %p540
        $region182: #{tpu_custom_call.1} parent=103 // pred_check_branch
          %3442 = sbr.rel (%p3440) target = $region184
        $region183: #{tpu_custom_call.1} parent=103 // pred_region
          _
        $region184: #{tpu_custom_call.1} parent=103 // pred_fallthru
          _
        // Predicated region
        $region185: #{tpu_custom_call.1} parent=103 // pred_check
          %p3443 = pneg %p540
        $region186: #{tpu_custom_call.1} parent=103 // pred_check_branch
          %3445 = sbr.rel (%p3443) target = $region188
        $region187: #{tpu_custom_call.1} parent=103 // pred_region
          %p3446 = scmp.lt.s32.totalorder %s51, 0
          %s3447 = scalar_select %p3446, %s51, 0
          %s3448 = smul.addr %s3447, 4
          %s3449 = scalar_lea.vmem %s21, %s3448
        $region188: #{tpu_custom_call.1} parent=103 // pred_fallthru
          _
      $region104: #{tpu_custom_call.1} parent=5 // pred_fallthru
        _
      %p3450 = scmp.le.s32.totalorder 2, %s42
      // Predicated region
      $region189: #{tpu_custom_call.1} parent=5 // pred_check
        %p3451 = pneg %p3450
      $region190: #{tpu_custom_call.1} parent=5 // pred_check_branch
        %3453 = sbr.rel (%p3451) target = $region192
      $region191: #{tpu_custom_call.1} parent=5 // pred_region
        %s3454 = ssub.s32 %s42, 2
      $region192: #{tpu_custom_call.1} parent=5 // pred_fallthru
        _
    $region6: #{tpu_custom_call.1} parent=1 // loop_footer
      %s46 = sadd.s32 1, %s42
    $region7: #{tpu_custom_call.1} parent=1 // loop_footer_branch
      %41 = sbr.rel target = $region3
    $region8: #{tpu_custom_call.1} parent=1 // loop_exit
      _
    %3455 = vsyncpa [#allocation5], 1
    %s3456 = scalar_lea.sflag [#allocation5], 1
    %3457 = vsyncpa %s3456, 1
    %3458 = vsyncpa [#allocation7], 1
    %s3459 = scalar_lea.sflag [#allocation7], 1
    %3460 = vsyncpa %s3459, 1
    %3461 = vsyncpa [#allocation10], 1
    %3462 = vsyncpa [#allocation13], 1
    %3463 = vsyncpa [#allocation16], 1
    %s3464 = scalar_lea.sflag [#allocation16], 1
    %3465 = vsyncpa %s3464, 1
    %3466 = vsyncpa [#allocation19], 1
    %3467 = vsyncpa [#allocation22], 1
    %3468 = vsyncpa [#allocation25], 1
    %3469 = vsyncpa [#allocation28], 1

</llo_original>
